<compile_context>
chip_gen: v5e
topology: v5e:2x2
jax: 0.10.0
libtpu: 0.0.40
codegen_flags: <defaults>
</compile_context>

<pallas_src>
import functools

import jax
import jax.numpy as jnp
import numpy as np
from jax.experimental import pallas as pl
from jax.experimental.pallas import tpu as pltpu


def rnn_classify_kernel(tok_ref, emb_proj_ref, whh_ref, b_ref, wcls_ref,
                        bcls_ref, out_ref, xw_ref, *, seq_len):
    """One batch-chunk of: one-hot gather+project -> tanh RNN -> classifier.

    tok_ref:      (T*CB, 1) int32   time-major token ids (row = t*CB + b)
    emb_proj_ref: (V, D)    f32     embedding @ W_ih^T  (precomputed once)
    whh_ref:      (D, D)    f32     W_hh^T
    b_ref:        (1, D)    f32     b_ih + b_hh
    wcls_ref:     (D, Cp)   f32     classifier weight^T, zero-padded to Cp=128
    bcls_ref:     (1, Cp)   f32     classifier bias, zero-padded
    out_ref:      (CB, Cp)  f32     padded logits for this chunk
    xw_ref:       (T*CB, D) f32     VMEM scratch: per-timestep input projection
    """
    TB = tok_ref.shape[0]
    cb = out_ref.shape[0]                 # chunk batch size
    V, D = emb_proj_ref.shape
    T = seq_len
    assert TB == T * cb

    # ---- Fused gather + input projection (off the serial critical path) -----
    # 2D, time-major one-hot: (T*CB, V) with the vocab on the lane axis.
    tok = tok_ref[...]                                               # (TB, 1)
    onehot = (tok == jax.lax.broadcasted_iota(jnp.int32, (TB, V), 1)
              ).astype(jnp.float32)                                  # (TB, V)
    xw_ref[...] = (jnp.dot(onehot, emb_proj_ref[...],
                           preferred_element_type=jnp.float32)
                   + b_ref[...])                                     # (TB, D)

    # ---- Serial recurrence: only h @ Whh^T + tanh per step -------------------
    whh = whh_ref[...]                                               # hoisted
    # h0 == 0  =>  h1 = tanh(x_0 + b): drop the first dependent matmul.
    h = jnp.tanh(xw_ref[0:cb, :])
    for t in range(1, T):                                            # static unroll
        x_t = xw_ref[t * cb:(t + 1) * cb, :]                         # static window
        h = jnp.tanh(x_t + jnp.dot(h, whh,
                                   preferred_element_type=jnp.float32))

    # ---- Classifier on the last hidden state (lane-dense padded output) ------
    out_ref[...] = (jnp.dot(h, wcls_ref[...],
                            preferred_element_type=jnp.float32) + bcls_ref[...])


def prepare_params(params):
    """One-time parameter preparation (hoisted out of the per-call wrapper)."""
    emb = params["embedding"]                       # (V, D)
    V, D = emb.shape
    C = params["w_cls"].shape[0]
    c_pad = ((C + 127) // 128) * 128                # lane-dense classifier width

    emb_proj = jnp.dot(emb, params["w_ih"].T)       # (V, D): emb @ W_ih^T
    whh_t = params["w_hh"].T                        # (D, D)
    b = (params["b_ih"] + params["b_hh"]).reshape(1, D)

    wcls_pad = jnp.zeros((D, c_pad), jnp.float32).at[:, :C].set(params["w_cls"].T)
    bcls_pad = jnp.zeros((1, c_pad), jnp.float32).at[0, :C].set(params["b_cls"])

    return {
        "emb_proj": emb_proj,
        "whh_t": whh_t,
        "b": b,
        "wcls_pad": wcls_pad,
        "bcls_pad": bcls_pad,
        "num_classes": C,                           # python int (wrapper-side slice)
    }


def torch_model_forward(tokens, prepped, *, chunk_b=256):
    """Equivalent to TorchModel.forward(x) with y=None (logits only).

    tokens: int32 (B, T) token ids
    returns: float32 (B, sentence_length + 1) logits
    """
    B, T = tokens.shape
    V, D = prepped["emb_proj"].shape
    Cp = prepped["wcls_pad"].shape[1]
    C = prepped["num_classes"]

    num_chunks = (B + chunk_b - 1) // chunk_b
    Bp = num_chunks * chunk_b
    TB = T * chunk_b

    # Time-major, chunk-flattened tokens: chunk i occupies rows
    # [i*TB, (i+1)*TB), row within a chunk = t*chunk_b + b_local.
    tok_p = jnp.pad(tokens.astype(jnp.int32), ((0, Bp - B), (0, 0)))
    tok_tm = (tok_p.reshape(num_chunks, chunk_b, T)
              .transpose(0, 2, 1)
              .reshape(num_chunks * TB, 1))

    flops = (2 * Bp * T * V * D        # one-hot gather + input projection
             + 2 * T * Bp * D * D      # recurrence
             + 2 * Bp * D * Cp)        # classifier
    transcendentals = T * Bp * D
    bytes_accessed = 4 * (Bp * T + V * D + D * D + D + D * Cp + Cp + Bp * Cp)

    out = pl.pallas_call(
        functools.partial(rnn_classify_kernel, seq_len=T),
        out_shape=jax.ShapeDtypeStruct((Bp, Cp), jnp.float32),
        grid_spec=pltpu.PrefetchScalarGridSpec(
            num_scalar_prefetch=0,
            grid=(num_chunks,),
            in_specs=[
                pl.BlockSpec((TB, 1), lambda i: (i, 0)),      # tokens (per chunk)
                pl.BlockSpec((V, D), lambda i: (0, 0)),       # emb @ W_ih^T
                pl.BlockSpec((D, D), lambda i: (0, 0)),       # W_hh^T
                pl.BlockSpec((1, D), lambda i: (0, 0)),       # b_ih + b_hh
                pl.BlockSpec((D, Cp), lambda i: (0, 0)),      # classifier W^T (padded)
                pl.BlockSpec((1, Cp), lambda i: (0, 0)),      # classifier b (padded)
            ],
            out_specs=pl.BlockSpec((chunk_b, Cp), lambda i: (i, 0)),
            scratch_shapes=[pltpu.VMEM((TB, D), jnp.float32)],
        ),
        compiler_params=pltpu.CompilerParams(
            dimension_semantics=("parallel",)),
        cost_estimate=pl.CostEstimate(
            flops=flops,
            transcendentals=transcendentals,
            bytes_accessed=bytes_accessed),
    )(tok_tm, prepped["emb_proj"], prepped["whh_t"], prepped["b"],
      prepped["wcls_pad"], prepped["bcls_pad"])

    return out[:B, :C]


def reference_forward(tokens, params):
    """Pure-JAX reference identical to the PyTorch forward (y=None)."""
    hp = jax.lax.Precision.HIGHEST
    emb = params["embedding"][tokens]                          # (B, T, D)
    B, T, D = emb.shape
    h = jnp.zeros((B, D), jnp.float32)
    for t in range(T):
        h = jnp.tanh(jnp.dot(emb[:, t, :], params["w_ih"].T, precision=hp)
                     + params["b_ih"]
                     + jnp.dot(h, params["w_hh"].T, precision=hp)
                     + params["b_hh"])
    return jnp.dot(h, params["w_cls"].T, precision=hp) + params["b_cls"]


def init_params(key, vocab_size, sentence_length, vector_length):
    D = vector_length
    C = sentence_length + 1
    ks = jax.random.split(key, 7)
    scale = 1.0 / jnp.sqrt(D)
    return {
        "embedding": jax.random.normal(ks[0], (vocab_size, D), jnp.float32),
        "w_ih": jax.random.uniform(ks[1], (D, D), jnp.float32, -scale, scale),
        "w_hh": jax.random.uniform(ks[2], (D, D), jnp.float32, -scale, scale),
        "b_ih": jax.random.uniform(ks[3], (D,), jnp.float32, -scale, scale),
        "b_hh": jax.random.uniform(ks[4], (D,), jnp.float32, -scale, scale),
        "w_cls": jax.random.uniform(ks[5], (C, D), jnp.float32, -scale, scale),
        "b_cls": jax.random.uniform(ks[6], (C,), jnp.float32, -scale, scale),
    }


if __name__ == "__main__":
    # TorchModel(vocab, sentence_length, vector_length)
    VOCAB = 30
    SENTENCE_LENGTH = 8    # seq len T; classifier has SENTENCE_LENGTH + 1 outputs
    VECTOR_LENGTH = 32     # embedding / hidden dim D
    BATCH = 8

    key = jax.random.PRNGKey(0)
    k_params, k_tokens = jax.random.split(key)
    params = init_params(k_params, VOCAB, SENTENCE_LENGTH, VECTOR_LENGTH)
    prepped = prepare_params(params)   # one-time parameter prep (not per-call)

    tokens = jax.random.randint(
        k_tokens, (BATCH, SENTENCE_LENGTH), 0, VOCAB, dtype=jnp.int32)

    logits = jax.block_until_ready(torch_model_forward(tokens, prepped))
    assert logits.shape == (BATCH, SENTENCE_LENGTH + 1)
    assert logits.dtype == jnp.float32
    ref = reference_forward(tokens, params)
    np.testing.assert_allclose(np.asarray(logits), np.asarray(ref),
                               rtol=2e-2, atol=2e-2)

    # Multi-chunk path: batch larger than one 256-row chunk exercises the grid
    # (2 chunks) and the batch padding/slicing logic.
    big_tokens = jax.random.randint(
        jax.random.PRNGKey(1), (300, SENTENCE_LENGTH), 0, VOCAB, dtype=jnp.int32)
    big_logits = jax.block_until_ready(torch_model_forward(big_tokens, prepped))
    assert big_logits.shape == (300, SENTENCE_LENGTH + 1)
    big_ref = reference_forward(big_tokens, params)
    np.testing.assert_allclose(np.asarray(big_logits), np.asarray(big_ref),
                               rtol=2e-2, atol=2e-2)

    # TODO(synk): training branch (cross_entropy loss) is not implemented; only
    # the inference path (y is None -> logits) is reproduced.
    print("KERNEL_OK")
</pallas_src>

<mosaic_0001>
module attributes {stable_mosaic.version = 11 : i64} {
  func.func @rnn_classify_kernel(%arg0: i32, %arg1: memref<2048x1xi32, #tpu.memory_space<vmem>>, %arg2: memref<30x32xf32, #tpu.memory_space<vmem>>, %arg3: memref<32x32xf32, #tpu.memory_space<vmem>>, %arg4: memref<1x32xf32, #tpu.memory_space<vmem>>, %arg5: memref<32x128xf32, #tpu.memory_space<vmem>>, %arg6: memref<1x128xf32, #tpu.memory_space<vmem>>, %arg7: memref<256x128xf32, #tpu.memory_space<vmem>>, %arg8: memref<2048x32xf32, #tpu.memory_space<vmem>>) attributes {dimension_semantics = [#tpu.dimension_semantics<parallel>], iteration_bounds = array<i64: 1>, scalar_prefetch = 0 : i64, scratch_operands = 1 : i64, tpu.core_type = #tpu.core_type<tc>, window_params = [{transform_indices = @transform_0, window_bounds = array<i64: 2048, 1>}, {pipeline_mode = #tpu.pipeline_mode<synchronous>, transform_indices = @transform_1, window_bounds = array<i64: 30, 32>}, {pipeline_mode = #tpu.pipeline_mode<synchronous>, transform_indices = @transform_2, window_bounds = array<i64: 32, 32>}, {pipeline_mode = #tpu.pipeline_mode<synchronous>, transform_indices = @transform_3, window_bounds = array<i64: 1, 32>}, {pipeline_mode = #tpu.pipeline_mode<synchronous>, transform_indices = @transform_4, window_bounds = array<i64: 32, 128>}, {pipeline_mode = #tpu.pipeline_mode<synchronous>, transform_indices = @transform_5, window_bounds = array<i64: 1, 128>}, {transform_indices = @transform_6, window_bounds = array<i64: 256, 128>}]} {
    %c0 = arith.constant 0 : index
    %c0_0 = arith.constant 0 : index
    %0 = vector.load %arg1[%c0, %c0_0] : memref<2048x1xi32, #tpu.memory_space<vmem>>, vector<2048x1xi32>
    %1 = tpu.iota {dimensions = array<i32: 1>} : vector<2048x30xi32>
    %2 = vector.broadcast %0 : vector<2048x1xi32> to vector<2048x30xi32>
    %3 = arith.cmpi eq, %2, %1 : vector<2048x30xi32>
    %4 = arith.extui %3 : vector<2048x30xi1> to vector<2048x30xi32>
    %5 = arith.sitofp %4 : vector<2048x30xi32> to vector<2048x30xf32>
    %c0_1 = arith.constant 0 : index
    %c0_2 = arith.constant 0 : index
    %6 = vector.load %arg2[%c0_1, %c0_2] : memref<30x32xf32, #tpu.memory_space<vmem>>, vector<30x32xf32>
    %cst = arith.constant dense<0.000000e+00> : vector<2048x32xf32>
    %7 = tpu.matmul %5, %6, %cst {dimension_numbers = #tpu.dot_dimension_numbers<[1], [0], [0], [1], [0, 0, 1, 1], [], []>} : vector<2048x30xf32>, vector<30x32xf32>, vector<2048x32xf32> -> vector<2048x32xf32>
    %c0_3 = arith.constant 0 : index
    %c0_4 = arith.constant 0 : index
    %8 = vector.load %arg4[%c0_3, %c0_4] : memref<1x32xf32, #tpu.memory_space<vmem>>, vector<1x32xf32>
    %9 = vector.broadcast %8 : vector<1x32xf32> to vector<2048x32xf32>
    %10 = arith.addf %7, %9 : vector<2048x32xf32>
    %c0_5 = arith.constant 0 : index
    %c0_6 = arith.constant 0 : index
    %11 = vector.load %arg8[%c0_5, %c0_6] : memref<2048x32xf32, #tpu.memory_space<vmem>>, vector<2048x32xf32>
    tpu.vector_store %arg8[%c0_5, %c0_6], %10 {strides = array<i32>} : memref<2048x32xf32, #tpu.memory_space<vmem>>, vector<2048x32xf32>,
    %c0_7 = arith.constant 0 : index
    %c0_8 = arith.constant 0 : index
    %12 = vector.load %arg3[%c0_7, %c0_8] : memref<32x32xf32, #tpu.memory_space<vmem>>, vector<32x32xf32>
    %c0_9 = arith.constant 0 : index
    %c0_10 = arith.constant 0 : index
    %13 = vector.load %arg8[%c0_9, %c0_10] : memref<2048x32xf32, #tpu.memory_space<vmem>>, vector<256x32xf32>
    %14 = math.tanh %13 : vector<256x32xf32>
    %c256 = arith.constant 256 : index
    %c0_11 = arith.constant 0 : index
    %15 = vector.load %arg8[%c256, %c0_11] : memref<2048x32xf32, #tpu.memory_space<vmem>>, vector<256x32xf32>
    %cst_12 = arith.constant dense<0.000000e+00> : vector<256x32xf32>
    %16 = tpu.matmul %14, %12, %cst_12 {dimension_numbers = #tpu.dot_dimension_numbers<[1], [0], [0], [1], [0, 0, 1, 1], [], []>} : vector<256x32xf32>, vector<32x32xf32>, vector<256x32xf32> -> vector<256x32xf32>
    %17 = arith.addf %15, %16 : vector<256x32xf32>
    %18 = math.tanh %17 : vector<256x32xf32>
    %c512 = arith.constant 512 : index
    %c0_13 = arith.constant 0 : index
    %19 = vector.load %arg8[%c512, %c0_13] : memref<2048x32xf32, #tpu.memory_space<vmem>>, vector<256x32xf32>
    %cst_14 = arith.constant dense<0.000000e+00> : vector<256x32xf32>
    %20 = tpu.matmul %18, %12, %cst_14 {dimension_numbers = #tpu.dot_dimension_numbers<[1], [0], [0], [1], [0, 0, 1, 1], [], []>} : vector<256x32xf32>, vector<32x32xf32>, vector<256x32xf32> -> vector<256x32xf32>
    %21 = arith.addf %19, %20 : vector<256x32xf32>
    %22 = math.tanh %21 : vector<256x32xf32>
    %c768 = arith.constant 768 : index
    %c0_15 = arith.constant 0 : index
    %23 = vector.load %arg8[%c768, %c0_15] : memref<2048x32xf32, #tpu.memory_space<vmem>>, vector<256x32xf32>
    %cst_16 = arith.constant dense<0.000000e+00> : vector<256x32xf32>
    %24 = tpu.matmul %22, %12, %cst_16 {dimension_numbers = #tpu.dot_dimension_numbers<[1], [0], [0], [1], [0, 0, 1, 1], [], []>} : vector<256x32xf32>, vector<32x32xf32>, vector<256x32xf32> -> vector<256x32xf32>
    %25 = arith.addf %23, %24 : vector<256x32xf32>
    %26 = math.tanh %25 : vector<256x32xf32>
    %c1024 = arith.constant 1024 : index
    %c0_17 = arith.constant 0 : index
    %27 = vector.load %arg8[%c1024, %c0_17] : memref<2048x32xf32, #tpu.memory_space<vmem>>, vector<256x32xf32>
    %cst_18 = arith.constant dense<0.000000e+00> : vector<256x32xf32>
    %28 = tpu.matmul %26, %12, %cst_18 {dimension_numbers = #tpu.dot_dimension_numbers<[1], [0], [0], [1], [0, 0, 1, 1], [], []>} : vector<256x32xf32>, vector<32x32xf32>, vector<256x32xf32> -> vector<256x32xf32>
    %29 = arith.addf %27, %28 : vector<256x32xf32>
    %30 = math.tanh %29 : vector<256x32xf32>
    %c1280 = arith.constant 1280 : index
    %c0_19 = arith.constant 0 : index
    %31 = vector.load %arg8[%c1280, %c0_19] : memref<2048x32xf32, #tpu.memory_space<vmem>>, vector<256x32xf32>
    %cst_20 = arith.constant dense<0.000000e+00> : vector<256x32xf32>
    %32 = tpu.matmul %30, %12, %cst_20 {dimension_numbers = #tpu.dot_dimension_numbers<[1], [0], [0], [1], [0, 0, 1, 1], [], []>} : vector<256x32xf32>, vector<32x32xf32>, vector<256x32xf32> -> vector<256x32xf32>
    %33 = arith.addf %31, %32 : vector<256x32xf32>
    %34 = math.tanh %33 : vector<256x32xf32>
    %c1536 = arith.constant 1536 : index
    %c0_21 = arith.constant 0 : index
    %35 = vector.load %arg8[%c1536, %c0_21] : memref<2048x32xf32, #tpu.memory_space<vmem>>, vector<256x32xf32>
    %cst_22 = arith.constant dense<0.000000e+00> : vector<256x32xf32>
    %36 = tpu.matmul %34, %12, %cst_22 {dimension_numbers = #tpu.dot_dimension_numbers<[1], [0], [0], [1], [0, 0, 1, 1], [], []>} : vector<256x32xf32>, vector<32x32xf32>, vector<256x32xf32> -> vector<256x32xf32>
    %37 = arith.addf %35, %36 : vector<256x32xf32>
    %38 = math.tanh %37 : vector<256x32xf32>
    %c1792 = arith.constant 1792 : index
    %c0_23 = arith.constant 0 : index
    %39 = vector.load %arg8[%c1792, %c0_23] : memref<2048x32xf32, #tpu.memory_space<vmem>>, vector<256x32xf32>
    %cst_24 = arith.constant dense<0.000000e+00> : vector<256x32xf32>
    %40 = tpu.matmul %38, %12, %cst_24 {dimension_numbers = #tpu.dot_dimension_numbers<[1], [0], [0], [1], [0, 0, 1, 1], [], []>} : vector<256x32xf32>, vector<32x32xf32>, vector<256x32xf32> -> vector<256x32xf32>
    %41 = arith.addf %39, %40 : vector<256x32xf32>
    %42 = math.tanh %41 : vector<256x32xf32>
    %c0_25 = arith.constant 0 : index
    %c0_26 = arith.constant 0 : index
    %43 = vector.load %arg5[%c0_25, %c0_26] : memref<32x128xf32, #tpu.memory_space<vmem>>, vector<32x128xf32>
    %cst_27 = arith.constant dense<0.000000e+00> : vector<256x128xf32>
    %44 = tpu.matmul %42, %43, %cst_27 {dimension_numbers = #tpu.dot_dimension_numbers<[1], [0], [0], [1], [0, 0, 1, 1], [], []>} : vector<256x32xf32>, vector<32x128xf32>, vector<256x128xf32> -> vector<256x128xf32>
    %c0_28 = arith.constant 0 : index
    %c0_29 = arith.constant 0 : index
    %45 = vector.load %arg6[%c0_28, %c0_29] : memref<1x128xf32, #tpu.memory_space<vmem>>, vector<1x128xf32>
    %46 = vector.broadcast %45 : vector<1x128xf32> to vector<256x128xf32>
    %47 = arith.addf %44, %46 : vector<256x128xf32>
    %c0_30 = arith.constant 0 : index
    %c0_31 = arith.constant 0 : index
    %48 = vector.load %arg7[%c0_30, %c0_31] : memref<256x128xf32, #tpu.memory_space<vmem>>, vector<256x128xf32>
    tpu.vector_store %arg7[%c0_30, %c0_31], %47 {strides = array<i32>} : memref<256x128xf32, #tpu.memory_space<vmem>>, vector<256x128xf32>,
    return
  }
  func.func @transform_0(%arg0: i32) -> (i32, i32) {
    %c0_i32 = arith.constant 0 : i32
    %c0_i32_0 = arith.constant 0 : i32
    return %arg0, %c0_i32 : i32, i32
  }
  func.func @transform_1(%arg0: i32) -> (i32, i32) {
    %c0_i32 = arith.constant 0 : i32
    %c0_i32_0 = arith.constant 0 : i32
    %c0_i32_1 = arith.constant 0 : i32
    return %c0_i32, %c0_i32_0 : i32, i32
  }
  func.func @transform_2(%arg0: i32) -> (i32, i32) {
    %c0_i32 = arith.constant 0 : i32
    %c0_i32_0 = arith.constant 0 : i32
    %c0_i32_1 = arith.constant 0 : i32
    return %c0_i32, %c0_i32_0 : i32, i32
  }
  func.func @transform_3(%arg0: i32) -> (i32, i32) {
    %c0_i32 = arith.constant 0 : i32
    %c0_i32_0 = arith.constant 0 : i32
    %c0_i32_1 = arith.constant 0 : i32
    return %c0_i32, %c0_i32_0 : i32, i32
  }
  func.func @transform_4(%arg0: i32) -> (i32, i32) {
    %c0_i32 = arith.constant 0 : i32
    %c0_i32_0 = arith.constant 0 : i32
    %c0_i32_1 = arith.constant 0 : i32
    return %c0_i32, %c0_i32_0 : i32, i32
  }
  func.func @transform_5(%arg0: i32) -> (i32, i32) {
    %c0_i32 = arith.constant 0 : i32
    %c0_i32_0 = arith.constant 0 : i32
    %c0_i32_1 = arith.constant 0 : i32
    return %c0_i32, %c0_i32_0 : i32, i32
  }
  func.func @transform_6(%arg0: i32) -> (i32, i32) {
    %c0_i32 = arith.constant 0 : i32
    %c0_i32_0 = arith.constant 0 : i32
    return %arg0, %c0_i32 : i32, i32
  }
}

</mosaic_0001>

<llo_original>
// kernel: tpu_custom_call.1
$region0: #{tpu_custom_call.1}
  #allocation0 [shape = 'u32[]', space=smem, size = 0x4, offset = 0x4, fixed_abs, tag = 'smem constant byte address 0x4 - core index']
  #allocation1 [shape = 'u32[72,128]{1,0:T(1,128)}', space=vmem, size = 0x9000, scoped, tag = 'internal scratch']
  #allocation2 [shape = 'f32[2048,32]{1,0:T(8,128)}', space=vmem, size = 0x100000, scoped, tag = 'scratch operand']
  %s0 = inlined_call_operand.vmem [shape: s32[2048,1], index: 0, kind: input, shape index: {}]
  %s1 = inlined_call_operand.vmem [shape: f32[30,32], index: 1, kind: input, shape index: {}]
  %s2 = inlined_call_operand.vmem [shape: f32[32,32], index: 2, kind: input, shape index: {}]
  %s3 = inlined_call_operand.vmem [shape: f32[1,32], index: 3, kind: input, shape index: {}]
  %s4 = inlined_call_operand.vmem [shape: f32[32,128], index: 4, kind: input, shape index: {}]
  %s5 = inlined_call_operand.vmem [shape: f32[1,128], index: 5, kind: input, shape index: {}]
  %s6 = inlined_call_operand.hbm [shape: f32[256,128], index: 6, kind: output, shape index: {}]
  %s7 = sld [smem:[#allocation0]]
  $region34: #{tpu_custom_call.1} parent=0
    _
  %s9 = ssub.s32 1, %s7
  %s10 = scalar_select 0, %s9, %s7
  $region1: #{tpu_custom_call.1} parent=0
    #allocation3 [shape = 'u8[131072]{0}', space=vmem, size = 0x20000, scoped, tag = 'output window, operand 0, single buffered']
    #allocation4 [shape = 's32[1]{0}', space=sflag, size = 0x4, scoped, tag = 'scoped memory for tpu_custom_call.1']
    %11 = vsyncpa [#allocation4], 0
    // Predicated region
    $region2: #{tpu_custom_call.1} parent=1 // pred_check
      _
    $region3: #{tpu_custom_call.1} parent=1 // pred_check_branch
      %13 = sbr.rel (0) target = $region5
    $region4: #{tpu_custom_call.1} parent=1 // pred_region
      _
    $region5: #{tpu_custom_call.1} parent=1 // pred_fallthru
      _
    // Predicated region
    $region6: #{tpu_custom_call.1} parent=1 // pred_check
      _
    $region7: #{tpu_custom_call.1} parent=1 // pred_check_branch
      %15 = sbr.rel (0) target = $region9
    $region8: #{tpu_custom_call.1} parent=1 // pred_region
      _
    $region9: #{tpu_custom_call.1} parent=1 // pred_fallthru
      _
    // Predicated region
    $region10: #{tpu_custom_call.1} parent=1 // pred_check
      _
    $region11: #{tpu_custom_call.1} parent=1 // pred_check_branch
      %17 = sbr.rel (0) target = $region13
    $region12: #{tpu_custom_call.1} parent=1 // pred_region
      _
    $region13: #{tpu_custom_call.1} parent=1 // pred_fallthru
      _
    // Predicated region
    $region14: #{tpu_custom_call.1} parent=1 // pred_check
      _
    $region15: #{tpu_custom_call.1} parent=1 // pred_check_branch
      %19 = sbr.rel (0) target = $region17
    $region16: #{tpu_custom_call.1} parent=1 // pred_region
      _
    $region17: #{tpu_custom_call.1} parent=1 // pred_fallthru
      _
    // Predicated region
    $region18: #{tpu_custom_call.1} parent=1 // pred_check
      _
    $region19: #{tpu_custom_call.1} parent=1 // pred_check_branch
      %21 = sbr.rel (0) target = $region21
    $region20: #{tpu_custom_call.1} parent=1 // pred_region
      _
    $region21: #{tpu_custom_call.1} parent=1 // pred_fallthru
      _
    // Predicated region
    $region22: #{tpu_custom_call.1} parent=1 // pred_check
      _
    $region23: #{tpu_custom_call.1} parent=1 // pred_check_branch
      %23 = sbr.rel (0) target = $region25
    $region24: #{tpu_custom_call.1} parent=1 // pred_region
      _
    $region25: #{tpu_custom_call.1} parent=1 // pred_fallthru
      _
    %v24 = vld [vmem:[%s0] sm:$0xff]
    %v25 = vld [vmem:[%s0 + $0x8] sm:$0xff]
    %v26 = vld [vmem:[%s0 + $0x10] sm:$0xff]
    %v27 = vld [vmem:[%s0 + $0x18] sm:$0xff]
    %v28 = vld [vmem:[%s0 + $0x20] sm:$0xff]
    %v29 = vld [vmem:[%s0 + $0x28] sm:$0xff]
    %v30 = vld [vmem:[%s0 + $0x30] sm:$0xff]
    %v31 = vld [vmem:[%s0 + $0x38] sm:$0xff]
    %v32 = vld [vmem:[%s0 + $0x40] sm:$0xff]
    %v33 = vld [vmem:[%s0 + $0x48] sm:$0xff]
    %v34 = vld [vmem:[%s0 + $0x50] sm:$0xff]
    %v35 = vld [vmem:[%s0 + $0x58] sm:$0xff]
    %v36 = vld [vmem:[%s0 + $0x60] sm:$0xff]
    %v37 = vld [vmem:[%s0 + $0x68] sm:$0xff]
    %v38 = vld [vmem:[%s0 + $0x70] sm:$0xff]
    %v39 = vld [vmem:[%s0 + $0x78] sm:$0xff]
    %v40 = vld [vmem:[%s0 + $0x80] sm:$0xff]
    %v41 = vld [vmem:[%s0 + $0x88] sm:$0xff]
    %v42 = vld [vmem:[%s0 + $0x90] sm:$0xff]
    %v43 = vld [vmem:[%s0 + $0x98] sm:$0xff]
    %v44 = vld [vmem:[%s0 + $0xa0] sm:$0xff]
    %v45 = vld [vmem:[%s0 + $0xa8] sm:$0xff]
    %v46 = vld [vmem:[%s0 + $0xb0] sm:$0xff]
    %v47 = vld [vmem:[%s0 + $0xb8] sm:$0xff]
    %v48 = vld [vmem:[%s0 + $0xc0] sm:$0xff]
    %v49 = vld [vmem:[%s0 + $0xc8] sm:$0xff]
    %v50 = vld [vmem:[%s0 + $0xd0] sm:$0xff]
    %v51 = vld [vmem:[%s0 + $0xd8] sm:$0xff]
    %v52 = vld [vmem:[%s0 + $0xe0] sm:$0xff]
    %v53 = vld [vmem:[%s0 + $0xe8] sm:$0xff]
    %v54 = vld [vmem:[%s0 + $0xf0] sm:$0xff]
    %v55 = vld [vmem:[%s0 + $0xf8] sm:$0xff]
    %v56 = vld [vmem:[%s0 + $0x100] sm:$0xff]
    %v57 = vld [vmem:[%s0 + $0x108] sm:$0xff]
    %v58 = vld [vmem:[%s0 + $0x110] sm:$0xff]
    %v59 = vld [vmem:[%s0 + $0x118] sm:$0xff]
    %v60 = vld [vmem:[%s0 + $0x120] sm:$0xff]
    %v61 = vld [vmem:[%s0 + $0x128] sm:$0xff]
    %v62 = vld [vmem:[%s0 + $0x130] sm:$0xff]
    %v63 = vld [vmem:[%s0 + $0x138] sm:$0xff]
    %v64 = vld [vmem:[%s0 + $0x140] sm:$0xff]
    %v65 = vld [vmem:[%s0 + $0x148] sm:$0xff]
    %v66 = vld [vmem:[%s0 + $0x150] sm:$0xff]
    %v67 = vld [vmem:[%s0 + $0x158] sm:$0xff]
    %v68 = vld [vmem:[%s0 + $0x160] sm:$0xff]
    %v69 = vld [vmem:[%s0 + $0x168] sm:$0xff]
    %v70 = vld [vmem:[%s0 + $0x170] sm:$0xff]
    %v71 = vld [vmem:[%s0 + $0x178] sm:$0xff]
    %v72 = vld [vmem:[%s0 + $0x180] sm:$0xff]
    %v73 = vld [vmem:[%s0 + $0x188] sm:$0xff]
    %v74 = vld [vmem:[%s0 + $0x190] sm:$0xff]
    %v75 = vld [vmem:[%s0 + $0x198] sm:$0xff]
    %v76 = vld [vmem:[%s0 + $0x1a0] sm:$0xff]
    %v77 = vld [vmem:[%s0 + $0x1a8] sm:$0xff]
    %v78 = vld [vmem:[%s0 + $0x1b0] sm:$0xff]
    %v79 = vld [vmem:[%s0 + $0x1b8] sm:$0xff]
    %v80 = vld [vmem:[%s0 + $0x1c0] sm:$0xff]
    %v81 = vld [vmem:[%s0 + $0x1c8] sm:$0xff]
    %v82 = vld [vmem:[%s0 + $0x1d0] sm:$0xff]
    %v83 = vld [vmem:[%s0 + $0x1d8] sm:$0xff]
    %v84 = vld [vmem:[%s0 + $0x1e0] sm:$0xff]
    %v85 = vld [vmem:[%s0 + $0x1e8] sm:$0xff]
    %v86 = vld [vmem:[%s0 + $0x1f0] sm:$0xff]
    %v87 = vld [vmem:[%s0 + $0x1f8] sm:$0xff]
    %v88 = vld [vmem:[%s0 + $0x200] sm:$0xff]
    %v89 = vld [vmem:[%s0 + $0x208] sm:$0xff]
    %v90 = vld [vmem:[%s0 + $0x210] sm:$0xff]
    %v91 = vld [vmem:[%s0 + $0x218] sm:$0xff]
    %v92 = vld [vmem:[%s0 + $0x220] sm:$0xff]
    %v93 = vld [vmem:[%s0 + $0x228] sm:$0xff]
    %v94 = vld [vmem:[%s0 + $0x230] sm:$0xff]
    %v95 = vld [vmem:[%s0 + $0x238] sm:$0xff]
    %v96 = vld [vmem:[%s0 + $0x240] sm:$0xff]
    %v97 = vld [vmem:[%s0 + $0x248] sm:$0xff]
    %v98 = vld [vmem:[%s0 + $0x250] sm:$0xff]
    %v99 = vld [vmem:[%s0 + $0x258] sm:$0xff]
    %v100 = vld [vmem:[%s0 + $0x260] sm:$0xff]
    %v101 = vld [vmem:[%s0 + $0x268] sm:$0xff]
    %v102 = vld [vmem:[%s0 + $0x270] sm:$0xff]
    %v103 = vld [vmem:[%s0 + $0x278] sm:$0xff]
    %v104 = vld [vmem:[%s0 + $0x280] sm:$0xff]
    %v105 = vld [vmem:[%s0 + $0x288] sm:$0xff]
    %v106 = vld [vmem:[%s0 + $0x290] sm:$0xff]
    %v107 = vld [vmem:[%s0 + $0x298] sm:$0xff]
    %v108 = vld [vmem:[%s0 + $0x2a0] sm:$0xff]
    %v109 = vld [vmem:[%s0 + $0x2a8] sm:$0xff]
    %v110 = vld [vmem:[%s0 + $0x2b0] sm:$0xff]
    %v111 = vld [vmem:[%s0 + $0x2b8] sm:$0xff]
    %v112 = vld [vmem:[%s0 + $0x2c0] sm:$0xff]
    %v113 = vld [vmem:[%s0 + $0x2c8] sm:$0xff]
    %v114 = vld [vmem:[%s0 + $0x2d0] sm:$0xff]
    %v115 = vld [vmem:[%s0 + $0x2d8] sm:$0xff]
    %v116 = vld [vmem:[%s0 + $0x2e0] sm:$0xff]
    %v117 = vld [vmem:[%s0 + $0x2e8] sm:$0xff]
    %v118 = vld [vmem:[%s0 + $0x2f0] sm:$0xff]
    %v119 = vld [vmem:[%s0 + $0x2f8] sm:$0xff]
    %v120 = vld [vmem:[%s0 + $0x300] sm:$0xff]
    %v121 = vld [vmem:[%s0 + $0x308] sm:$0xff]
    %v122 = vld [vmem:[%s0 + $0x310] sm:$0xff]
    %v123 = vld [vmem:[%s0 + $0x318] sm:$0xff]
    %v124 = vld [vmem:[%s0 + $0x320] sm:$0xff]
    %v125 = vld [vmem:[%s0 + $0x328] sm:$0xff]
    %v126 = vld [vmem:[%s0 + $0x330] sm:$0xff]
    %v127 = vld [vmem:[%s0 + $0x338] sm:$0xff]
    %v128 = vld [vmem:[%s0 + $0x340] sm:$0xff]
    %v129 = vld [vmem:[%s0 + $0x348] sm:$0xff]
    %v130 = vld [vmem:[%s0 + $0x350] sm:$0xff]
    %v131 = vld [vmem:[%s0 + $0x358] sm:$0xff]
    %v132 = vld [vmem:[%s0 + $0x360] sm:$0xff]
    %v133 = vld [vmem:[%s0 + $0x368] sm:$0xff]
    %v134 = vld [vmem:[%s0 + $0x370] sm:$0xff]
    %v135 = vld [vmem:[%s0 + $0x378] sm:$0xff]
    %v136 = vld [vmem:[%s0 + $0x380] sm:$0xff]
    %v137 = vld [vmem:[%s0 + $0x388] sm:$0xff]
    %v138 = vld [vmem:[%s0 + $0x390] sm:$0xff]
    %v139 = vld [vmem:[%s0 + $0x398] sm:$0xff]
    %v140 = vld [vmem:[%s0 + $0x3a0] sm:$0xff]
    %v141 = vld [vmem:[%s0 + $0x3a8] sm:$0xff]
    %v142 = vld [vmem:[%s0 + $0x3b0] sm:$0xff]
    %v143 = vld [vmem:[%s0 + $0x3b8] sm:$0xff]
    %v144 = vld [vmem:[%s0 + $0x3c0] sm:$0xff]
    %v145 = vld [vmem:[%s0 + $0x3c8] sm:$0xff]
    %v146 = vld [vmem:[%s0 + $0x3d0] sm:$0xff]
    %v147 = vld [vmem:[%s0 + $0x3d8] sm:$0xff]
    %v148 = vld [vmem:[%s0 + $0x3e0] sm:$0xff]
    %v149 = vld [vmem:[%s0 + $0x3e8] sm:$0xff]
    %v150 = vld [vmem:[%s0 + $0x3f0] sm:$0xff]
    %v151 = vld [vmem:[%s0 + $0x3f8] sm:$0xff]
    %v152 = vld [vmem:[%s0 + $0x400] sm:$0xff]
    %v153 = vld [vmem:[%s0 + $0x408] sm:$0xff]
    %v154 = vld [vmem:[%s0 + $0x410] sm:$0xff]
    %v155 = vld [vmem:[%s0 + $0x418] sm:$0xff]
    %v156 = vld [vmem:[%s0 + $0x420] sm:$0xff]
    %v157 = vld [vmem:[%s0 + $0x428] sm:$0xff]
    %v158 = vld [vmem:[%s0 + $0x430] sm:$0xff]
    %v159 = vld [vmem:[%s0 + $0x438] sm:$0xff]
    %v160 = vld [vmem:[%s0 + $0x440] sm:$0xff]
    %v161 = vld [vmem:[%s0 + $0x448] sm:$0xff]
    %v162 = vld [vmem:[%s0 + $0x450] sm:$0xff]
    %v163 = vld [vmem:[%s0 + $0x458] sm:$0xff]
    %v164 = vld [vmem:[%s0 + $0x460] sm:$0xff]
    %v165 = vld [vmem:[%s0 + $0x468] sm:$0xff]
    %v166 = vld [vmem:[%s0 + $0x470] sm:$0xff]
    %v167 = vld [vmem:[%s0 + $0x478] sm:$0xff]
    %v168 = vld [vmem:[%s0 + $0x480] sm:$0xff]
    %v169 = vld [vmem:[%s0 + $0x488] sm:$0xff]
    %v170 = vld [vmem:[%s0 + $0x490] sm:$0xff]
    %v171 = vld [vmem:[%s0 + $0x498] sm:$0xff]
    %v172 = vld [vmem:[%s0 + $0x4a0] sm:$0xff]
    %v173 = vld [vmem:[%s0 + $0x4a8] sm:$0xff]
    %v174 = vld [vmem:[%s0 + $0x4b0] sm:$0xff]
    %v175 = vld [vmem:[%s0 + $0x4b8] sm:$0xff]
    %v176 = vld [vmem:[%s0 + $0x4c0] sm:$0xff]
    %v177 = vld [vmem:[%s0 + $0x4c8] sm:$0xff]
    %v178 = vld [vmem:[%s0 + $0x4d0] sm:$0xff]
    %v179 = vld [vmem:[%s0 + $0x4d8] sm:$0xff]
    %v180 = vld [vmem:[%s0 + $0x4e0] sm:$0xff]
    %v181 = vld [vmem:[%s0 + $0x4e8] sm:$0xff]
    %v182 = vld [vmem:[%s0 + $0x4f0] sm:$0xff]
    %v183 = vld [vmem:[%s0 + $0x4f8] sm:$0xff]
    %v184 = vld [vmem:[%s0 + $0x500] sm:$0xff]
    %v185 = vld [vmem:[%s0 + $0x508] sm:$0xff]
    %v186 = vld [vmem:[%s0 + $0x510] sm:$0xff]
    %v187 = vld [vmem:[%s0 + $0x518] sm:$0xff]
    %v188 = vld [vmem:[%s0 + $0x520] sm:$0xff]
    %v189 = vld [vmem:[%s0 + $0x528] sm:$0xff]
    %v190 = vld [vmem:[%s0 + $0x530] sm:$0xff]
    %v191 = vld [vmem:[%s0 + $0x538] sm:$0xff]
    %v192 = vld [vmem:[%s0 + $0x540] sm:$0xff]
    %v193 = vld [vmem:[%s0 + $0x548] sm:$0xff]
    %v194 = vld [vmem:[%s0 + $0x550] sm:$0xff]
    %v195 = vld [vmem:[%s0 + $0x558] sm:$0xff]
    %v196 = vld [vmem:[%s0 + $0x560] sm:$0xff]
    %v197 = vld [vmem:[%s0 + $0x568] sm:$0xff]
    %v198 = vld [vmem:[%s0 + $0x570] sm:$0xff]
    %v199 = vld [vmem:[%s0 + $0x578] sm:$0xff]
    %v200 = vld [vmem:[%s0 + $0x580] sm:$0xff]
    %v201 = vld [vmem:[%s0 + $0x588] sm:$0xff]
    %v202 = vld [vmem:[%s0 + $0x590] sm:$0xff]
    %v203 = vld [vmem:[%s0 + $0x598] sm:$0xff]
    %v204 = vld [vmem:[%s0 + $0x5a0] sm:$0xff]
    %v205 = vld [vmem:[%s0 + $0x5a8] sm:$0xff]
    %v206 = vld [vmem:[%s0 + $0x5b0] sm:$0xff]
    %v207 = vld [vmem:[%s0 + $0x5b8] sm:$0xff]
    %v208 = vld [vmem:[%s0 + $0x5c0] sm:$0xff]
    %v209 = vld [vmem:[%s0 + $0x5c8] sm:$0xff]
    %v210 = vld [vmem:[%s0 + $0x5d0] sm:$0xff]
    %v211 = vld [vmem:[%s0 + $0x5d8] sm:$0xff]
    %v212 = vld [vmem:[%s0 + $0x5e0] sm:$0xff]
    %v213 = vld [vmem:[%s0 + $0x5e8] sm:$0xff]
    %v214 = vld [vmem:[%s0 + $0x5f0] sm:$0xff]
    %v215 = vld [vmem:[%s0 + $0x5f8] sm:$0xff]
    %v216 = vld [vmem:[%s0 + $0x600] sm:$0xff]
    %v217 = vld [vmem:[%s0 + $0x608] sm:$0xff]
    %v218 = vld [vmem:[%s0 + $0x610] sm:$0xff]
    %v219 = vld [vmem:[%s0 + $0x618] sm:$0xff]
    %v220 = vld [vmem:[%s0 + $0x620] sm:$0xff]
    %v221 = vld [vmem:[%s0 + $0x628] sm:$0xff]
    %v222 = vld [vmem:[%s0 + $0x630] sm:$0xff]
    %v223 = vld [vmem:[%s0 + $0x638] sm:$0xff]
    %v224 = vld [vmem:[%s0 + $0x640] sm:$0xff]
    %v225 = vld [vmem:[%s0 + $0x648] sm:$0xff]
    %v226 = vld [vmem:[%s0 + $0x650] sm:$0xff]
    %v227 = vld [vmem:[%s0 + $0x658] sm:$0xff]
    %v228 = vld [vmem:[%s0 + $0x660] sm:$0xff]
    %v229 = vld [vmem:[%s0 + $0x668] sm:$0xff]
    %v230 = vld [vmem:[%s0 + $0x670] sm:$0xff]
    %v231 = vld [vmem:[%s0 + $0x678] sm:$0xff]
    %v232 = vld [vmem:[%s0 + $0x680] sm:$0xff]
    %v233 = vld [vmem:[%s0 + $0x688] sm:$0xff]
    %v234 = vld [vmem:[%s0 + $0x690] sm:$0xff]
    %v235 = vld [vmem:[%s0 + $0x698] sm:$0xff]
    %v236 = vld [vmem:[%s0 + $0x6a0] sm:$0xff]
    %v237 = vld [vmem:[%s0 + $0x6a8] sm:$0xff]
    %v238 = vld [vmem:[%s0 + $0x6b0] sm:$0xff]
    %v239 = vld [vmem:[%s0 + $0x6b8] sm:$0xff]
    %v240 = vld [vmem:[%s0 + $0x6c0] sm:$0xff]
    %v241 = vld [vmem:[%s0 + $0x6c8] sm:$0xff]
    %v242 = vld [vmem:[%s0 + $0x6d0] sm:$0xff]
    %v243 = vld [vmem:[%s0 + $0x6d8] sm:$0xff]
    %v244 = vld [vmem:[%s0 + $0x6e0] sm:$0xff]
    %v245 = vld [vmem:[%s0 + $0x6e8] sm:$0xff]
    %v246 = vld [vmem:[%s0 + $0x6f0] sm:$0xff]
    %v247 = vld [vmem:[%s0 + $0x6f8] sm:$0xff]
    %v248 = vld [vmem:[%s0 + $0x700] sm:$0xff]
    %v249 = vld [vmem:[%s0 + $0x708] sm:$0xff]
    %v250 = vld [vmem:[%s0 + $0x710] sm:$0xff]
    %v251 = vld [vmem:[%s0 + $0x718] sm:$0xff]
    %v252 = vld [vmem:[%s0 + $0x720] sm:$0xff]
    %v253 = vld [vmem:[%s0 + $0x728] sm:$0xff]
    %v254 = vld [vmem:[%s0 + $0x730] sm:$0xff]
    %v255 = vld [vmem:[%s0 + $0x738] sm:$0xff]
    %v256 = vld [vmem:[%s0 + $0x740] sm:$0xff]
    %v257 = vld [vmem:[%s0 + $0x748] sm:$0xff]
    %v258 = vld [vmem:[%s0 + $0x750] sm:$0xff]
    %v259 = vld [vmem:[%s0 + $0x758] sm:$0xff]
    %v260 = vld [vmem:[%s0 + $0x760] sm:$0xff]
    %v261 = vld [vmem:[%s0 + $0x768] sm:$0xff]
    %v262 = vld [vmem:[%s0 + $0x770] sm:$0xff]
    %v263 = vld [vmem:[%s0 + $0x778] sm:$0xff]
    %v264 = vld [vmem:[%s0 + $0x780] sm:$0xff]
    %v265 = vld [vmem:[%s0 + $0x788] sm:$0xff]
    %v266 = vld [vmem:[%s0 + $0x790] sm:$0xff]
    %v267 = vld [vmem:[%s0 + $0x798] sm:$0xff]
    %v268 = vld [vmem:[%s0 + $0x7a0] sm:$0xff]
    %v269 = vld [vmem:[%s0 + $0x7a8] sm:$0xff]
    %v270 = vld [vmem:[%s0 + $0x7b0] sm:$0xff]
    %v271 = vld [vmem:[%s0 + $0x7b8] sm:$0xff]
    %v272 = vld [vmem:[%s0 + $0x7c0] sm:$0xff]
    %v273 = vld [vmem:[%s0 + $0x7c8] sm:$0xff]
    %v274 = vld [vmem:[%s0 + $0x7d0] sm:$0xff]
    %v275 = vld [vmem:[%s0 + $0x7d8] sm:$0xff]
    %v276 = vld [vmem:[%s0 + $0x7e0] sm:$0xff]
    %v277 = vld [vmem:[%s0 + $0x7e8] sm:$0xff]
    %v278 = vld [vmem:[%s0 + $0x7f0] sm:$0xff]
    %v279 = vld [vmem:[%s0 + $0x7f8] sm:$0xff]
    %v280 = vlaneseq
    %v281 = vand.u32 %v280, 127
    %282 = vset.pattern.permute.xlu0 0
    %283 = vperm.xlu0 %282, %v24
    %v284 = vpop.permute.xlu0 %283
    %285 = vset.pattern.permute.xlu0 0
    %286 = vperm.xlu0 %285, %v25
    %v287 = vpop.permute.xlu0 %286
    %288 = vset.pattern.permute.xlu0 0
    %289 = vperm.xlu0 %288, %v26
    %v290 = vpop.permute.xlu0 %289
    %291 = vset.pattern.permute.xlu0 0
    %292 = vperm.xlu0 %291, %v27
    %v293 = vpop.permute.xlu0 %292
    %294 = vset.pattern.permute.xlu0 0
    %295 = vperm.xlu0 %294, %v28
    %v296 = vpop.permute.xlu0 %295
    %297 = vset.pattern.permute.xlu0 0
    %298 = vperm.xlu0 %297, %v29
    %v299 = vpop.permute.xlu0 %298
    %300 = vset.pattern.permute.xlu0 0
    %301 = vperm.xlu0 %300, %v30
    %v302 = vpop.permute.xlu0 %301
    %303 = vset.pattern.permute.xlu0 0
    %304 = vperm.xlu0 %303, %v31
    %v305 = vpop.permute.xlu0 %304
    %306 = vset.pattern.permute.xlu0 0
    %307 = vperm.xlu0 %306, %v32
    %v308 = vpop.permute.xlu0 %307
    %309 = vset.pattern.permute.xlu0 0
    %310 = vperm.xlu0 %309, %v33
    %v311 = vpop.permute.xlu0 %310
    %312 = vset.pattern.permute.xlu0 0
    %313 = vperm.xlu0 %312, %v34
    %v314 = vpop.permute.xlu0 %313
    %315 = vset.pattern.permute.xlu0 0
    %316 = vperm.xlu0 %315, %v35
    %v317 = vpop.permute.xlu0 %316
    %318 = vset.pattern.permute.xlu0 0
    %319 = vperm.xlu0 %318, %v36
    %v320 = vpop.permute.xlu0 %319
    %321 = vset.pattern.permute.xlu0 0
    %322 = vperm.xlu0 %321, %v37
    %v323 = vpop.permute.xlu0 %322
    %324 = vset.pattern.permute.xlu0 0
    %325 = vperm.xlu0 %324, %v38
    %v326 = vpop.permute.xlu0 %325
    %327 = vset.pattern.permute.xlu0 0
    %328 = vperm.xlu0 %327, %v39
    %v329 = vpop.permute.xlu0 %328
    %330 = vset.pattern.permute.xlu0 0
    %331 = vperm.xlu0 %330, %v40
    %v332 = vpop.permute.xlu0 %331
    %333 = vset.pattern.permute.xlu0 0
    %334 = vperm.xlu0 %333, %v41
    %v335 = vpop.permute.xlu0 %334
    %336 = vset.pattern.permute.xlu0 0
    %337 = vperm.xlu0 %336, %v42
    %v338 = vpop.permute.xlu0 %337
    %339 = vset.pattern.permute.xlu0 0
    %340 = vperm.xlu0 %339, %v43
    %v341 = vpop.permute.xlu0 %340
    %342 = vset.pattern.permute.xlu0 0
    %343 = vperm.xlu0 %342, %v44
    %v344 = vpop.permute.xlu0 %343
    %345 = vset.pattern.permute.xlu0 0
    %346 = vperm.xlu0 %345, %v45
    %v347 = vpop.permute.xlu0 %346
    %348 = vset.pattern.permute.xlu0 0
    %349 = vperm.xlu0 %348, %v46
    %v350 = vpop.permute.xlu0 %349
    %351 = vset.pattern.permute.xlu0 0
    %352 = vperm.xlu0 %351, %v47
    %v353 = vpop.permute.xlu0 %352
    %354 = vset.pattern.permute.xlu0 0
    %355 = vperm.xlu0 %354, %v48
    %v356 = vpop.permute.xlu0 %355
    %357 = vset.pattern.permute.xlu0 0
    %358 = vperm.xlu0 %357, %v49
    %v359 = vpop.permute.xlu0 %358
    %360 = vset.pattern.permute.xlu0 0
    %361 = vperm.xlu0 %360, %v50
    %v362 = vpop.permute.xlu0 %361
    %363 = vset.pattern.permute.xlu0 0
    %364 = vperm.xlu0 %363, %v51
    %v365 = vpop.permute.xlu0 %364
    %366 = vset.pattern.permute.xlu0 0
    %367 = vperm.xlu0 %366, %v52
    %v368 = vpop.permute.xlu0 %367
    %369 = vset.pattern.permute.xlu0 0
    %370 = vperm.xlu0 %369, %v53
    %v371 = vpop.permute.xlu0 %370
    %372 = vset.pattern.permute.xlu0 0
    %373 = vperm.xlu0 %372, %v54
    %v374 = vpop.permute.xlu0 %373
    %375 = vset.pattern.permute.xlu0 0
    %376 = vperm.xlu0 %375, %v55
    %v377 = vpop.permute.xlu0 %376
    %378 = vset.pattern.permute.xlu0 0
    %379 = vperm.xlu0 %378, %v56
    %v380 = vpop.permute.xlu0 %379
    %381 = vset.pattern.permute.xlu0 0
    %382 = vperm.xlu0 %381, %v57
    %v383 = vpop.permute.xlu0 %382
    %384 = vset.pattern.permute.xlu0 0
    %385 = vperm.xlu0 %384, %v58
    %v386 = vpop.permute.xlu0 %385
    %387 = vset.pattern.permute.xlu0 0
    %388 = vperm.xlu0 %387, %v59
    %v389 = vpop.permute.xlu0 %388
    %390 = vset.pattern.permute.xlu0 0
    %391 = vperm.xlu0 %390, %v60
    %v392 = vpop.permute.xlu0 %391
    %393 = vset.pattern.permute.xlu0 0
    %394 = vperm.xlu0 %393, %v61
    %v395 = vpop.permute.xlu0 %394
    %396 = vset.pattern.permute.xlu0 0
    %397 = vperm.xlu0 %396, %v62
    %v398 = vpop.permute.xlu0 %397
    %399 = vset.pattern.permute.xlu0 0
    %400 = vperm.xlu0 %399, %v63
    %v401 = vpop.permute.xlu0 %400
    %402 = vset.pattern.permute.xlu0 0
    %403 = vperm.xlu0 %402, %v64
    %v404 = vpop.permute.xlu0 %403
    %405 = vset.pattern.permute.xlu0 0
    %406 = vperm.xlu0 %405, %v65
    %v407 = vpop.permute.xlu0 %406
    %408 = vset.pattern.permute.xlu0 0
    %409 = vperm.xlu0 %408, %v66
    %v410 = vpop.permute.xlu0 %409
    %411 = vset.pattern.permute.xlu0 0
    %412 = vperm.xlu0 %411, %v67
    %v413 = vpop.permute.xlu0 %412
    %414 = vset.pattern.permute.xlu0 0
    %415 = vperm.xlu0 %414, %v68
    %v416 = vpop.permute.xlu0 %415
    %417 = vset.pattern.permute.xlu0 0
    %418 = vperm.xlu0 %417, %v69
    %v419 = vpop.permute.xlu0 %418
    %420 = vset.pattern.permute.xlu0 0
    %421 = vperm.xlu0 %420, %v70
    %v422 = vpop.permute.xlu0 %421
    %423 = vset.pattern.permute.xlu0 0
    %424 = vperm.xlu0 %423, %v71
    %v425 = vpop.permute.xlu0 %424
    %426 = vset.pattern.permute.xlu0 0
    %427 = vperm.xlu0 %426, %v72
    %v428 = vpop.permute.xlu0 %427
    %429 = vset.pattern.permute.xlu0 0
    %430 = vperm.xlu0 %429, %v73
    %v431 = vpop.permute.xlu0 %430
    %432 = vset.pattern.permute.xlu0 0
    %433 = vperm.xlu0 %432, %v74
    %v434 = vpop.permute.xlu0 %433
    %435 = vset.pattern.permute.xlu0 0
    %436 = vperm.xlu0 %435, %v75
    %v437 = vpop.permute.xlu0 %436
    %438 = vset.pattern.permute.xlu0 0
    %439 = vperm.xlu0 %438, %v76
    %v440 = vpop.permute.xlu0 %439
    %441 = vset.pattern.permute.xlu0 0
    %442 = vperm.xlu0 %441, %v77
    %v443 = vpop.permute.xlu0 %442
    %444 = vset.pattern.permute.xlu0 0
    %445 = vperm.xlu0 %444, %v78
    %v446 = vpop.permute.xlu0 %445
    %447 = vset.pattern.permute.xlu0 0
    %448 = vperm.xlu0 %447, %v79
    %v449 = vpop.permute.xlu0 %448
    %450 = vset.pattern.permute.xlu0 0
    %451 = vperm.xlu0 %450, %v80
    %v452 = vpop.permute.xlu0 %451
    %453 = vset.pattern.permute.xlu0 0
    %454 = vperm.xlu0 %453, %v81
    %v455 = vpop.permute.xlu0 %454
    %456 = vset.pattern.permute.xlu0 0
    %457 = vperm.xlu0 %456, %v82
    %v458 = vpop.permute.xlu0 %457
    %459 = vset.pattern.permute.xlu0 0
    %460 = vperm.xlu0 %459, %v83
    %v461 = vpop.permute.xlu0 %460
    %462 = vset.pattern.permute.xlu0 0
    %463 = vperm.xlu0 %462, %v84
    %v464 = vpop.permute.xlu0 %463
    %465 = vset.pattern.permute.xlu0 0
    %466 = vperm.xlu0 %465, %v85
    %v467 = vpop.permute.xlu0 %466
    %468 = vset.pattern.permute.xlu0 0
    %469 = vperm.xlu0 %468, %v86
    %v470 = vpop.permute.xlu0 %469
    %471 = vset.pattern.permute.xlu0 0
    %472 = vperm.xlu0 %471, %v87
    %v473 = vpop.permute.xlu0 %472
    %474 = vset.pattern.permute.xlu0 0
    %475 = vperm.xlu0 %474, %v88
    %v476 = vpop.permute.xlu0 %475
    %477 = vset.pattern.permute.xlu0 0
    %478 = vperm.xlu0 %477, %v89
    %v479 = vpop.permute.xlu0 %478
    %480 = vset.pattern.permute.xlu0 0
    %481 = vperm.xlu0 %480, %v90
    %v482 = vpop.permute.xlu0 %481
    %483 = vset.pattern.permute.xlu0 0
    %484 = vperm.xlu0 %483, %v91
    %v485 = vpop.permute.xlu0 %484
    %486 = vset.pattern.permute.xlu0 0
    %487 = vperm.xlu0 %486, %v92
    %v488 = vpop.permute.xlu0 %487
    %489 = vset.pattern.permute.xlu0 0
    %490 = vperm.xlu0 %489, %v93
    %v491 = vpop.permute.xlu0 %490
    %492 = vset.pattern.permute.xlu0 0
    %493 = vperm.xlu0 %492, %v94
    %v494 = vpop.permute.xlu0 %493
    %495 = vset.pattern.permute.xlu0 0
    %496 = vperm.xlu0 %495, %v95
    %v497 = vpop.permute.xlu0 %496
    %498 = vset.pattern.permute.xlu0 0
    %499 = vperm.xlu0 %498, %v96
    %v500 = vpop.permute.xlu0 %499
    %501 = vset.pattern.permute.xlu0 0
    %502 = vperm.xlu0 %501, %v97
    %v503 = vpop.permute.xlu0 %502
    %504 = vset.pattern.permute.xlu0 0
    %505 = vperm.xlu0 %504, %v98
    %v506 = vpop.permute.xlu0 %505
    %507 = vset.pattern.permute.xlu0 0
    %508 = vperm.xlu0 %507, %v99
    %v509 = vpop.permute.xlu0 %508
    %510 = vset.pattern.permute.xlu0 0
    %511 = vperm.xlu0 %510, %v100
    %v512 = vpop.permute.xlu0 %511
    %513 = vset.pattern.permute.xlu0 0
    %514 = vperm.xlu0 %513, %v101
    %v515 = vpop.permute.xlu0 %514
    %516 = vset.pattern.permute.xlu0 0
    %517 = vperm.xlu0 %516, %v102
    %v518 = vpop.permute.xlu0 %517
    %519 = vset.pattern.permute.xlu0 0
    %520 = vperm.xlu0 %519, %v103
    %v521 = vpop.permute.xlu0 %520
    %522 = vset.pattern.permute.xlu0 0
    %523 = vperm.xlu0 %522, %v104
    %v524 = vpop.permute.xlu0 %523
    %525 = vset.pattern.permute.xlu0 0
    %526 = vperm.xlu0 %525, %v105
    %v527 = vpop.permute.xlu0 %526
    %528 = vset.pattern.permute.xlu0 0
    %529 = vperm.xlu0 %528, %v106
    %v530 = vpop.permute.xlu0 %529
    %531 = vset.pattern.permute.xlu0 0
    %532 = vperm.xlu0 %531, %v107
    %v533 = vpop.permute.xlu0 %532
    %534 = vset.pattern.permute.xlu0 0
    %535 = vperm.xlu0 %534, %v108
    %v536 = vpop.permute.xlu0 %535
    %537 = vset.pattern.permute.xlu0 0
    %538 = vperm.xlu0 %537, %v109
    %v539 = vpop.permute.xlu0 %538
    %540 = vset.pattern.permute.xlu0 0
    %541 = vperm.xlu0 %540, %v110
    %v542 = vpop.permute.xlu0 %541
    %543 = vset.pattern.permute.xlu0 0
    %544 = vperm.xlu0 %543, %v111
    %v545 = vpop.permute.xlu0 %544
    %546 = vset.pattern.permute.xlu0 0
    %547 = vperm.xlu0 %546, %v112
    %v548 = vpop.permute.xlu0 %547
    %549 = vset.pattern.permute.xlu0 0
    %550 = vperm.xlu0 %549, %v113
    %v551 = vpop.permute.xlu0 %550
    %552 = vset.pattern.permute.xlu0 0
    %553 = vperm.xlu0 %552, %v114
    %v554 = vpop.permute.xlu0 %553
    %555 = vset.pattern.permute.xlu0 0
    %556 = vperm.xlu0 %555, %v115
    %v557 = vpop.permute.xlu0 %556
    %558 = vset.pattern.permute.xlu0 0
    %559 = vperm.xlu0 %558, %v116
    %v560 = vpop.permute.xlu0 %559
    %561 = vset.pattern.permute.xlu0 0
    %562 = vperm.xlu0 %561, %v117
    %v563 = vpop.permute.xlu0 %562
    %564 = vset.pattern.permute.xlu0 0
    %565 = vperm.xlu0 %564, %v118
    %v566 = vpop.permute.xlu0 %565
    %567 = vset.pattern.permute.xlu0 0
    %568 = vperm.xlu0 %567, %v119
    %v569 = vpop.permute.xlu0 %568
    %570 = vset.pattern.permute.xlu0 0
    %571 = vperm.xlu0 %570, %v120
    %v572 = vpop.permute.xlu0 %571
    %573 = vset.pattern.permute.xlu0 0
    %574 = vperm.xlu0 %573, %v121
    %v575 = vpop.permute.xlu0 %574
    %576 = vset.pattern.permute.xlu0 0
    %577 = vperm.xlu0 %576, %v122
    %v578 = vpop.permute.xlu0 %577
    %579 = vset.pattern.permute.xlu0 0
    %580 = vperm.xlu0 %579, %v123
    %v581 = vpop.permute.xlu0 %580
    %582 = vset.pattern.permute.xlu0 0
    %583 = vperm.xlu0 %582, %v124
    %v584 = vpop.permute.xlu0 %583
    %585 = vset.pattern.permute.xlu0 0
    %586 = vperm.xlu0 %585, %v125
    %v587 = vpop.permute.xlu0 %586
    %588 = vset.pattern.permute.xlu0 0
    %589 = vperm.xlu0 %588, %v126
    %v590 = vpop.permute.xlu0 %589
    %591 = vset.pattern.permute.xlu0 0
    %592 = vperm.xlu0 %591, %v127
    %v593 = vpop.permute.xlu0 %592
    %594 = vset.pattern.permute.xlu0 0
    %595 = vperm.xlu0 %594, %v128
    %v596 = vpop.permute.xlu0 %595
    %597 = vset.pattern.permute.xlu0 0
    %598 = vperm.xlu0 %597, %v129
    %v599 = vpop.permute.xlu0 %598
    %600 = vset.pattern.permute.xlu0 0
    %601 = vperm.xlu0 %600, %v130
    %v602 = vpop.permute.xlu0 %601
    %603 = vset.pattern.permute.xlu0 0
    %604 = vperm.xlu0 %603, %v131
    %v605 = vpop.permute.xlu0 %604
    %606 = vset.pattern.permute.xlu0 0
    %607 = vperm.xlu0 %606, %v132
    %v608 = vpop.permute.xlu0 %607
    %609 = vset.pattern.permute.xlu0 0
    %610 = vperm.xlu0 %609, %v133
    %v611 = vpop.permute.xlu0 %610
    %612 = vset.pattern.permute.xlu0 0
    %613 = vperm.xlu0 %612, %v134
    %v614 = vpop.permute.xlu0 %613
    %615 = vset.pattern.permute.xlu0 0
    %616 = vperm.xlu0 %615, %v135
    %v617 = vpop.permute.xlu0 %616
    %618 = vset.pattern.permute.xlu0 0
    %619 = vperm.xlu0 %618, %v136
    %v620 = vpop.permute.xlu0 %619
    %621 = vset.pattern.permute.xlu0 0
    %622 = vperm.xlu0 %621, %v137
    %v623 = vpop.permute.xlu0 %622
    %624 = vset.pattern.permute.xlu0 0
    %625 = vperm.xlu0 %624, %v138
    %v626 = vpop.permute.xlu0 %625
    %627 = vset.pattern.permute.xlu0 0
    %628 = vperm.xlu0 %627, %v139
    %v629 = vpop.permute.xlu0 %628
    %630 = vset.pattern.permute.xlu0 0
    %631 = vperm.xlu0 %630, %v140
    %v632 = vpop.permute.xlu0 %631
    %633 = vset.pattern.permute.xlu0 0
    %634 = vperm.xlu0 %633, %v141
    %v635 = vpop.permute.xlu0 %634
    %636 = vset.pattern.permute.xlu0 0
    %637 = vperm.xlu0 %636, %v142
    %v638 = vpop.permute.xlu0 %637
    %639 = vset.pattern.permute.xlu0 0
    %640 = vperm.xlu0 %639, %v143
    %v641 = vpop.permute.xlu0 %640
    %642 = vset.pattern.permute.xlu0 0
    %643 = vperm.xlu0 %642, %v144
    %v644 = vpop.permute.xlu0 %643
    %645 = vset.pattern.permute.xlu0 0
    %646 = vperm.xlu0 %645, %v145
    %v647 = vpop.permute.xlu0 %646
    %648 = vset.pattern.permute.xlu0 0
    %649 = vperm.xlu0 %648, %v146
    %v650 = vpop.permute.xlu0 %649
    %651 = vset.pattern.permute.xlu0 0
    %652 = vperm.xlu0 %651, %v147
    %v653 = vpop.permute.xlu0 %652
    %654 = vset.pattern.permute.xlu0 0
    %655 = vperm.xlu0 %654, %v148
    %v656 = vpop.permute.xlu0 %655
    %657 = vset.pattern.permute.xlu0 0
    %658 = vperm.xlu0 %657, %v149
    %v659 = vpop.permute.xlu0 %658
    %660 = vset.pattern.permute.xlu0 0
    %661 = vperm.xlu0 %660, %v150
    %v662 = vpop.permute.xlu0 %661
    %663 = vset.pattern.permute.xlu0 0
    %664 = vperm.xlu0 %663, %v151
    %v665 = vpop.permute.xlu0 %664
    %666 = vset.pattern.permute.xlu0 0
    %667 = vperm.xlu0 %666, %v152
    %v668 = vpop.permute.xlu0 %667
    %669 = vset.pattern.permute.xlu0 0
    %670 = vperm.xlu0 %669, %v153
    %v671 = vpop.permute.xlu0 %670
    %672 = vset.pattern.permute.xlu0 0
    %673 = vperm.xlu0 %672, %v154
    %v674 = vpop.permute.xlu0 %673
    %675 = vset.pattern.permute.xlu0 0
    %676 = vperm.xlu0 %675, %v155
    %v677 = vpop.permute.xlu0 %676
    %678 = vset.pattern.permute.xlu0 0
    %679 = vperm.xlu0 %678, %v156
    %v680 = vpop.permute.xlu0 %679
    %681 = vset.pattern.permute.xlu0 0
    %682 = vperm.xlu0 %681, %v157
    %v683 = vpop.permute.xlu0 %682
    %684 = vset.pattern.permute.xlu0 0
    %685 = vperm.xlu0 %684, %v158
    %v686 = vpop.permute.xlu0 %685
    %687 = vset.pattern.permute.xlu0 0
    %688 = vperm.xlu0 %687, %v159
    %v689 = vpop.permute.xlu0 %688
    %690 = vset.pattern.permute.xlu0 0
    %691 = vperm.xlu0 %690, %v160
    %v692 = vpop.permute.xlu0 %691
    %693 = vset.pattern.permute.xlu0 0
    %694 = vperm.xlu0 %693, %v161
    %v695 = vpop.permute.xlu0 %694
    %696 = vset.pattern.permute.xlu0 0
    %697 = vperm.xlu0 %696, %v162
    %v698 = vpop.permute.xlu0 %697
    %699 = vset.pattern.permute.xlu0 0
    %700 = vperm.xlu0 %699, %v163
    %v701 = vpop.permute.xlu0 %700
    %702 = vset.pattern.permute.xlu0 0
    %703 = vperm.xlu0 %702, %v164
    %v704 = vpop.permute.xlu0 %703
    %705 = vset.pattern.permute.xlu0 0
    %706 = vperm.xlu0 %705, %v165
    %v707 = vpop.permute.xlu0 %706
    %708 = vset.pattern.permute.xlu0 0
    %709 = vperm.xlu0 %708, %v166
    %v710 = vpop.permute.xlu0 %709
    %711 = vset.pattern.permute.xlu0 0
    %712 = vperm.xlu0 %711, %v167
    %v713 = vpop.permute.xlu0 %712
    %714 = vset.pattern.permute.xlu0 0
    %715 = vperm.xlu0 %714, %v168
    %v716 = vpop.permute.xlu0 %715
    %717 = vset.pattern.permute.xlu0 0
    %718 = vperm.xlu0 %717, %v169
    %v719 = vpop.permute.xlu0 %718
    %720 = vset.pattern.permute.xlu0 0
    %721 = vperm.xlu0 %720, %v170
    %v722 = vpop.permute.xlu0 %721
    %723 = vset.pattern.permute.xlu0 0
    %724 = vperm.xlu0 %723, %v171
    %v725 = vpop.permute.xlu0 %724
    %726 = vset.pattern.permute.xlu0 0
    %727 = vperm.xlu0 %726, %v172
    %v728 = vpop.permute.xlu0 %727
    %729 = vset.pattern.permute.xlu0 0
    %730 = vperm.xlu0 %729, %v173
    %v731 = vpop.permute.xlu0 %730
    %732 = vset.pattern.permute.xlu0 0
    %733 = vperm.xlu0 %732, %v174
    %v734 = vpop.permute.xlu0 %733
    %735 = vset.pattern.permute.xlu0 0
    %736 = vperm.xlu0 %735, %v175
    %v737 = vpop.permute.xlu0 %736
    %738 = vset.pattern.permute.xlu0 0
    %739 = vperm.xlu0 %738, %v176
    %v740 = vpop.permute.xlu0 %739
    %741 = vset.pattern.permute.xlu0 0
    %742 = vperm.xlu0 %741, %v177
    %v743 = vpop.permute.xlu0 %742
    %744 = vset.pattern.permute.xlu0 0
    %745 = vperm.xlu0 %744, %v178
    %v746 = vpop.permute.xlu0 %745
    %747 = vset.pattern.permute.xlu0 0
    %748 = vperm.xlu0 %747, %v179
    %v749 = vpop.permute.xlu0 %748
    %750 = vset.pattern.permute.xlu0 0
    %751 = vperm.xlu0 %750, %v180
    %v752 = vpop.permute.xlu0 %751
    %753 = vset.pattern.permute.xlu0 0
    %754 = vperm.xlu0 %753, %v181
    %v755 = vpop.permute.xlu0 %754
    %756 = vset.pattern.permute.xlu0 0
    %757 = vperm.xlu0 %756, %v182
    %v758 = vpop.permute.xlu0 %757
    %759 = vset.pattern.permute.xlu0 0
    %760 = vperm.xlu0 %759, %v183
    %v761 = vpop.permute.xlu0 %760
    %762 = vset.pattern.permute.xlu0 0
    %763 = vperm.xlu0 %762, %v184
    %v764 = vpop.permute.xlu0 %763
    %765 = vset.pattern.permute.xlu0 0
    %766 = vperm.xlu0 %765, %v185
    %v767 = vpop.permute.xlu0 %766
    %768 = vset.pattern.permute.xlu0 0
    %769 = vperm.xlu0 %768, %v186
    %v770 = vpop.permute.xlu0 %769
    %771 = vset.pattern.permute.xlu0 0
    %772 = vperm.xlu0 %771, %v187
    %v773 = vpop.permute.xlu0 %772
    %774 = vset.pattern.permute.xlu0 0
    %775 = vperm.xlu0 %774, %v188
    %v776 = vpop.permute.xlu0 %775
    %777 = vset.pattern.permute.xlu0 0
    %778 = vperm.xlu0 %777, %v189
    %v779 = vpop.permute.xlu0 %778
    %780 = vset.pattern.permute.xlu0 0
    %781 = vperm.xlu0 %780, %v190
    %v782 = vpop.permute.xlu0 %781
    %783 = vset.pattern.permute.xlu0 0
    %784 = vperm.xlu0 %783, %v191
    %v785 = vpop.permute.xlu0 %784
    %786 = vset.pattern.permute.xlu0 0
    %787 = vperm.xlu0 %786, %v192
    %v788 = vpop.permute.xlu0 %787
    %789 = vset.pattern.permute.xlu0 0
    %790 = vperm.xlu0 %789, %v193
    %v791 = vpop.permute.xlu0 %790
    %792 = vset.pattern.permute.xlu0 0
    %793 = vperm.xlu0 %792, %v194
    %v794 = vpop.permute.xlu0 %793
    %795 = vset.pattern.permute.xlu0 0
    %796 = vperm.xlu0 %795, %v195
    %v797 = vpop.permute.xlu0 %796
    %798 = vset.pattern.permute.xlu0 0
    %799 = vperm.xlu0 %798, %v196
    %v800 = vpop.permute.xlu0 %799
    %801 = vset.pattern.permute.xlu0 0
    %802 = vperm.xlu0 %801, %v197
    %v803 = vpop.permute.xlu0 %802
    %804 = vset.pattern.permute.xlu0 0
    %805 = vperm.xlu0 %804, %v198
    %v806 = vpop.permute.xlu0 %805
    %807 = vset.pattern.permute.xlu0 0
    %808 = vperm.xlu0 %807, %v199
    %v809 = vpop.permute.xlu0 %808
    %810 = vset.pattern.permute.xlu0 0
    %811 = vperm.xlu0 %810, %v200
    %v812 = vpop.permute.xlu0 %811
    %813 = vset.pattern.permute.xlu0 0
    %814 = vperm.xlu0 %813, %v201
    %v815 = vpop.permute.xlu0 %814
    %816 = vset.pattern.permute.xlu0 0
    %817 = vperm.xlu0 %816, %v202
    %v818 = vpop.permute.xlu0 %817
    %819 = vset.pattern.permute.xlu0 0
    %820 = vperm.xlu0 %819, %v203
    %v821 = vpop.permute.xlu0 %820
    %822 = vset.pattern.permute.xlu0 0
    %823 = vperm.xlu0 %822, %v204
    %v824 = vpop.permute.xlu0 %823
    %825 = vset.pattern.permute.xlu0 0
    %826 = vperm.xlu0 %825, %v205
    %v827 = vpop.permute.xlu0 %826
    %828 = vset.pattern.permute.xlu0 0
    %829 = vperm.xlu0 %828, %v206
    %v830 = vpop.permute.xlu0 %829
    %831 = vset.pattern.permute.xlu0 0
    %832 = vperm.xlu0 %831, %v207
    %v833 = vpop.permute.xlu0 %832
    %834 = vset.pattern.permute.xlu0 0
    %835 = vperm.xlu0 %834, %v208
    %v836 = vpop.permute.xlu0 %835
    %837 = vset.pattern.permute.xlu0 0
    %838 = vperm.xlu0 %837, %v209
    %v839 = vpop.permute.xlu0 %838
    %840 = vset.pattern.permute.xlu0 0
    %841 = vperm.xlu0 %840, %v210
    %v842 = vpop.permute.xlu0 %841
    %843 = vset.pattern.permute.xlu0 0
    %844 = vperm.xlu0 %843, %v211
    %v845 = vpop.permute.xlu0 %844
    %846 = vset.pattern.permute.xlu0 0
    %847 = vperm.xlu0 %846, %v212
    %v848 = vpop.permute.xlu0 %847
    %849 = vset.pattern.permute.xlu0 0
    %850 = vperm.xlu0 %849, %v213
    %v851 = vpop.permute.xlu0 %850
    %852 = vset.pattern.permute.xlu0 0
    %853 = vperm.xlu0 %852, %v214
    %v854 = vpop.permute.xlu0 %853
    %855 = vset.pattern.permute.xlu0 0
    %856 = vperm.xlu0 %855, %v215
    %v857 = vpop.permute.xlu0 %856
    %858 = vset.pattern.permute.xlu0 0
    %859 = vperm.xlu0 %858, %v216
    %v860 = vpop.permute.xlu0 %859
    %861 = vset.pattern.permute.xlu0 0
    %862 = vperm.xlu0 %861, %v217
    %v863 = vpop.permute.xlu0 %862
    %864 = vset.pattern.permute.xlu0 0
    %865 = vperm.xlu0 %864, %v218
    %v866 = vpop.permute.xlu0 %865
    %867 = vset.pattern.permute.xlu0 0
    %868 = vperm.xlu0 %867, %v219
    %v869 = vpop.permute.xlu0 %868
    %870 = vset.pattern.permute.xlu0 0
    %871 = vperm.xlu0 %870, %v220
    %v872 = vpop.permute.xlu0 %871
    %873 = vset.pattern.permute.xlu0 0
    %874 = vperm.xlu0 %873, %v221
    %v875 = vpop.permute.xlu0 %874
    %876 = vset.pattern.permute.xlu0 0
    %877 = vperm.xlu0 %876, %v222
    %v878 = vpop.permute.xlu0 %877
    %879 = vset.pattern.permute.xlu0 0
    %880 = vperm.xlu0 %879, %v223
    %v881 = vpop.permute.xlu0 %880
    %882 = vset.pattern.permute.xlu0 0
    %883 = vperm.xlu0 %882, %v224
    %v884 = vpop.permute.xlu0 %883
    %885 = vset.pattern.permute.xlu0 0
    %886 = vperm.xlu0 %885, %v225
    %v887 = vpop.permute.xlu0 %886
    %888 = vset.pattern.permute.xlu0 0
    %889 = vperm.xlu0 %888, %v226
    %v890 = vpop.permute.xlu0 %889
    %891 = vset.pattern.permute.xlu0 0
    %892 = vperm.xlu0 %891, %v227
    %v893 = vpop.permute.xlu0 %892
    %894 = vset.pattern.permute.xlu0 0
    %895 = vperm.xlu0 %894, %v228
    %v896 = vpop.permute.xlu0 %895
    %897 = vset.pattern.permute.xlu0 0
    %898 = vperm.xlu0 %897, %v229
    %v899 = vpop.permute.xlu0 %898
    %900 = vset.pattern.permute.xlu0 0
    %901 = vperm.xlu0 %900, %v230
    %v902 = vpop.permute.xlu0 %901
    %903 = vset.pattern.permute.xlu0 0
    %904 = vperm.xlu0 %903, %v231
    %v905 = vpop.permute.xlu0 %904
    %906 = vset.pattern.permute.xlu0 0
    %907 = vperm.xlu0 %906, %v232
    %v908 = vpop.permute.xlu0 %907
    %909 = vset.pattern.permute.xlu0 0
    %910 = vperm.xlu0 %909, %v233
    %v911 = vpop.permute.xlu0 %910
    %912 = vset.pattern.permute.xlu0 0
    %913 = vperm.xlu0 %912, %v234
    %v914 = vpop.permute.xlu0 %913
    %915 = vset.pattern.permute.xlu0 0
    %916 = vperm.xlu0 %915, %v235
    %v917 = vpop.permute.xlu0 %916
    %918 = vset.pattern.permute.xlu0 0
    %919 = vperm.xlu0 %918, %v236
    %v920 = vpop.permute.xlu0 %919
    %921 = vset.pattern.permute.xlu0 0
    %922 = vperm.xlu0 %921, %v237
    %v923 = vpop.permute.xlu0 %922
    %924 = vset.pattern.permute.xlu0 0
    %925 = vperm.xlu0 %924, %v238
    %v926 = vpop.permute.xlu0 %925
    %927 = vset.pattern.permute.xlu0 0
    %928 = vperm.xlu0 %927, %v239
    %v929 = vpop.permute.xlu0 %928
    %930 = vset.pattern.permute.xlu0 0
    %931 = vperm.xlu0 %930, %v240
    %v932 = vpop.permute.xlu0 %931
    %933 = vset.pattern.permute.xlu0 0
    %934 = vperm.xlu0 %933, %v241
    %v935 = vpop.permute.xlu0 %934
    %936 = vset.pattern.permute.xlu0 0
    %937 = vperm.xlu0 %936, %v242
    %v938 = vpop.permute.xlu0 %937
    %939 = vset.pattern.permute.xlu0 0
    %940 = vperm.xlu0 %939, %v243
    %v941 = vpop.permute.xlu0 %940
    %942 = vset.pattern.permute.xlu0 0
    %943 = vperm.xlu0 %942, %v244
    %v944 = vpop.permute.xlu0 %943
    %945 = vset.pattern.permute.xlu0 0
    %946 = vperm.xlu0 %945, %v245
    %v947 = vpop.permute.xlu0 %946
    %948 = vset.pattern.permute.xlu0 0
    %949 = vperm.xlu0 %948, %v246
    %v950 = vpop.permute.xlu0 %949
    %951 = vset.pattern.permute.xlu0 0
    %952 = vperm.xlu0 %951, %v247
    %v953 = vpop.permute.xlu0 %952
    %954 = vset.pattern.permute.xlu0 0
    %955 = vperm.xlu0 %954, %v248
    %v956 = vpop.permute.xlu0 %955
    %957 = vset.pattern.permute.xlu0 0
    %958 = vperm.xlu0 %957, %v249
    %v959 = vpop.permute.xlu0 %958
    %960 = vset.pattern.permute.xlu0 0
    %961 = vperm.xlu0 %960, %v250
    %v962 = vpop.permute.xlu0 %961
    %963 = vset.pattern.permute.xlu0 0
    %964 = vperm.xlu0 %963, %v251
    %v965 = vpop.permute.xlu0 %964
    %966 = vset.pattern.permute.xlu0 0
    %967 = vperm.xlu0 %966, %v252
    %v968 = vpop.permute.xlu0 %967
    %969 = vset.pattern.permute.xlu0 0
    %970 = vperm.xlu0 %969, %v253
    %v971 = vpop.permute.xlu0 %970
    %972 = vset.pattern.permute.xlu0 0
    %973 = vperm.xlu0 %972, %v254
    %v974 = vpop.permute.xlu0 %973
    %975 = vset.pattern.permute.xlu0 0
    %976 = vperm.xlu0 %975, %v255
    %v977 = vpop.permute.xlu0 %976
    %978 = vset.pattern.permute.xlu0 0
    %979 = vperm.xlu0 %978, %v256
    %v980 = vpop.permute.xlu0 %979
    %981 = vset.pattern.permute.xlu0 0
    %982 = vperm.xlu0 %981, %v257
    %v983 = vpop.permute.xlu0 %982
    %984 = vset.pattern.permute.xlu0 0
    %985 = vperm.xlu0 %984, %v258
    %v986 = vpop.permute.xlu0 %985
    %987 = vset.pattern.permute.xlu0 0
    %988 = vperm.xlu0 %987, %v259
    %v989 = vpop.permute.xlu0 %988
    %990 = vset.pattern.permute.xlu0 0
    %991 = vperm.xlu0 %990, %v260
    %v992 = vpop.permute.xlu0 %991
    %993 = vset.pattern.permute.xlu0 0
    %994 = vperm.xlu0 %993, %v261
    %v995 = vpop.permute.xlu0 %994
    %996 = vset.pattern.permute.xlu0 0
    %997 = vperm.xlu0 %996, %v262
    %v998 = vpop.permute.xlu0 %997
    %999 = vset.pattern.permute.xlu0 0
    %1000 = vperm.xlu0 %999, %v263
    %v1001 = vpop.permute.xlu0 %1000
    %1002 = vset.pattern.permute.xlu0 0
    %1003 = vperm.xlu0 %1002, %v264
    %v1004 = vpop.permute.xlu0 %1003
    %1005 = vset.pattern.permute.xlu0 0
    %1006 = vperm.xlu0 %1005, %v265
    %v1007 = vpop.permute.xlu0 %1006
    %1008 = vset.pattern.permute.xlu0 0
    %1009 = vperm.xlu0 %1008, %v266
    %v1010 = vpop.permute.xlu0 %1009
    %1011 = vset.pattern.permute.xlu0 0
    %1012 = vperm.xlu0 %1011, %v267
    %v1013 = vpop.permute.xlu0 %1012
    %1014 = vset.pattern.permute.xlu0 0
    %1015 = vperm.xlu0 %1014, %v268
    %v1016 = vpop.permute.xlu0 %1015
    %1017 = vset.pattern.permute.xlu0 0
    %1018 = vperm.xlu0 %1017, %v269
    %v1019 = vpop.permute.xlu0 %1018
    %1020 = vset.pattern.permute.xlu0 0
    %1021 = vperm.xlu0 %1020, %v270
    %v1022 = vpop.permute.xlu0 %1021
    %1023 = vset.pattern.permute.xlu0 0
    %1024 = vperm.xlu0 %1023, %v271
    %v1025 = vpop.permute.xlu0 %1024
    %1026 = vset.pattern.permute.xlu0 0
    %1027 = vperm.xlu0 %1026, %v272
    %v1028 = vpop.permute.xlu0 %1027
    %1029 = vset.pattern.permute.xlu0 0
    %1030 = vperm.xlu0 %1029, %v273
    %v1031 = vpop.permute.xlu0 %1030
    %1032 = vset.pattern.permute.xlu0 0
    %1033 = vperm.xlu0 %1032, %v274
    %v1034 = vpop.permute.xlu0 %1033
    %1035 = vset.pattern.permute.xlu0 0
    %1036 = vperm.xlu0 %1035, %v275
    %v1037 = vpop.permute.xlu0 %1036
    %1038 = vset.pattern.permute.xlu0 0
    %1039 = vperm.xlu0 %1038, %v276
    %v1040 = vpop.permute.xlu0 %1039
    %1041 = vset.pattern.permute.xlu0 0
    %1042 = vperm.xlu0 %1041, %v277
    %v1043 = vpop.permute.xlu0 %1042
    %1044 = vset.pattern.permute.xlu0 0
    %1045 = vperm.xlu0 %1044, %v278
    %v1046 = vpop.permute.xlu0 %1045
    %1047 = vset.pattern.permute.xlu0 0
    %1048 = vperm.xlu0 %1047, %v279
    %v1049 = vpop.permute.xlu0 %1048
    %vm1050 = vcmp.eq.s32.totalorder %v284, %v281
    %vm1051 = vcmp.eq.s32.totalorder %v287, %v281
    %vm1052 = vcmp.eq.s32.totalorder %v290, %v281
    %vm1053 = vcmp.eq.s32.totalorder %v293, %v281
    %vm1054 = vcmp.eq.s32.totalorder %v296, %v281
    %vm1055 = vcmp.eq.s32.totalorder %v299, %v281
    %vm1056 = vcmp.eq.s32.totalorder %v302, %v281
    %vm1057 = vcmp.eq.s32.totalorder %v305, %v281
    %vm1058 = vcmp.eq.s32.totalorder %v308, %v281
    %vm1059 = vcmp.eq.s32.totalorder %v311, %v281
    %vm1060 = vcmp.eq.s32.totalorder %v314, %v281
    %vm1061 = vcmp.eq.s32.totalorder %v317, %v281
    %vm1062 = vcmp.eq.s32.totalorder %v320, %v281
    %vm1063 = vcmp.eq.s32.totalorder %v323, %v281
    %vm1064 = vcmp.eq.s32.totalorder %v326, %v281
    %vm1065 = vcmp.eq.s32.totalorder %v329, %v281
    %vm1066 = vcmp.eq.s32.totalorder %v332, %v281
    %vm1067 = vcmp.eq.s32.totalorder %v335, %v281
    %vm1068 = vcmp.eq.s32.totalorder %v338, %v281
    %vm1069 = vcmp.eq.s32.totalorder %v341, %v281
    %vm1070 = vcmp.eq.s32.totalorder %v344, %v281
    %vm1071 = vcmp.eq.s32.totalorder %v347, %v281
    %vm1072 = vcmp.eq.s32.totalorder %v350, %v281
    %vm1073 = vcmp.eq.s32.totalorder %v353, %v281
    %vm1074 = vcmp.eq.s32.totalorder %v356, %v281
    %vm1075 = vcmp.eq.s32.totalorder %v359, %v281
    %vm1076 = vcmp.eq.s32.totalorder %v362, %v281
    %vm1077 = vcmp.eq.s32.totalorder %v365, %v281
    %vm1078 = vcmp.eq.s32.totalorder %v368, %v281
    %vm1079 = vcmp.eq.s32.totalorder %v371, %v281
    %vm1080 = vcmp.eq.s32.totalorder %v374, %v281
    %vm1081 = vcmp.eq.s32.totalorder %v377, %v281
    %vm1082 = vcmp.eq.s32.totalorder %v380, %v281
    %vm1083 = vcmp.eq.s32.totalorder %v383, %v281
    %vm1084 = vcmp.eq.s32.totalorder %v386, %v281
    %vm1085 = vcmp.eq.s32.totalorder %v389, %v281
    %vm1086 = vcmp.eq.s32.totalorder %v392, %v281
    %vm1087 = vcmp.eq.s32.totalorder %v395, %v281
    %vm1088 = vcmp.eq.s32.totalorder %v398, %v281
    %vm1089 = vcmp.eq.s32.totalorder %v401, %v281
    %vm1090 = vcmp.eq.s32.totalorder %v404, %v281
    %vm1091 = vcmp.eq.s32.totalorder %v407, %v281
    %vm1092 = vcmp.eq.s32.totalorder %v410, %v281
    %vm1093 = vcmp.eq.s32.totalorder %v413, %v281
    %vm1094 = vcmp.eq.s32.totalorder %v416, %v281
    %vm1095 = vcmp.eq.s32.totalorder %v419, %v281
    %vm1096 = vcmp.eq.s32.totalorder %v422, %v281
    %vm1097 = vcmp.eq.s32.totalorder %v425, %v281
    %vm1098 = vcmp.eq.s32.totalorder %v428, %v281
    %vm1099 = vcmp.eq.s32.totalorder %v431, %v281
    %vm1100 = vcmp.eq.s32.totalorder %v434, %v281
    %vm1101 = vcmp.eq.s32.totalorder %v437, %v281
    %vm1102 = vcmp.eq.s32.totalorder %v440, %v281
    %vm1103 = vcmp.eq.s32.totalorder %v443, %v281
    %vm1104 = vcmp.eq.s32.totalorder %v446, %v281
    %vm1105 = vcmp.eq.s32.totalorder %v449, %v281
    %vm1106 = vcmp.eq.s32.totalorder %v452, %v281
    %vm1107 = vcmp.eq.s32.totalorder %v455, %v281
    %vm1108 = vcmp.eq.s32.totalorder %v458, %v281
    %vm1109 = vcmp.eq.s32.totalorder %v461, %v281
    %vm1110 = vcmp.eq.s32.totalorder %v464, %v281
    %vm1111 = vcmp.eq.s32.totalorder %v467, %v281
    %vm1112 = vcmp.eq.s32.totalorder %v470, %v281
    %vm1113 = vcmp.eq.s32.totalorder %v473, %v281
    %vm1114 = vcmp.eq.s32.totalorder %v476, %v281
    %vm1115 = vcmp.eq.s32.totalorder %v479, %v281
    %vm1116 = vcmp.eq.s32.totalorder %v482, %v281
    %vm1117 = vcmp.eq.s32.totalorder %v485, %v281
    %vm1118 = vcmp.eq.s32.totalorder %v488, %v281
    %vm1119 = vcmp.eq.s32.totalorder %v491, %v281
    %vm1120 = vcmp.eq.s32.totalorder %v494, %v281
    %vm1121 = vcmp.eq.s32.totalorder %v497, %v281
    %vm1122 = vcmp.eq.s32.totalorder %v500, %v281
    %vm1123 = vcmp.eq.s32.totalorder %v503, %v281
    %vm1124 = vcmp.eq.s32.totalorder %v506, %v281
    %vm1125 = vcmp.eq.s32.totalorder %v509, %v281
    %vm1126 = vcmp.eq.s32.totalorder %v512, %v281
    %vm1127 = vcmp.eq.s32.totalorder %v515, %v281
    %vm1128 = vcmp.eq.s32.totalorder %v518, %v281
    %vm1129 = vcmp.eq.s32.totalorder %v521, %v281
    %vm1130 = vcmp.eq.s32.totalorder %v524, %v281
    %vm1131 = vcmp.eq.s32.totalorder %v527, %v281
    %vm1132 = vcmp.eq.s32.totalorder %v530, %v281
    %vm1133 = vcmp.eq.s32.totalorder %v533, %v281
    %vm1134 = vcmp.eq.s32.totalorder %v536, %v281
    %vm1135 = vcmp.eq.s32.totalorder %v539, %v281
    %vm1136 = vcmp.eq.s32.totalorder %v542, %v281
    %vm1137 = vcmp.eq.s32.totalorder %v545, %v281
    %vm1138 = vcmp.eq.s32.totalorder %v548, %v281
    %vm1139 = vcmp.eq.s32.totalorder %v551, %v281
    %vm1140 = vcmp.eq.s32.totalorder %v554, %v281
    %vm1141 = vcmp.eq.s32.totalorder %v557, %v281
    %vm1142 = vcmp.eq.s32.totalorder %v560, %v281
    %vm1143 = vcmp.eq.s32.totalorder %v563, %v281
    %vm1144 = vcmp.eq.s32.totalorder %v566, %v281
    %vm1145 = vcmp.eq.s32.totalorder %v569, %v281
    %vm1146 = vcmp.eq.s32.totalorder %v572, %v281
    %vm1147 = vcmp.eq.s32.totalorder %v575, %v281
    %vm1148 = vcmp.eq.s32.totalorder %v578, %v281
    %vm1149 = vcmp.eq.s32.totalorder %v581, %v281
    %vm1150 = vcmp.eq.s32.totalorder %v584, %v281
    %vm1151 = vcmp.eq.s32.totalorder %v587, %v281
    %vm1152 = vcmp.eq.s32.totalorder %v590, %v281
    %vm1153 = vcmp.eq.s32.totalorder %v593, %v281
    %vm1154 = vcmp.eq.s32.totalorder %v596, %v281
    %vm1155 = vcmp.eq.s32.totalorder %v599, %v281
    %vm1156 = vcmp.eq.s32.totalorder %v602, %v281
    %vm1157 = vcmp.eq.s32.totalorder %v605, %v281
    %vm1158 = vcmp.eq.s32.totalorder %v608, %v281
    %vm1159 = vcmp.eq.s32.totalorder %v611, %v281
    %vm1160 = vcmp.eq.s32.totalorder %v614, %v281
    %vm1161 = vcmp.eq.s32.totalorder %v617, %v281
    %vm1162 = vcmp.eq.s32.totalorder %v620, %v281
    %vm1163 = vcmp.eq.s32.totalorder %v623, %v281
    %vm1164 = vcmp.eq.s32.totalorder %v626, %v281
    %vm1165 = vcmp.eq.s32.totalorder %v629, %v281
    %vm1166 = vcmp.eq.s32.totalorder %v632, %v281
    %vm1167 = vcmp.eq.s32.totalorder %v635, %v281
    %vm1168 = vcmp.eq.s32.totalorder %v638, %v281
    %vm1169 = vcmp.eq.s32.totalorder %v641, %v281
    %vm1170 = vcmp.eq.s32.totalorder %v644, %v281
    %vm1171 = vcmp.eq.s32.totalorder %v647, %v281
    %vm1172 = vcmp.eq.s32.totalorder %v650, %v281
    %vm1173 = vcmp.eq.s32.totalorder %v653, %v281
    %vm1174 = vcmp.eq.s32.totalorder %v656, %v281
    %vm1175 = vcmp.eq.s32.totalorder %v659, %v281
    %vm1176 = vcmp.eq.s32.totalorder %v662, %v281
    %vm1177 = vcmp.eq.s32.totalorder %v665, %v281
    %vm1178 = vcmp.eq.s32.totalorder %v668, %v281
    %vm1179 = vcmp.eq.s32.totalorder %v671, %v281
    %vm1180 = vcmp.eq.s32.totalorder %v674, %v281
    %vm1181 = vcmp.eq.s32.totalorder %v677, %v281
    %vm1182 = vcmp.eq.s32.totalorder %v680, %v281
    %vm1183 = vcmp.eq.s32.totalorder %v683, %v281
    %vm1184 = vcmp.eq.s32.totalorder %v686, %v281
    %vm1185 = vcmp.eq.s32.totalorder %v689, %v281
    %vm1186 = vcmp.eq.s32.totalorder %v692, %v281
    %vm1187 = vcmp.eq.s32.totalorder %v695, %v281
    %vm1188 = vcmp.eq.s32.totalorder %v698, %v281
    %vm1189 = vcmp.eq.s32.totalorder %v701, %v281
    %vm1190 = vcmp.eq.s32.totalorder %v704, %v281
    %vm1191 = vcmp.eq.s32.totalorder %v707, %v281
    %vm1192 = vcmp.eq.s32.totalorder %v710, %v281
    %vm1193 = vcmp.eq.s32.totalorder %v713, %v281
    %vm1194 = vcmp.eq.s32.totalorder %v716, %v281
    %vm1195 = vcmp.eq.s32.totalorder %v719, %v281
    %vm1196 = vcmp.eq.s32.totalorder %v722, %v281
    %vm1197 = vcmp.eq.s32.totalorder %v725, %v281
    %vm1198 = vcmp.eq.s32.totalorder %v728, %v281
    %vm1199 = vcmp.eq.s32.totalorder %v731, %v281
    %vm1200 = vcmp.eq.s32.totalorder %v734, %v281
    %vm1201 = vcmp.eq.s32.totalorder %v737, %v281
    %vm1202 = vcmp.eq.s32.totalorder %v740, %v281
    %vm1203 = vcmp.eq.s32.totalorder %v743, %v281
    %vm1204 = vcmp.eq.s32.totalorder %v746, %v281
    %vm1205 = vcmp.eq.s32.totalorder %v749, %v281
    %vm1206 = vcmp.eq.s32.totalorder %v752, %v281
    %vm1207 = vcmp.eq.s32.totalorder %v755, %v281
    %vm1208 = vcmp.eq.s32.totalorder %v758, %v281
    %vm1209 = vcmp.eq.s32.totalorder %v761, %v281
    %vm1210 = vcmp.eq.s32.totalorder %v764, %v281
    %vm1211 = vcmp.eq.s32.totalorder %v767, %v281
    %vm1212 = vcmp.eq.s32.totalorder %v770, %v281
    %vm1213 = vcmp.eq.s32.totalorder %v773, %v281
    %vm1214 = vcmp.eq.s32.totalorder %v776, %v281
    %vm1215 = vcmp.eq.s32.totalorder %v779, %v281
    %vm1216 = vcmp.eq.s32.totalorder %v782, %v281
    %vm1217 = vcmp.eq.s32.totalorder %v785, %v281
    %vm1218 = vcmp.eq.s32.totalorder %v788, %v281
    %vm1219 = vcmp.eq.s32.totalorder %v791, %v281
    %vm1220 = vcmp.eq.s32.totalorder %v794, %v281
    %vm1221 = vcmp.eq.s32.totalorder %v797, %v281
    %vm1222 = vcmp.eq.s32.totalorder %v800, %v281
    %vm1223 = vcmp.eq.s32.totalorder %v803, %v281
    %vm1224 = vcmp.eq.s32.totalorder %v806, %v281
    %vm1225 = vcmp.eq.s32.totalorder %v809, %v281
    %vm1226 = vcmp.eq.s32.totalorder %v812, %v281
    %vm1227 = vcmp.eq.s32.totalorder %v815, %v281
    %vm1228 = vcmp.eq.s32.totalorder %v818, %v281
    %vm1229 = vcmp.eq.s32.totalorder %v821, %v281
    %vm1230 = vcmp.eq.s32.totalorder %v824, %v281
    %vm1231 = vcmp.eq.s32.totalorder %v827, %v281
    %vm1232 = vcmp.eq.s32.totalorder %v830, %v281
    %vm1233 = vcmp.eq.s32.totalorder %v833, %v281
    %vm1234 = vcmp.eq.s32.totalorder %v836, %v281
    %vm1235 = vcmp.eq.s32.totalorder %v839, %v281
    %vm1236 = vcmp.eq.s32.totalorder %v842, %v281
    %vm1237 = vcmp.eq.s32.totalorder %v845, %v281
    %vm1238 = vcmp.eq.s32.totalorder %v848, %v281
    %vm1239 = vcmp.eq.s32.totalorder %v851, %v281
    %vm1240 = vcmp.eq.s32.totalorder %v854, %v281
    %vm1241 = vcmp.eq.s32.totalorder %v857, %v281
    %vm1242 = vcmp.eq.s32.totalorder %v860, %v281
    %vm1243 = vcmp.eq.s32.totalorder %v863, %v281
    %vm1244 = vcmp.eq.s32.totalorder %v866, %v281
    %vm1245 = vcmp.eq.s32.totalorder %v869, %v281
    %vm1246 = vcmp.eq.s32.totalorder %v872, %v281
    %vm1247 = vcmp.eq.s32.totalorder %v875, %v281
    %vm1248 = vcmp.eq.s32.totalorder %v878, %v281
    %vm1249 = vcmp.eq.s32.totalorder %v881, %v281
    %vm1250 = vcmp.eq.s32.totalorder %v884, %v281
    %vm1251 = vcmp.eq.s32.totalorder %v887, %v281
    %vm1252 = vcmp.eq.s32.totalorder %v890, %v281
    %vm1253 = vcmp.eq.s32.totalorder %v893, %v281
    %vm1254 = vcmp.eq.s32.totalorder %v896, %v281
    %vm1255 = vcmp.eq.s32.totalorder %v899, %v281
    %vm1256 = vcmp.eq.s32.totalorder %v902, %v281
    %vm1257 = vcmp.eq.s32.totalorder %v905, %v281
    %vm1258 = vcmp.eq.s32.totalorder %v908, %v281
    %vm1259 = vcmp.eq.s32.totalorder %v911, %v281
    %vm1260 = vcmp.eq.s32.totalorder %v914, %v281
    %vm1261 = vcmp.eq.s32.totalorder %v917, %v281
    %vm1262 = vcmp.eq.s32.totalorder %v920, %v281
    %vm1263 = vcmp.eq.s32.totalorder %v923, %v281
    %vm1264 = vcmp.eq.s32.totalorder %v926, %v281
    %vm1265 = vcmp.eq.s32.totalorder %v929, %v281
    %vm1266 = vcmp.eq.s32.totalorder %v932, %v281
    %vm1267 = vcmp.eq.s32.totalorder %v935, %v281
    %vm1268 = vcmp.eq.s32.totalorder %v938, %v281
    %vm1269 = vcmp.eq.s32.totalorder %v941, %v281
    %vm1270 = vcmp.eq.s32.totalorder %v944, %v281
    %vm1271 = vcmp.eq.s32.totalorder %v947, %v281
    %vm1272 = vcmp.eq.s32.totalorder %v950, %v281
    %vm1273 = vcmp.eq.s32.totalorder %v953, %v281
    %vm1274 = vcmp.eq.s32.totalorder %v956, %v281
    %vm1275 = vcmp.eq.s32.totalorder %v959, %v281
    %vm1276 = vcmp.eq.s32.totalorder %v962, %v281
    %vm1277 = vcmp.eq.s32.totalorder %v965, %v281
    %vm1278 = vcmp.eq.s32.totalorder %v968, %v281
    %vm1279 = vcmp.eq.s32.totalorder %v971, %v281
    %vm1280 = vcmp.eq.s32.totalorder %v974, %v281
    %vm1281 = vcmp.eq.s32.totalorder %v977, %v281
    %vm1282 = vcmp.eq.s32.totalorder %v980, %v281
    %vm1283 = vcmp.eq.s32.totalorder %v983, %v281
    %vm1284 = vcmp.eq.s32.totalorder %v986, %v281
    %vm1285 = vcmp.eq.s32.totalorder %v989, %v281
    %vm1286 = vcmp.eq.s32.totalorder %v992, %v281
    %vm1287 = vcmp.eq.s32.totalorder %v995, %v281
    %vm1288 = vcmp.eq.s32.totalorder %v998, %v281
    %vm1289 = vcmp.eq.s32.totalorder %v1001, %v281
    %vm1290 = vcmp.eq.s32.totalorder %v1004, %v281
    %vm1291 = vcmp.eq.s32.totalorder %v1007, %v281
    %vm1292 = vcmp.eq.s32.totalorder %v1010, %v281
    %vm1293 = vcmp.eq.s32.totalorder %v1013, %v281
    %vm1294 = vcmp.eq.s32.totalorder %v1016, %v281
    %vm1295 = vcmp.eq.s32.totalorder %v1019, %v281
    %vm1296 = vcmp.eq.s32.totalorder %v1022, %v281
    %vm1297 = vcmp.eq.s32.totalorder %v1025, %v281
    %vm1298 = vcmp.eq.s32.totalorder %v1028, %v281
    %vm1299 = vcmp.eq.s32.totalorder %v1031, %v281
    %vm1300 = vcmp.eq.s32.totalorder %v1034, %v281
    %vm1301 = vcmp.eq.s32.totalorder %v1037, %v281
    %vm1302 = vcmp.eq.s32.totalorder %v1040, %v281
    %vm1303 = vcmp.eq.s32.totalorder %v1043, %v281
    %vm1304 = vcmp.eq.s32.totalorder %v1046, %v281
    %vm1305 = vcmp.eq.s32.totalorder %v1049, %v281
    %v1306 = vsel %vm1050, 1, 0
    %v1307 = vsel %vm1051, 1, 0
    %v1308 = vsel %vm1052, 1, 0
    %v1309 = vsel %vm1053, 1, 0
    %v1310 = vsel %vm1054, 1, 0
    %v1311 = vsel %vm1055, 1, 0
    %v1312 = vsel %vm1056, 1, 0
    %v1313 = vsel %vm1057, 1, 0
    %v1314 = vsel %vm1058, 1, 0
    %v1315 = vsel %vm1059, 1, 0
    %v1316 = vsel %vm1060, 1, 0
    %v1317 = vsel %vm1061, 1, 0
    %v1318 = vsel %vm1062, 1, 0
    %v1319 = vsel %vm1063, 1, 0
    %v1320 = vsel %vm1064, 1, 0
    %v1321 = vsel %vm1065, 1, 0
    %v1322 = vsel %vm1066, 1, 0
    %v1323 = vsel %vm1067, 1, 0
    %v1324 = vsel %vm1068, 1, 0
    %v1325 = vsel %vm1069, 1, 0
    %v1326 = vsel %vm1070, 1, 0
    %v1327 = vsel %vm1071, 1, 0
    %v1328 = vsel %vm1072, 1, 0
    %v1329 = vsel %vm1073, 1, 0
    %v1330 = vsel %vm1074, 1, 0
    %v1331 = vsel %vm1075, 1, 0
    %v1332 = vsel %vm1076, 1, 0
    %v1333 = vsel %vm1077, 1, 0
    %v1334 = vsel %vm1078, 1, 0
    %v1335 = vsel %vm1079, 1, 0
    %v1336 = vsel %vm1080, 1, 0
    %v1337 = vsel %vm1081, 1, 0
    %v1338 = vsel %vm1082, 1, 0
    %v1339 = vsel %vm1083, 1, 0
    %v1340 = vsel %vm1084, 1, 0
    %v1341 = vsel %vm1085, 1, 0
    %v1342 = vsel %vm1086, 1, 0
    %v1343 = vsel %vm1087, 1, 0
    %v1344 = vsel %vm1088, 1, 0
    %v1345 = vsel %vm1089, 1, 0
    %v1346 = vsel %vm1090, 1, 0
    %v1347 = vsel %vm1091, 1, 0
    %v1348 = vsel %vm1092, 1, 0
    %v1349 = vsel %vm1093, 1, 0
    %v1350 = vsel %vm1094, 1, 0
    %v1351 = vsel %vm1095, 1, 0
    %v1352 = vsel %vm1096, 1, 0
    %v1353 = vsel %vm1097, 1, 0
    %v1354 = vsel %vm1098, 1, 0
    %v1355 = vsel %vm1099, 1, 0
    %v1356 = vsel %vm1100, 1, 0
    %v1357 = vsel %vm1101, 1, 0
    %v1358 = vsel %vm1102, 1, 0
    %v1359 = vsel %vm1103, 1, 0
    %v1360 = vsel %vm1104, 1, 0
    %v1361 = vsel %vm1105, 1, 0
    %v1362 = vsel %vm1106, 1, 0
    %v1363 = vsel %vm1107, 1, 0
    %v1364 = vsel %vm1108, 1, 0
    %v1365 = vsel %vm1109, 1, 0
    %v1366 = vsel %vm1110, 1, 0
    %v1367 = vsel %vm1111, 1, 0
    %v1368 = vsel %vm1112, 1, 0
    %v1369 = vsel %vm1113, 1, 0
    %v1370 = vsel %vm1114, 1, 0
    %v1371 = vsel %vm1115, 1, 0
    %v1372 = vsel %vm1116, 1, 0
    %v1373 = vsel %vm1117, 1, 0
    %v1374 = vsel %vm1118, 1, 0
    %v1375 = vsel %vm1119, 1, 0
    %v1376 = vsel %vm1120, 1, 0
    %v1377 = vsel %vm1121, 1, 0
    %v1378 = vsel %vm1122, 1, 0
    %v1379 = vsel %vm1123, 1, 0
    %v1380 = vsel %vm1124, 1, 0
    %v1381 = vsel %vm1125, 1, 0
    %v1382 = vsel %vm1126, 1, 0
    %v1383 = vsel %vm1127, 1, 0
    %v1384 = vsel %vm1128, 1, 0
    %v1385 = vsel %vm1129, 1, 0
    %v1386 = vsel %vm1130, 1, 0
    %v1387 = vsel %vm1131, 1, 0
    %v1388 = vsel %vm1132, 1, 0
    %v1389 = vsel %vm1133, 1, 0
    %v1390 = vsel %vm1134, 1, 0
    %v1391 = vsel %vm1135, 1, 0
    %v1392 = vsel %vm1136, 1, 0
    %v1393 = vsel %vm1137, 1, 0
    %v1394 = vsel %vm1138, 1, 0
    %v1395 = vsel %vm1139, 1, 0
    %v1396 = vsel %vm1140, 1, 0
    %v1397 = vsel %vm1141, 1, 0
    %v1398 = vsel %vm1142, 1, 0
    %v1399 = vsel %vm1143, 1, 0
    %v1400 = vsel %vm1144, 1, 0
    %v1401 = vsel %vm1145, 1, 0
    %v1402 = vsel %vm1146, 1, 0
    %v1403 = vsel %vm1147, 1, 0
    %v1404 = vsel %vm1148, 1, 0
    %v1405 = vsel %vm1149, 1, 0
    %v1406 = vsel %vm1150, 1, 0
    %v1407 = vsel %vm1151, 1, 0
    %v1408 = vsel %vm1152, 1, 0
    %v1409 = vsel %vm1153, 1, 0
    %v1410 = vsel %vm1154, 1, 0
    %v1411 = vsel %vm1155, 1, 0
    %v1412 = vsel %vm1156, 1, 0
    %v1413 = vsel %vm1157, 1, 0
    %v1414 = vsel %vm1158, 1, 0
    %v1415 = vsel %vm1159, 1, 0
    %v1416 = vsel %vm1160, 1, 0
    %v1417 = vsel %vm1161, 1, 0
    %v1418 = vsel %vm1162, 1, 0
    %v1419 = vsel %vm1163, 1, 0
    %v1420 = vsel %vm1164, 1, 0
    %v1421 = vsel %vm1165, 1, 0
    %v1422 = vsel %vm1166, 1, 0
    %v1423 = vsel %vm1167, 1, 0
    %v1424 = vsel %vm1168, 1, 0
    %v1425 = vsel %vm1169, 1, 0
    %v1426 = vsel %vm1170, 1, 0
    %v1427 = vsel %vm1171, 1, 0
    %v1428 = vsel %vm1172, 1, 0
    %v1429 = vsel %vm1173, 1, 0
    %v1430 = vsel %vm1174, 1, 0
    %v1431 = vsel %vm1175, 1, 0
    %v1432 = vsel %vm1176, 1, 0
    %v1433 = vsel %vm1177, 1, 0
    %v1434 = vsel %vm1178, 1, 0
    %v1435 = vsel %vm1179, 1, 0
    %v1436 = vsel %vm1180, 1, 0
    %v1437 = vsel %vm1181, 1, 0
    %v1438 = vsel %vm1182, 1, 0
    %v1439 = vsel %vm1183, 1, 0
    %v1440 = vsel %vm1184, 1, 0
    %v1441 = vsel %vm1185, 1, 0
    %v1442 = vsel %vm1186, 1, 0
    %v1443 = vsel %vm1187, 1, 0
    %v1444 = vsel %vm1188, 1, 0
    %v1445 = vsel %vm1189, 1, 0
    %v1446 = vsel %vm1190, 1, 0
    %v1447 = vsel %vm1191, 1, 0
    %v1448 = vsel %vm1192, 1, 0
    %v1449 = vsel %vm1193, 1, 0
    %v1450 = vsel %vm1194, 1, 0
    %v1451 = vsel %vm1195, 1, 0
    %v1452 = vsel %vm1196, 1, 0
    %v1453 = vsel %vm1197, 1, 0
    %v1454 = vsel %vm1198, 1, 0
    %v1455 = vsel %vm1199, 1, 0
    %v1456 = vsel %vm1200, 1, 0
    %v1457 = vsel %vm1201, 1, 0
    %v1458 = vsel %vm1202, 1, 0
    %v1459 = vsel %vm1203, 1, 0
    %v1460 = vsel %vm1204, 1, 0
    %v1461 = vsel %vm1205, 1, 0
    %v1462 = vsel %vm1206, 1, 0
    %v1463 = vsel %vm1207, 1, 0
    %v1464 = vsel %vm1208, 1, 0
    %v1465 = vsel %vm1209, 1, 0
    %v1466 = vsel %vm1210, 1, 0
    %v1467 = vsel %vm1211, 1, 0
    %v1468 = vsel %vm1212, 1, 0
    %v1469 = vsel %vm1213, 1, 0
    %v1470 = vsel %vm1214, 1, 0
    %v1471 = vsel %vm1215, 1, 0
    %v1472 = vsel %vm1216, 1, 0
    %v1473 = vsel %vm1217, 1, 0
    %v1474 = vsel %vm1218, 1, 0
    %v1475 = vsel %vm1219, 1, 0
    %v1476 = vsel %vm1220, 1, 0
    %v1477 = vsel %vm1221, 1, 0
    %v1478 = vsel %vm1222, 1, 0
    %v1479 = vsel %vm1223, 1, 0
    %v1480 = vsel %vm1224, 1, 0
    %v1481 = vsel %vm1225, 1, 0
    %v1482 = vsel %vm1226, 1, 0
    %v1483 = vsel %vm1227, 1, 0
    %v1484 = vsel %vm1228, 1, 0
    %v1485 = vsel %vm1229, 1, 0
    %v1486 = vsel %vm1230, 1, 0
    %v1487 = vsel %vm1231, 1, 0
    %v1488 = vsel %vm1232, 1, 0
    %v1489 = vsel %vm1233, 1, 0
    %v1490 = vsel %vm1234, 1, 0
    %v1491 = vsel %vm1235, 1, 0
    %v1492 = vsel %vm1236, 1, 0
    %v1493 = vsel %vm1237, 1, 0
    %v1494 = vsel %vm1238, 1, 0
    %v1495 = vsel %vm1239, 1, 0
    %v1496 = vsel %vm1240, 1, 0
    %v1497 = vsel %vm1241, 1, 0
    %v1498 = vsel %vm1242, 1, 0
    %v1499 = vsel %vm1243, 1, 0
    %v1500 = vsel %vm1244, 1, 0
    %v1501 = vsel %vm1245, 1, 0
    %v1502 = vsel %vm1246, 1, 0
    %v1503 = vsel %vm1247, 1, 0
    %v1504 = vsel %vm1248, 1, 0
    %v1505 = vsel %vm1249, 1, 0
    %v1506 = vsel %vm1250, 1, 0
    %v1507 = vsel %vm1251, 1, 0
    %v1508 = vsel %vm1252, 1, 0
    %v1509 = vsel %vm1253, 1, 0
    %v1510 = vsel %vm1254, 1, 0
    %v1511 = vsel %vm1255, 1, 0
    %v1512 = vsel %vm1256, 1, 0
    %v1513 = vsel %vm1257, 1, 0
    %v1514 = vsel %vm1258, 1, 0
    %v1515 = vsel %vm1259, 1, 0
    %v1516 = vsel %vm1260, 1, 0
    %v1517 = vsel %vm1261, 1, 0
    %v1518 = vsel %vm1262, 1, 0
    %v1519 = vsel %vm1263, 1, 0
    %v1520 = vsel %vm1264, 1, 0
    %v1521 = vsel %vm1265, 1, 0
    %v1522 = vsel %vm1266, 1, 0
    %v1523 = vsel %vm1267, 1, 0
    %v1524 = vsel %vm1268, 1, 0
    %v1525 = vsel %vm1269, 1, 0
    %v1526 = vsel %vm1270, 1, 0
    %v1527 = vsel %vm1271, 1, 0
    %v1528 = vsel %vm1272, 1, 0
    %v1529 = vsel %vm1273, 1, 0
    %v1530 = vsel %vm1274, 1, 0
    %v1531 = vsel %vm1275, 1, 0
    %v1532 = vsel %vm1276, 1, 0
    %v1533 = vsel %vm1277, 1, 0
    %v1534 = vsel %vm1278, 1, 0
    %v1535 = vsel %vm1279, 1, 0
    %v1536 = vsel %vm1280, 1, 0
    %v1537 = vsel %vm1281, 1, 0
    %v1538 = vsel %vm1282, 1, 0
    %v1539 = vsel %vm1283, 1, 0
    %v1540 = vsel %vm1284, 1, 0
    %v1541 = vsel %vm1285, 1, 0
    %v1542 = vsel %vm1286, 1, 0
    %v1543 = vsel %vm1287, 1, 0
    %v1544 = vsel %vm1288, 1, 0
    %v1545 = vsel %vm1289, 1, 0
    %v1546 = vsel %vm1290, 1, 0
    %v1547 = vsel %vm1291, 1, 0
    %v1548 = vsel %vm1292, 1, 0
    %v1549 = vsel %vm1293, 1, 0
    %v1550 = vsel %vm1294, 1, 0
    %v1551 = vsel %vm1295, 1, 0
    %v1552 = vsel %vm1296, 1, 0
    %v1553 = vsel %vm1297, 1, 0
    %v1554 = vsel %vm1298, 1, 0
    %v1555 = vsel %vm1299, 1, 0
    %v1556 = vsel %vm1300, 1, 0
    %v1557 = vsel %vm1301, 1, 0
    %v1558 = vsel %vm1302, 1, 0
    %v1559 = vsel %vm1303, 1, 0
    %v1560 = vsel %vm1304, 1, 0
    %v1561 = vsel %vm1305, 1, 0
    %v1562 = vcvt.s32.f32 %v1306
    %v1563 = vcvt.s32.f32 %v1307
    %v1564 = vcvt.s32.f32 %v1308
    %v1565 = vcvt.s32.f32 %v1309
    %v1566 = vcvt.s32.f32 %v1310
    %v1567 = vcvt.s32.f32 %v1311
    %v1568 = vcvt.s32.f32 %v1312
    %v1569 = vcvt.s32.f32 %v1313
    %v1570 = vcvt.s32.f32 %v1314
    %v1571 = vcvt.s32.f32 %v1315
    %v1572 = vcvt.s32.f32 %v1316
    %v1573 = vcvt.s32.f32 %v1317
    %v1574 = vcvt.s32.f32 %v1318
    %v1575 = vcvt.s32.f32 %v1319
    %v1576 = vcvt.s32.f32 %v1320
    %v1577 = vcvt.s32.f32 %v1321
    %v1578 = vcvt.s32.f32 %v1322
    %v1579 = vcvt.s32.f32 %v1323
    %v1580 = vcvt.s32.f32 %v1324
    %v1581 = vcvt.s32.f32 %v1325
    %v1582 = vcvt.s32.f32 %v1326
    %v1583 = vcvt.s32.f32 %v1327
    %v1584 = vcvt.s32.f32 %v1328
    %v1585 = vcvt.s32.f32 %v1329
    %v1586 = vcvt.s32.f32 %v1330
    %v1587 = vcvt.s32.f32 %v1331
    %v1588 = vcvt.s32.f32 %v1332
    %v1589 = vcvt.s32.f32 %v1333
    %v1590 = vcvt.s32.f32 %v1334
    %v1591 = vcvt.s32.f32 %v1335
    %v1592 = vcvt.s32.f32 %v1336
    %v1593 = vcvt.s32.f32 %v1337
    %v1594 = vcvt.s32.f32 %v1338
    %v1595 = vcvt.s32.f32 %v1339
    %v1596 = vcvt.s32.f32 %v1340
    %v1597 = vcvt.s32.f32 %v1341
    %v1598 = vcvt.s32.f32 %v1342
    %v1599 = vcvt.s32.f32 %v1343
    %v1600 = vcvt.s32.f32 %v1344
    %v1601 = vcvt.s32.f32 %v1345
    %v1602 = vcvt.s32.f32 %v1346
    %v1603 = vcvt.s32.f32 %v1347
    %v1604 = vcvt.s32.f32 %v1348
    %v1605 = vcvt.s32.f32 %v1349
    %v1606 = vcvt.s32.f32 %v1350
    %v1607 = vcvt.s32.f32 %v1351
    %v1608 = vcvt.s32.f32 %v1352
    %v1609 = vcvt.s32.f32 %v1353
    %v1610 = vcvt.s32.f32 %v1354
    %v1611 = vcvt.s32.f32 %v1355
    %v1612 = vcvt.s32.f32 %v1356
    %v1613 = vcvt.s32.f32 %v1357
    %v1614 = vcvt.s32.f32 %v1358
    %v1615 = vcvt.s32.f32 %v1359
    %v1616 = vcvt.s32.f32 %v1360
    %v1617 = vcvt.s32.f32 %v1361
    %v1618 = vcvt.s32.f32 %v1362
    %v1619 = vcvt.s32.f32 %v1363
    %v1620 = vcvt.s32.f32 %v1364
    %v1621 = vcvt.s32.f32 %v1365
    %v1622 = vcvt.s32.f32 %v1366
    %v1623 = vcvt.s32.f32 %v1367
    %v1624 = vcvt.s32.f32 %v1368
    %v1625 = vcvt.s32.f32 %v1369
    %v1626 = vcvt.s32.f32 %v1370
    %v1627 = vcvt.s32.f32 %v1371
    %v1628 = vcvt.s32.f32 %v1372
    %v1629 = vcvt.s32.f32 %v1373
    %v1630 = vcvt.s32.f32 %v1374
    %v1631 = vcvt.s32.f32 %v1375
    %v1632 = vcvt.s32.f32 %v1376
    %v1633 = vcvt.s32.f32 %v1377
    %v1634 = vcvt.s32.f32 %v1378
    %v1635 = vcvt.s32.f32 %v1379
    %v1636 = vcvt.s32.f32 %v1380
    %v1637 = vcvt.s32.f32 %v1381
    %v1638 = vcvt.s32.f32 %v1382
    %v1639 = vcvt.s32.f32 %v1383
    %v1640 = vcvt.s32.f32 %v1384
    %v1641 = vcvt.s32.f32 %v1385
    %v1642 = vcvt.s32.f32 %v1386
    %v1643 = vcvt.s32.f32 %v1387
    %v1644 = vcvt.s32.f32 %v1388
    %v1645 = vcvt.s32.f32 %v1389
    %v1646 = vcvt.s32.f32 %v1390
    %v1647 = vcvt.s32.f32 %v1391
    %v1648 = vcvt.s32.f32 %v1392
    %v1649 = vcvt.s32.f32 %v1393
    %v1650 = vcvt.s32.f32 %v1394
    %v1651 = vcvt.s32.f32 %v1395
    %v1652 = vcvt.s32.f32 %v1396
    %v1653 = vcvt.s32.f32 %v1397
    %v1654 = vcvt.s32.f32 %v1398
    %v1655 = vcvt.s32.f32 %v1399
    %v1656 = vcvt.s32.f32 %v1400
    %v1657 = vcvt.s32.f32 %v1401
    %v1658 = vcvt.s32.f32 %v1402
    %v1659 = vcvt.s32.f32 %v1403
    %v1660 = vcvt.s32.f32 %v1404
    %v1661 = vcvt.s32.f32 %v1405
    %v1662 = vcvt.s32.f32 %v1406
    %v1663 = vcvt.s32.f32 %v1407
    %v1664 = vcvt.s32.f32 %v1408
    %v1665 = vcvt.s32.f32 %v1409
    %v1666 = vcvt.s32.f32 %v1410
    %v1667 = vcvt.s32.f32 %v1411
    %v1668 = vcvt.s32.f32 %v1412
    %v1669 = vcvt.s32.f32 %v1413
    %v1670 = vcvt.s32.f32 %v1414
    %v1671 = vcvt.s32.f32 %v1415
    %v1672 = vcvt.s32.f32 %v1416
    %v1673 = vcvt.s32.f32 %v1417
    %v1674 = vcvt.s32.f32 %v1418
    %v1675 = vcvt.s32.f32 %v1419
    %v1676 = vcvt.s32.f32 %v1420
    %v1677 = vcvt.s32.f32 %v1421
    %v1678 = vcvt.s32.f32 %v1422
    %v1679 = vcvt.s32.f32 %v1423
    %v1680 = vcvt.s32.f32 %v1424
    %v1681 = vcvt.s32.f32 %v1425
    %v1682 = vcvt.s32.f32 %v1426
    %v1683 = vcvt.s32.f32 %v1427
    %v1684 = vcvt.s32.f32 %v1428
    %v1685 = vcvt.s32.f32 %v1429
    %v1686 = vcvt.s32.f32 %v1430
    %v1687 = vcvt.s32.f32 %v1431
    %v1688 = vcvt.s32.f32 %v1432
    %v1689 = vcvt.s32.f32 %v1433
    %v1690 = vcvt.s32.f32 %v1434
    %v1691 = vcvt.s32.f32 %v1435
    %v1692 = vcvt.s32.f32 %v1436
    %v1693 = vcvt.s32.f32 %v1437
    %v1694 = vcvt.s32.f32 %v1438
    %v1695 = vcvt.s32.f32 %v1439
    %v1696 = vcvt.s32.f32 %v1440
    %v1697 = vcvt.s32.f32 %v1441
    %v1698 = vcvt.s32.f32 %v1442
    %v1699 = vcvt.s32.f32 %v1443
    %v1700 = vcvt.s32.f32 %v1444
    %v1701 = vcvt.s32.f32 %v1445
    %v1702 = vcvt.s32.f32 %v1446
    %v1703 = vcvt.s32.f32 %v1447
    %v1704 = vcvt.s32.f32 %v1448
    %v1705 = vcvt.s32.f32 %v1449
    %v1706 = vcvt.s32.f32 %v1450
    %v1707 = vcvt.s32.f32 %v1451
    %v1708 = vcvt.s32.f32 %v1452
    %v1709 = vcvt.s32.f32 %v1453
    %v1710 = vcvt.s32.f32 %v1454
    %v1711 = vcvt.s32.f32 %v1455
    %v1712 = vcvt.s32.f32 %v1456
    %v1713 = vcvt.s32.f32 %v1457
    %v1714 = vcvt.s32.f32 %v1458
    %v1715 = vcvt.s32.f32 %v1459
    %v1716 = vcvt.s32.f32 %v1460
    %v1717 = vcvt.s32.f32 %v1461
    %v1718 = vcvt.s32.f32 %v1462
    %v1719 = vcvt.s32.f32 %v1463
    %v1720 = vcvt.s32.f32 %v1464
    %v1721 = vcvt.s32.f32 %v1465
    %v1722 = vcvt.s32.f32 %v1466
    %v1723 = vcvt.s32.f32 %v1467
    %v1724 = vcvt.s32.f32 %v1468
    %v1725 = vcvt.s32.f32 %v1469
    %v1726 = vcvt.s32.f32 %v1470
    %v1727 = vcvt.s32.f32 %v1471
    %v1728 = vcvt.s32.f32 %v1472
    %v1729 = vcvt.s32.f32 %v1473
    %v1730 = vcvt.s32.f32 %v1474
    %v1731 = vcvt.s32.f32 %v1475
    %v1732 = vcvt.s32.f32 %v1476
    %v1733 = vcvt.s32.f32 %v1477
    %v1734 = vcvt.s32.f32 %v1478
    %v1735 = vcvt.s32.f32 %v1479
    %v1736 = vcvt.s32.f32 %v1480
    %v1737 = vcvt.s32.f32 %v1481
    %v1738 = vcvt.s32.f32 %v1482
    %v1739 = vcvt.s32.f32 %v1483
    %v1740 = vcvt.s32.f32 %v1484
    %v1741 = vcvt.s32.f32 %v1485
    %v1742 = vcvt.s32.f32 %v1486
    %v1743 = vcvt.s32.f32 %v1487
    %v1744 = vcvt.s32.f32 %v1488
    %v1745 = vcvt.s32.f32 %v1489
    %v1746 = vcvt.s32.f32 %v1490
    %v1747 = vcvt.s32.f32 %v1491
    %v1748 = vcvt.s32.f32 %v1492
    %v1749 = vcvt.s32.f32 %v1493
    %v1750 = vcvt.s32.f32 %v1494
    %v1751 = vcvt.s32.f32 %v1495
    %v1752 = vcvt.s32.f32 %v1496
    %v1753 = vcvt.s32.f32 %v1497
    %v1754 = vcvt.s32.f32 %v1498
    %v1755 = vcvt.s32.f32 %v1499
    %v1756 = vcvt.s32.f32 %v1500
    %v1757 = vcvt.s32.f32 %v1501
    %v1758 = vcvt.s32.f32 %v1502
    %v1759 = vcvt.s32.f32 %v1503
    %v1760 = vcvt.s32.f32 %v1504
    %v1761 = vcvt.s32.f32 %v1505
    %v1762 = vcvt.s32.f32 %v1506
    %v1763 = vcvt.s32.f32 %v1507
    %v1764 = vcvt.s32.f32 %v1508
    %v1765 = vcvt.s32.f32 %v1509
    %v1766 = vcvt.s32.f32 %v1510
    %v1767 = vcvt.s32.f32 %v1511
    %v1768 = vcvt.s32.f32 %v1512
    %v1769 = vcvt.s32.f32 %v1513
    %v1770 = vcvt.s32.f32 %v1514
    %v1771 = vcvt.s32.f32 %v1515
    %v1772 = vcvt.s32.f32 %v1516
    %v1773 = vcvt.s32.f32 %v1517
    %v1774 = vcvt.s32.f32 %v1518
    %v1775 = vcvt.s32.f32 %v1519
    %v1776 = vcvt.s32.f32 %v1520
    %v1777 = vcvt.s32.f32 %v1521
    %v1778 = vcvt.s32.f32 %v1522
    %v1779 = vcvt.s32.f32 %v1523
    %v1780 = vcvt.s32.f32 %v1524
    %v1781 = vcvt.s32.f32 %v1525
    %v1782 = vcvt.s32.f32 %v1526
    %v1783 = vcvt.s32.f32 %v1527
    %v1784 = vcvt.s32.f32 %v1528
    %v1785 = vcvt.s32.f32 %v1529
    %v1786 = vcvt.s32.f32 %v1530
    %v1787 = vcvt.s32.f32 %v1531
    %v1788 = vcvt.s32.f32 %v1532
    %v1789 = vcvt.s32.f32 %v1533
    %v1790 = vcvt.s32.f32 %v1534
    %v1791 = vcvt.s32.f32 %v1535
    %v1792 = vcvt.s32.f32 %v1536
    %v1793 = vcvt.s32.f32 %v1537
    %v1794 = vcvt.s32.f32 %v1538
    %v1795 = vcvt.s32.f32 %v1539
    %v1796 = vcvt.s32.f32 %v1540
    %v1797 = vcvt.s32.f32 %v1541
    %v1798 = vcvt.s32.f32 %v1542
    %v1799 = vcvt.s32.f32 %v1543
    %v1800 = vcvt.s32.f32 %v1544
    %v1801 = vcvt.s32.f32 %v1545
    %v1802 = vcvt.s32.f32 %v1546
    %v1803 = vcvt.s32.f32 %v1547
    %v1804 = vcvt.s32.f32 %v1548
    %v1805 = vcvt.s32.f32 %v1549
    %v1806 = vcvt.s32.f32 %v1550
    %v1807 = vcvt.s32.f32 %v1551
    %v1808 = vcvt.s32.f32 %v1552
    %v1809 = vcvt.s32.f32 %v1553
    %v1810 = vcvt.s32.f32 %v1554
    %v1811 = vcvt.s32.f32 %v1555
    %v1812 = vcvt.s32.f32 %v1556
    %v1813 = vcvt.s32.f32 %v1557
    %v1814 = vcvt.s32.f32 %v1558
    %v1815 = vcvt.s32.f32 %v1559
    %v1816 = vcvt.s32.f32 %v1560
    %v1817 = vcvt.s32.f32 %v1561
    %v1818 = vld [vmem:[%s1] sm:$0xff]
    %v1819 = vld [vmem:[%s1 + $0x8] sm:$0xff]
    %v1820 = vld [vmem:[%s1 + $0x10] sm:$0xff]
    %v1821 = vld [vmem:[%s1 + $0x18] sm:$0x3f]
    %v1822 = vld [vmem:[%s3] sm:$0x1]
    %v1824 = vperm.slane %v1822, 0
    %vm1826 = vcmask 244736
    %v1828 = vsel %vm1826, %v1562, 0
    %v1831 = vsel %vm1826, %v1563, 0
    %v1834 = vsel %vm1826, %v1564, 0
    %v1837 = vsel %vm1826, %v1565, 0
    %v1840 = vsel %vm1826, %v1566, 0
    %v1843 = vsel %vm1826, %v1567, 0
    %v1846 = vsel %vm1826, %v1568, 0
    %v1849 = vsel %vm1826, %v1569, 0
    %v1852 = vsel %vm1826, %v1570, 0
    %v1855 = vsel %vm1826, %v1571, 0
    %v1858 = vsel %vm1826, %v1572, 0
    %v1861 = vsel %vm1826, %v1573, 0
    %v1864 = vsel %vm1826, %v1574, 0
    %v1867 = vsel %vm1826, %v1575, 0
    %v1870 = vsel %vm1826, %v1576, 0
    %v1873 = vsel %vm1826, %v1577, 0
    %v1876 = vsel %vm1826, %v1578, 0
    %v1879 = vsel %vm1826, %v1579, 0
    %v1882 = vsel %vm1826, %v1580, 0
    %v1885 = vsel %vm1826, %v1581, 0
    %v1888 = vsel %vm1826, %v1582, 0
    %v1891 = vsel %vm1826, %v1583, 0
    %v1894 = vsel %vm1826, %v1584, 0
    %v1897 = vsel %vm1826, %v1585, 0
    %v1900 = vsel %vm1826, %v1586, 0
    %v1903 = vsel %vm1826, %v1587, 0
    %v1906 = vsel %vm1826, %v1588, 0
    %v1909 = vsel %vm1826, %v1589, 0
    %v1912 = vsel %vm1826, %v1590, 0
    %v1915 = vsel %vm1826, %v1591, 0
    %v1918 = vsel %vm1826, %v1592, 0
    %v1921 = vsel %vm1826, %v1593, 0
    %v1924 = vsel %vm1826, %v1594, 0
    %v1927 = vsel %vm1826, %v1595, 0
    %v1930 = vsel %vm1826, %v1596, 0
    %v1933 = vsel %vm1826, %v1597, 0
    %v1936 = vsel %vm1826, %v1598, 0
    %v1939 = vsel %vm1826, %v1599, 0
    %v1942 = vsel %vm1826, %v1600, 0
    %v1945 = vsel %vm1826, %v1601, 0
    %v1948 = vsel %vm1826, %v1602, 0
    %v1951 = vsel %vm1826, %v1603, 0
    %v1954 = vsel %vm1826, %v1604, 0
    %v1957 = vsel %vm1826, %v1605, 0
    %v1960 = vsel %vm1826, %v1606, 0
    %v1963 = vsel %vm1826, %v1607, 0
    %v1966 = vsel %vm1826, %v1608, 0
    %v1969 = vsel %vm1826, %v1609, 0
    %v1972 = vsel %vm1826, %v1610, 0
    %v1975 = vsel %vm1826, %v1611, 0
    %v1978 = vsel %vm1826, %v1612, 0
    %v1981 = vsel %vm1826, %v1613, 0
    %v1984 = vsel %vm1826, %v1614, 0
    %v1987 = vsel %vm1826, %v1615, 0
    %v1990 = vsel %vm1826, %v1616, 0
    %v1993 = vsel %vm1826, %v1617, 0
    %v1996 = vsel %vm1826, %v1618, 0
    %v1999 = vsel %vm1826, %v1619, 0
    %v2002 = vsel %vm1826, %v1620, 0
    %v2005 = vsel %vm1826, %v1621, 0
    %v2008 = vsel %vm1826, %v1622, 0
    %v2011 = vsel %vm1826, %v1623, 0
    %v2014 = vsel %vm1826, %v1624, 0
    %v2017 = vsel %vm1826, %v1625, 0
    %v2020 = vsel %vm1826, %v1626, 0
    %v2023 = vsel %vm1826, %v1627, 0
    %v2026 = vsel %vm1826, %v1628, 0
    %v2029 = vsel %vm1826, %v1629, 0
    %v2032 = vsel %vm1826, %v1630, 0
    %v2035 = vsel %vm1826, %v1631, 0
    %v2038 = vsel %vm1826, %v1632, 0
    %v2041 = vsel %vm1826, %v1633, 0
    %v2044 = vsel %vm1826, %v1634, 0
    %v2047 = vsel %vm1826, %v1635, 0
    %v2050 = vsel %vm1826, %v1636, 0
    %v2053 = vsel %vm1826, %v1637, 0
    %v2056 = vsel %vm1826, %v1638, 0
    %v2059 = vsel %vm1826, %v1639, 0
    %v2062 = vsel %vm1826, %v1640, 0
    %v2065 = vsel %vm1826, %v1641, 0
    %v2068 = vsel %vm1826, %v1642, 0
    %v2071 = vsel %vm1826, %v1643, 0
    %v2074 = vsel %vm1826, %v1644, 0
    %v2077 = vsel %vm1826, %v1645, 0
    %v2080 = vsel %vm1826, %v1646, 0
    %v2083 = vsel %vm1826, %v1647, 0
    %v2086 = vsel %vm1826, %v1648, 0
    %v2089 = vsel %vm1826, %v1649, 0
    %v2092 = vsel %vm1826, %v1650, 0
    %v2095 = vsel %vm1826, %v1651, 0
    %v2098 = vsel %vm1826, %v1652, 0
    %v2101 = vsel %vm1826, %v1653, 0
    %v2104 = vsel %vm1826, %v1654, 0
    %v2107 = vsel %vm1826, %v1655, 0
    %v2110 = vsel %vm1826, %v1656, 0
    %v2113 = vsel %vm1826, %v1657, 0
    %v2116 = vsel %vm1826, %v1658, 0
    %v2119 = vsel %vm1826, %v1659, 0
    %v2122 = vsel %vm1826, %v1660, 0
    %v2125 = vsel %vm1826, %v1661, 0
    %v2128 = vsel %vm1826, %v1662, 0
    %v2131 = vsel %vm1826, %v1663, 0
    %v2134 = vsel %vm1826, %v1664, 0
    %v2137 = vsel %vm1826, %v1665, 0
    %v2140 = vsel %vm1826, %v1666, 0
    %v2143 = vsel %vm1826, %v1667, 0
    %v2146 = vsel %vm1826, %v1668, 0
    %v2149 = vsel %vm1826, %v1669, 0
    %v2152 = vsel %vm1826, %v1670, 0
    %v2155 = vsel %vm1826, %v1671, 0
    %v2158 = vsel %vm1826, %v1672, 0
    %v2161 = vsel %vm1826, %v1673, 0
    %v2164 = vsel %vm1826, %v1674, 0
    %v2167 = vsel %vm1826, %v1675, 0
    %v2170 = vsel %vm1826, %v1676, 0
    %v2173 = vsel %vm1826, %v1677, 0
    %v2176 = vsel %vm1826, %v1678, 0
    %v2179 = vsel %vm1826, %v1679, 0
    %v2182 = vsel %vm1826, %v1680, 0
    %v2185 = vsel %vm1826, %v1681, 0
    %v2188 = vsel %vm1826, %v1682, 0
    %v2191 = vsel %vm1826, %v1683, 0
    %v2194 = vsel %vm1826, %v1684, 0
    %v2197 = vsel %vm1826, %v1685, 0
    %v2200 = vsel %vm1826, %v1686, 0
    %v2203 = vsel %vm1826, %v1687, 0
    %v2206 = vsel %vm1826, %v1688, 0
    %v2209 = vsel %vm1826, %v1689, 0
    %v2212 = vsel %vm1826, %v1690, 0
    %v2215 = vsel %vm1826, %v1691, 0
    %v2218 = vsel %vm1826, %v1692, 0
    %v2221 = vsel %vm1826, %v1693, 0
    %v2224 = vsel %vm1826, %v1694, 0
    %v2227 = vsel %vm1826, %v1695, 0
    %v2230 = vsel %vm1826, %v1696, 0
    %v2233 = vsel %vm1826, %v1697, 0
    %v2236 = vsel %vm1826, %v1698, 0
    %v2239 = vsel %vm1826, %v1699, 0
    %v2242 = vsel %vm1826, %v1700, 0
    %v2245 = vsel %vm1826, %v1701, 0
    %v2248 = vsel %vm1826, %v1702, 0
    %v2251 = vsel %vm1826, %v1703, 0
    %v2254 = vsel %vm1826, %v1704, 0
    %v2257 = vsel %vm1826, %v1705, 0
    %v2260 = vsel %vm1826, %v1706, 0
    %v2263 = vsel %vm1826, %v1707, 0
    %v2266 = vsel %vm1826, %v1708, 0
    %v2269 = vsel %vm1826, %v1709, 0
    %v2272 = vsel %vm1826, %v1710, 0
    %v2275 = vsel %vm1826, %v1711, 0
    %v2278 = vsel %vm1826, %v1712, 0
    %v2281 = vsel %vm1826, %v1713, 0
    %v2284 = vsel %vm1826, %v1714, 0
    %v2287 = vsel %vm1826, %v1715, 0
    %v2290 = vsel %vm1826, %v1716, 0
    %v2293 = vsel %vm1826, %v1717, 0
    %v2296 = vsel %vm1826, %v1718, 0
    %v2299 = vsel %vm1826, %v1719, 0
    %v2302 = vsel %vm1826, %v1720, 0
    %v2305 = vsel %vm1826, %v1721, 0
    %v2308 = vsel %vm1826, %v1722, 0
    %v2311 = vsel %vm1826, %v1723, 0
    %v2314 = vsel %vm1826, %v1724, 0
    %v2317 = vsel %vm1826, %v1725, 0
    %v2320 = vsel %vm1826, %v1726, 0
    %v2323 = vsel %vm1826, %v1727, 0
    %v2326 = vsel %vm1826, %v1728, 0
    %v2329 = vsel %vm1826, %v1729, 0
    %v2332 = vsel %vm1826, %v1730, 0
    %v2335 = vsel %vm1826, %v1731, 0
    %v2338 = vsel %vm1826, %v1732, 0
    %v2341 = vsel %vm1826, %v1733, 0
    %v2344 = vsel %vm1826, %v1734, 0
    %v2347 = vsel %vm1826, %v1735, 0
    %v2350 = vsel %vm1826, %v1736, 0
    %v2353 = vsel %vm1826, %v1737, 0
    %v2356 = vsel %vm1826, %v1738, 0
    %v2359 = vsel %vm1826, %v1739, 0
    %v2362 = vsel %vm1826, %v1740, 0
    %v2365 = vsel %vm1826, %v1741, 0
    %v2368 = vsel %vm1826, %v1742, 0
    %v2371 = vsel %vm1826, %v1743, 0
    %v2374 = vsel %vm1826, %v1744, 0
    %v2377 = vsel %vm1826, %v1745, 0
    %v2380 = vsel %vm1826, %v1746, 0
    %v2383 = vsel %vm1826, %v1747, 0
    %v2386 = vsel %vm1826, %v1748, 0
    %v2389 = vsel %vm1826, %v1749, 0
    %v2392 = vsel %vm1826, %v1750, 0
    %v2395 = vsel %vm1826, %v1751, 0
    %v2398 = vsel %vm1826, %v1752, 0
    %v2401 = vsel %vm1826, %v1753, 0
    %v2404 = vsel %vm1826, %v1754, 0
    %v2407 = vsel %vm1826, %v1755, 0
    %v2410 = vsel %vm1826, %v1756, 0
    %v2413 = vsel %vm1826, %v1757, 0
    %v2416 = vsel %vm1826, %v1758, 0
    %v2419 = vsel %vm1826, %v1759, 0
    %v2422 = vsel %vm1826, %v1760, 0
    %v2425 = vsel %vm1826, %v1761, 0
    %v2428 = vsel %vm1826, %v1762, 0
    %v2431 = vsel %vm1826, %v1763, 0
    %v2434 = vsel %vm1826, %v1764, 0
    %v2437 = vsel %vm1826, %v1765, 0
    %v2440 = vsel %vm1826, %v1766, 0
    %v2443 = vsel %vm1826, %v1767, 0
    %v2446 = vsel %vm1826, %v1768, 0
    %v2449 = vsel %vm1826, %v1769, 0
    %v2452 = vsel %vm1826, %v1770, 0
    %v2455 = vsel %vm1826, %v1771, 0
    %v2458 = vsel %vm1826, %v1772, 0
    %v2461 = vsel %vm1826, %v1773, 0
    %v2464 = vsel %vm1826, %v1774, 0
    %v2467 = vsel %vm1826, %v1775, 0
    %v2470 = vsel %vm1826, %v1776, 0
    %v2473 = vsel %vm1826, %v1777, 0
    %v2476 = vsel %vm1826, %v1778, 0
    %v2479 = vsel %vm1826, %v1779, 0
    %v2482 = vsel %vm1826, %v1780, 0
    %v2485 = vsel %vm1826, %v1781, 0
    %v2488 = vsel %vm1826, %v1782, 0
    %v2491 = vsel %vm1826, %v1783, 0
    %v2494 = vsel %vm1826, %v1784, 0
    %v2497 = vsel %vm1826, %v1785, 0
    %v2500 = vsel %vm1826, %v1786, 0
    %v2503 = vsel %vm1826, %v1787, 0
    %v2506 = vsel %vm1826, %v1788, 0
    %v2509 = vsel %vm1826, %v1789, 0
    %v2512 = vsel %vm1826, %v1790, 0
    %v2515 = vsel %vm1826, %v1791, 0
    %v2518 = vsel %vm1826, %v1792, 0
    %v2521 = vsel %vm1826, %v1793, 0
    %v2524 = vsel %vm1826, %v1794, 0
    %v2527 = vsel %vm1826, %v1795, 0
    %v2530 = vsel %vm1826, %v1796, 0
    %v2533 = vsel %vm1826, %v1797, 0
    %v2536 = vsel %vm1826, %v1798, 0
    %v2539 = vsel %vm1826, %v1799, 0
    %v2542 = vsel %vm1826, %v1800, 0
    %v2545 = vsel %vm1826, %v1801, 0
    %v2548 = vsel %vm1826, %v1802, 0
    %v2551 = vsel %vm1826, %v1803, 0
    %v2554 = vsel %vm1826, %v1804, 0
    %v2557 = vsel %vm1826, %v1805, 0
    %v2560 = vsel %vm1826, %v1806, 0
    %v2563 = vsel %vm1826, %v1807, 0
    %v2566 = vsel %vm1826, %v1808, 0
    %v2569 = vsel %vm1826, %v1809, 0
    %v2572 = vsel %vm1826, %v1810, 0
    %v2575 = vsel %vm1826, %v1811, 0
    %v2578 = vsel %vm1826, %v1812, 0
    %v2581 = vsel %vm1826, %v1813, 0
    %v2584 = vsel %vm1826, %v1814, 0
    %v2587 = vsel %vm1826, %v1815, 0
    %v2590 = vsel %vm1826, %v1816, 0
    %v2593 = vsel %vm1826, %v1817, 0
    %vm2595 = vcmask 1045504
    %v2597 = vsel %vm2595, %v1821, 0
    %2599 = vmatpush.msra.mxu0 0.0
    %2600 = vmatpush.msra.mxu0 0.0
    %2601 = vmatpush.msra.mxu0 0.0
    %2602 = vmatpush.msra.mxu0 0.0
    %2603 = vmatpush.msra.mxu0 0.0
    %2604 = vmatpush.msra.mxu0 0.0
    %2605 = vmatpush.msra.mxu0 0.0
    %2606 = vmatpush.msra.mxu0 0.0
    %2607 = vmatpush.msra.mxu0 0.0
    %2608 = vmatpush.msra.mxu0 0.0
    %2609 = vmatpush.msra.mxu0 0.0
    %2610 = vmatpush.msra.mxu0 0.0
    %2611 = vmatpush.msra.mxu0 %v2597
    %2612 = vmatpush.msra.mxu0 %v1820
    %2613 = vmatpush.msra.mxu0 %v1819
    %2614 = vmatpush.msra.mxu0 %v1818
    %2615 = vmatmul.f32.gmra.mxu0 %v1828
    %v2616 = vpop.f32.mrf.mxu0
    %v2617 = vadd.f32 %v1824, %v2616
    %2618 = vmatmul.f32.gmra.mxu0 %v1831
    %v2619 = vpop.f32.mrf.mxu0
    %v2620 = vadd.f32 %v1824, %v2619
    %2621 = vmatmul.f32.gmra.mxu0 %v1834
    %v2622 = vpop.f32.mrf.mxu0
    %v2623 = vadd.f32 %v1824, %v2622
    %2624 = vmatmul.f32.gmra.mxu0 %v1837
    %v2625 = vpop.f32.mrf.mxu0
    %v2626 = vadd.f32 %v1824, %v2625
    %2627 = vmatmul.f32.gmra.mxu0 %v1840
    %v2628 = vpop.f32.mrf.mxu0
    %v2629 = vadd.f32 %v1824, %v2628
    %2630 = vmatmul.f32.gmra.mxu0 %v1843
    %v2631 = vpop.f32.mrf.mxu0
    %v2632 = vadd.f32 %v1824, %v2631
    %2633 = vmatmul.f32.gmra.mxu0 %v1846
    %v2634 = vpop.f32.mrf.mxu0
    %v2635 = vadd.f32 %v1824, %v2634
    %2636 = vmatmul.f32.gmra.mxu0 %v1849
    %v2637 = vpop.f32.mrf.mxu0
    %v2638 = vadd.f32 %v1824, %v2637
    %2639 = vmatmul.f32.gmra.mxu0 %v1852
    %v2640 = vpop.f32.mrf.mxu0
    %v2641 = vadd.f32 %v1824, %v2640
    %2642 = vmatmul.f32.gmra.mxu0 %v1855
    %v2643 = vpop.f32.mrf.mxu0
    %v2644 = vadd.f32 %v1824, %v2643
    %2645 = vmatmul.f32.gmra.mxu0 %v1858
    %v2646 = vpop.f32.mrf.mxu0
    %v2647 = vadd.f32 %v1824, %v2646
    %2648 = vmatmul.f32.gmra.mxu0 %v1861
    %v2649 = vpop.f32.mrf.mxu0
    %v2650 = vadd.f32 %v1824, %v2649
    %2651 = vmatmul.f32.gmra.mxu0 %v1864
    %v2652 = vpop.f32.mrf.mxu0
    %v2653 = vadd.f32 %v1824, %v2652
    %2654 = vmatmul.f32.gmra.mxu0 %v1867
    %v2655 = vpop.f32.mrf.mxu0
    %v2656 = vadd.f32 %v1824, %v2655
    %2657 = vmatmul.f32.gmra.mxu0 %v1870
    %v2658 = vpop.f32.mrf.mxu0
    %v2659 = vadd.f32 %v1824, %v2658
    %2660 = vmatmul.f32.gmra.mxu0 %v1873
    %v2661 = vpop.f32.mrf.mxu0
    %v2662 = vadd.f32 %v1824, %v2661
    %2663 = vmatmul.f32.gmra.mxu0 %v1876
    %v2664 = vpop.f32.mrf.mxu0
    %v2665 = vadd.f32 %v1824, %v2664
    %2666 = vmatmul.f32.gmra.mxu0 %v1879
    %v2667 = vpop.f32.mrf.mxu0
    %v2668 = vadd.f32 %v1824, %v2667
    %2669 = vmatmul.f32.gmra.mxu0 %v1882
    %v2670 = vpop.f32.mrf.mxu0
    %v2671 = vadd.f32 %v1824, %v2670
    %2672 = vmatmul.f32.gmra.mxu0 %v1885
    %v2673 = vpop.f32.mrf.mxu0
    %v2674 = vadd.f32 %v1824, %v2673
    %2675 = vmatmul.f32.gmra.mxu0 %v1888
    %v2676 = vpop.f32.mrf.mxu0
    %v2677 = vadd.f32 %v1824, %v2676
    %2678 = vmatmul.f32.gmra.mxu0 %v1891
    %v2679 = vpop.f32.mrf.mxu0
    %v2680 = vadd.f32 %v1824, %v2679
    %2681 = vmatmul.f32.gmra.mxu0 %v1894
    %v2682 = vpop.f32.mrf.mxu0
    %v2683 = vadd.f32 %v1824, %v2682
    %2684 = vmatmul.f32.gmra.mxu0 %v1897
    %v2685 = vpop.f32.mrf.mxu0
    %v2686 = vadd.f32 %v1824, %v2685
    %2687 = vmatmul.f32.gmra.mxu0 %v1900
    %v2688 = vpop.f32.mrf.mxu0
    %v2689 = vadd.f32 %v1824, %v2688
    %2690 = vmatmul.f32.gmra.mxu0 %v1903
    %v2691 = vpop.f32.mrf.mxu0
    %v2692 = vadd.f32 %v1824, %v2691
    %2693 = vmatmul.f32.gmra.mxu0 %v1906
    %v2694 = vpop.f32.mrf.mxu0
    %v2695 = vadd.f32 %v1824, %v2694
    %2696 = vmatmul.f32.gmra.mxu0 %v1909
    %v2697 = vpop.f32.mrf.mxu0
    %v2698 = vadd.f32 %v1824, %v2697
    %2699 = vmatmul.f32.gmra.mxu0 %v1912
    %v2700 = vpop.f32.mrf.mxu0
    %v2701 = vadd.f32 %v1824, %v2700
    %2702 = vmatmul.f32.gmra.mxu0 %v1915
    %v2703 = vpop.f32.mrf.mxu0
    %v2704 = vadd.f32 %v1824, %v2703
    %2705 = vmatmul.f32.gmra.mxu0 %v1918
    %v2706 = vpop.f32.mrf.mxu0
    %v2707 = vadd.f32 %v1824, %v2706
    %2708 = vmatmul.f32.gmra.mxu0 %v1921
    %v2709 = vpop.f32.mrf.mxu0
    %v2710 = vadd.f32 %v1824, %v2709
    %2711 = vmatmul.f32.gmra.mxu0 %v1924
    %v2712 = vpop.f32.mrf.mxu0
    %v2713 = vadd.f32 %v1824, %v2712
    %2714 = vmatmul.f32.gmra.mxu0 %v1927
    %v2715 = vpop.f32.mrf.mxu0
    %v2716 = vadd.f32 %v1824, %v2715
    %2717 = vmatmul.f32.gmra.mxu0 %v1930
    %v2718 = vpop.f32.mrf.mxu0
    %v2719 = vadd.f32 %v1824, %v2718
    %2720 = vmatmul.f32.gmra.mxu0 %v1933
    %v2721 = vpop.f32.mrf.mxu0
    %v2722 = vadd.f32 %v1824, %v2721
    %2723 = vmatmul.f32.gmra.mxu0 %v1936
    %v2724 = vpop.f32.mrf.mxu0
    %v2725 = vadd.f32 %v1824, %v2724
    %2726 = vmatmul.f32.gmra.mxu0 %v1939
    %v2727 = vpop.f32.mrf.mxu0
    %v2728 = vadd.f32 %v1824, %v2727
    %2729 = vmatmul.f32.gmra.mxu0 %v1942
    %v2730 = vpop.f32.mrf.mxu0
    %v2731 = vadd.f32 %v1824, %v2730
    %2732 = vmatmul.f32.gmra.mxu0 %v1945
    %v2733 = vpop.f32.mrf.mxu0
    %v2734 = vadd.f32 %v1824, %v2733
    %2735 = vmatmul.f32.gmra.mxu0 %v1948
    %v2736 = vpop.f32.mrf.mxu0
    %v2737 = vadd.f32 %v1824, %v2736
    %2738 = vmatmul.f32.gmra.mxu0 %v1951
    %v2739 = vpop.f32.mrf.mxu0
    %v2740 = vadd.f32 %v1824, %v2739
    %2741 = vmatmul.f32.gmra.mxu0 %v1954
    %v2742 = vpop.f32.mrf.mxu0
    %v2743 = vadd.f32 %v1824, %v2742
    %2744 = vmatmul.f32.gmra.mxu0 %v1957
    %v2745 = vpop.f32.mrf.mxu0
    %v2746 = vadd.f32 %v1824, %v2745
    %2747 = vmatmul.f32.gmra.mxu0 %v1960
    %v2748 = vpop.f32.mrf.mxu0
    %v2749 = vadd.f32 %v1824, %v2748
    %2750 = vmatmul.f32.gmra.mxu0 %v1963
    %v2751 = vpop.f32.mrf.mxu0
    %v2752 = vadd.f32 %v1824, %v2751
    %2753 = vmatmul.f32.gmra.mxu0 %v1966
    %v2754 = vpop.f32.mrf.mxu0
    %v2755 = vadd.f32 %v1824, %v2754
    %2756 = vmatmul.f32.gmra.mxu0 %v1969
    %v2757 = vpop.f32.mrf.mxu0
    %v2758 = vadd.f32 %v1824, %v2757
    %2759 = vmatmul.f32.gmra.mxu0 %v1972
    %v2760 = vpop.f32.mrf.mxu0
    %v2761 = vadd.f32 %v1824, %v2760
    %2762 = vmatmul.f32.gmra.mxu0 %v1975
    %v2763 = vpop.f32.mrf.mxu0
    %v2764 = vadd.f32 %v1824, %v2763
    %2765 = vmatmul.f32.gmra.mxu0 %v1978
    %v2766 = vpop.f32.mrf.mxu0
    %v2767 = vadd.f32 %v1824, %v2766
    %2768 = vmatmul.f32.gmra.mxu0 %v1981
    %v2769 = vpop.f32.mrf.mxu0
    %v2770 = vadd.f32 %v1824, %v2769
    %2771 = vmatmul.f32.gmra.mxu0 %v1984
    %v2772 = vpop.f32.mrf.mxu0
    %v2773 = vadd.f32 %v1824, %v2772
    %2774 = vmatmul.f32.gmra.mxu0 %v1987
    %v2775 = vpop.f32.mrf.mxu0
    %v2776 = vadd.f32 %v1824, %v2775
    %2777 = vmatmul.f32.gmra.mxu0 %v1990
    %v2778 = vpop.f32.mrf.mxu0
    %v2779 = vadd.f32 %v1824, %v2778
    %2780 = vmatmul.f32.gmra.mxu0 %v1993
    %v2781 = vpop.f32.mrf.mxu0
    %v2782 = vadd.f32 %v1824, %v2781
    %2783 = vmatmul.f32.gmra.mxu0 %v1996
    %v2784 = vpop.f32.mrf.mxu0
    %v2785 = vadd.f32 %v1824, %v2784
    %2786 = vmatmul.f32.gmra.mxu0 %v1999
    %v2787 = vpop.f32.mrf.mxu0
    %v2788 = vadd.f32 %v1824, %v2787
    %2789 = vmatmul.f32.gmra.mxu0 %v2002
    %v2790 = vpop.f32.mrf.mxu0
    %v2791 = vadd.f32 %v1824, %v2790
    %2792 = vmatmul.f32.gmra.mxu0 %v2005
    %v2793 = vpop.f32.mrf.mxu0
    %v2794 = vadd.f32 %v1824, %v2793
    %2795 = vmatmul.f32.gmra.mxu0 %v2008
    %v2796 = vpop.f32.mrf.mxu0
    %v2797 = vadd.f32 %v1824, %v2796
    %2798 = vmatmul.f32.gmra.mxu0 %v2011
    %v2799 = vpop.f32.mrf.mxu0
    %v2800 = vadd.f32 %v1824, %v2799
    %2801 = vmatmul.f32.gmra.mxu0 %v2014
    %v2802 = vpop.f32.mrf.mxu0
    %v2803 = vadd.f32 %v1824, %v2802
    %2804 = vmatmul.f32.gmra.mxu0 %v2017
    %v2805 = vpop.f32.mrf.mxu0
    %v2806 = vadd.f32 %v1824, %v2805
    %2807 = vmatmul.f32.gmra.mxu0 %v2020
    %v2808 = vpop.f32.mrf.mxu0
    %v2809 = vadd.f32 %v1824, %v2808
    %2810 = vmatmul.f32.gmra.mxu0 %v2023
    %v2811 = vpop.f32.mrf.mxu0
    %v2812 = vadd.f32 %v1824, %v2811
    %2813 = vmatmul.f32.gmra.mxu0 %v2026
    %v2814 = vpop.f32.mrf.mxu0
    %v2815 = vadd.f32 %v1824, %v2814
    %2816 = vmatmul.f32.gmra.mxu0 %v2029
    %v2817 = vpop.f32.mrf.mxu0
    %v2818 = vadd.f32 %v1824, %v2817
    %2819 = vmatmul.f32.gmra.mxu0 %v2032
    %v2820 = vpop.f32.mrf.mxu0
    %v2821 = vadd.f32 %v1824, %v2820
    %2822 = vmatmul.f32.gmra.mxu0 %v2035
    %v2823 = vpop.f32.mrf.mxu0
    %v2824 = vadd.f32 %v1824, %v2823
    %2825 = vmatmul.f32.gmra.mxu0 %v2038
    %v2826 = vpop.f32.mrf.mxu0
    %v2827 = vadd.f32 %v1824, %v2826
    %2828 = vmatmul.f32.gmra.mxu0 %v2041
    %v2829 = vpop.f32.mrf.mxu0
    %v2830 = vadd.f32 %v1824, %v2829
    %2831 = vmatmul.f32.gmra.mxu0 %v2044
    %v2832 = vpop.f32.mrf.mxu0
    %v2833 = vadd.f32 %v1824, %v2832
    %2834 = vmatmul.f32.gmra.mxu0 %v2047
    %v2835 = vpop.f32.mrf.mxu0
    %v2836 = vadd.f32 %v1824, %v2835
    %2837 = vmatmul.f32.gmra.mxu0 %v2050
    %v2838 = vpop.f32.mrf.mxu0
    %v2839 = vadd.f32 %v1824, %v2838
    %2840 = vmatmul.f32.gmra.mxu0 %v2053
    %v2841 = vpop.f32.mrf.mxu0
    %v2842 = vadd.f32 %v1824, %v2841
    %2843 = vmatmul.f32.gmra.mxu0 %v2056
    %v2844 = vpop.f32.mrf.mxu0
    %v2845 = vadd.f32 %v1824, %v2844
    %2846 = vmatmul.f32.gmra.mxu0 %v2059
    %v2847 = vpop.f32.mrf.mxu0
    %v2848 = vadd.f32 %v1824, %v2847
    %2849 = vmatmul.f32.gmra.mxu0 %v2062
    %v2850 = vpop.f32.mrf.mxu0
    %v2851 = vadd.f32 %v1824, %v2850
    %2852 = vmatmul.f32.gmra.mxu0 %v2065
    %v2853 = vpop.f32.mrf.mxu0
    %v2854 = vadd.f32 %v1824, %v2853
    %2855 = vmatmul.f32.gmra.mxu0 %v2068
    %v2856 = vpop.f32.mrf.mxu0
    %v2857 = vadd.f32 %v1824, %v2856
    %2858 = vmatmul.f32.gmra.mxu0 %v2071
    %v2859 = vpop.f32.mrf.mxu0
    %v2860 = vadd.f32 %v1824, %v2859
    %2861 = vmatmul.f32.gmra.mxu0 %v2074
    %v2862 = vpop.f32.mrf.mxu0
    %v2863 = vadd.f32 %v1824, %v2862
    %2864 = vmatmul.f32.gmra.mxu0 %v2077
    %v2865 = vpop.f32.mrf.mxu0
    %v2866 = vadd.f32 %v1824, %v2865
    %2867 = vmatmul.f32.gmra.mxu0 %v2080
    %v2868 = vpop.f32.mrf.mxu0
    %v2869 = vadd.f32 %v1824, %v2868
    %2870 = vmatmul.f32.gmra.mxu0 %v2083
    %v2871 = vpop.f32.mrf.mxu0
    %v2872 = vadd.f32 %v1824, %v2871
    %2873 = vmatmul.f32.gmra.mxu0 %v2086
    %v2874 = vpop.f32.mrf.mxu0
    %v2875 = vadd.f32 %v1824, %v2874
    %2876 = vmatmul.f32.gmra.mxu0 %v2089
    %v2877 = vpop.f32.mrf.mxu0
    %v2878 = vadd.f32 %v1824, %v2877
    %2879 = vmatmul.f32.gmra.mxu0 %v2092
    %v2880 = vpop.f32.mrf.mxu0
    %v2881 = vadd.f32 %v1824, %v2880
    %2882 = vmatmul.f32.gmra.mxu0 %v2095
    %v2883 = vpop.f32.mrf.mxu0
    %v2884 = vadd.f32 %v1824, %v2883
    %2885 = vmatmul.f32.gmra.mxu0 %v2098
    %v2886 = vpop.f32.mrf.mxu0
    %v2887 = vadd.f32 %v1824, %v2886
    %2888 = vmatmul.f32.gmra.mxu0 %v2101
    %v2889 = vpop.f32.mrf.mxu0
    %v2890 = vadd.f32 %v1824, %v2889
    %2891 = vmatmul.f32.gmra.mxu0 %v2104
    %v2892 = vpop.f32.mrf.mxu0
    %v2893 = vadd.f32 %v1824, %v2892
    %2894 = vmatmul.f32.gmra.mxu0 %v2107
    %v2895 = vpop.f32.mrf.mxu0
    %v2896 = vadd.f32 %v1824, %v2895
    %2897 = vmatmul.f32.gmra.mxu0 %v2110
    %v2898 = vpop.f32.mrf.mxu0
    %v2899 = vadd.f32 %v1824, %v2898
    %2900 = vmatmul.f32.gmra.mxu0 %v2113
    %v2901 = vpop.f32.mrf.mxu0
    %v2902 = vadd.f32 %v1824, %v2901
    %2903 = vmatmul.f32.gmra.mxu0 %v2116
    %v2904 = vpop.f32.mrf.mxu0
    %v2905 = vadd.f32 %v1824, %v2904
    %2906 = vmatmul.f32.gmra.mxu0 %v2119
    %v2907 = vpop.f32.mrf.mxu0
    %v2908 = vadd.f32 %v1824, %v2907
    %2909 = vmatmul.f32.gmra.mxu0 %v2122
    %v2910 = vpop.f32.mrf.mxu0
    %v2911 = vadd.f32 %v1824, %v2910
    %2912 = vmatmul.f32.gmra.mxu0 %v2125
    %v2913 = vpop.f32.mrf.mxu0
    %v2914 = vadd.f32 %v1824, %v2913
    %2915 = vmatmul.f32.gmra.mxu0 %v2128
    %v2916 = vpop.f32.mrf.mxu0
    %v2917 = vadd.f32 %v1824, %v2916
    %2918 = vmatmul.f32.gmra.mxu0 %v2131
    %v2919 = vpop.f32.mrf.mxu0
    %v2920 = vadd.f32 %v1824, %v2919
    %2921 = vmatmul.f32.gmra.mxu0 %v2134
    %v2922 = vpop.f32.mrf.mxu0
    %v2923 = vadd.f32 %v1824, %v2922
    %2924 = vmatmul.f32.gmra.mxu0 %v2137
    %v2925 = vpop.f32.mrf.mxu0
    %v2926 = vadd.f32 %v1824, %v2925
    %2927 = vmatmul.f32.gmra.mxu0 %v2140
    %v2928 = vpop.f32.mrf.mxu0
    %v2929 = vadd.f32 %v1824, %v2928
    %2930 = vmatmul.f32.gmra.mxu0 %v2143
    %v2931 = vpop.f32.mrf.mxu0
    %v2932 = vadd.f32 %v1824, %v2931
    %2933 = vmatmul.f32.gmra.mxu0 %v2146
    %v2934 = vpop.f32.mrf.mxu0
    %v2935 = vadd.f32 %v1824, %v2934
    %2936 = vmatmul.f32.gmra.mxu0 %v2149
    %v2937 = vpop.f32.mrf.mxu0
    %v2938 = vadd.f32 %v1824, %v2937
    %2939 = vmatmul.f32.gmra.mxu0 %v2152
    %v2940 = vpop.f32.mrf.mxu0
    %v2941 = vadd.f32 %v1824, %v2940
    %2942 = vmatmul.f32.gmra.mxu0 %v2155
    %v2943 = vpop.f32.mrf.mxu0
    %v2944 = vadd.f32 %v1824, %v2943
    %2945 = vmatmul.f32.gmra.mxu0 %v2158
    %v2946 = vpop.f32.mrf.mxu0
    %v2947 = vadd.f32 %v1824, %v2946
    %2948 = vmatmul.f32.gmra.mxu0 %v2161
    %v2949 = vpop.f32.mrf.mxu0
    %v2950 = vadd.f32 %v1824, %v2949
    %2951 = vmatmul.f32.gmra.mxu0 %v2164
    %v2952 = vpop.f32.mrf.mxu0
    %v2953 = vadd.f32 %v1824, %v2952
    %2954 = vmatmul.f32.gmra.mxu0 %v2167
    %v2955 = vpop.f32.mrf.mxu0
    %v2956 = vadd.f32 %v1824, %v2955
    %2957 = vmatmul.f32.gmra.mxu0 %v2170
    %v2958 = vpop.f32.mrf.mxu0
    %v2959 = vadd.f32 %v1824, %v2958
    %2960 = vmatmul.f32.gmra.mxu0 %v2173
    %v2961 = vpop.f32.mrf.mxu0
    %v2962 = vadd.f32 %v1824, %v2961
    %2963 = vmatmul.f32.gmra.mxu0 %v2176
    %v2964 = vpop.f32.mrf.mxu0
    %v2965 = vadd.f32 %v1824, %v2964
    %2966 = vmatmul.f32.gmra.mxu0 %v2179
    %v2967 = vpop.f32.mrf.mxu0
    %v2968 = vadd.f32 %v1824, %v2967
    %2969 = vmatmul.f32.gmra.mxu0 %v2182
    %v2970 = vpop.f32.mrf.mxu0
    %v2971 = vadd.f32 %v1824, %v2970
    %2972 = vmatmul.f32.gmra.mxu0 %v2185
    %v2973 = vpop.f32.mrf.mxu0
    %v2974 = vadd.f32 %v1824, %v2973
    %2975 = vmatmul.f32.gmra.mxu0 %v2188
    %v2976 = vpop.f32.mrf.mxu0
    %v2977 = vadd.f32 %v1824, %v2976
    %2978 = vmatmul.f32.gmra.mxu0 %v2191
    %v2979 = vpop.f32.mrf.mxu0
    %v2980 = vadd.f32 %v1824, %v2979
    %2981 = vmatmul.f32.gmra.mxu0 %v2194
    %v2982 = vpop.f32.mrf.mxu0
    %v2983 = vadd.f32 %v1824, %v2982
    %2984 = vmatmul.f32.gmra.mxu0 %v2197
    %v2985 = vpop.f32.mrf.mxu0
    %v2986 = vadd.f32 %v1824, %v2985
    %2987 = vmatmul.f32.gmra.mxu0 %v2200
    %v2988 = vpop.f32.mrf.mxu0
    %v2989 = vadd.f32 %v1824, %v2988
    %2990 = vmatmul.f32.gmra.mxu0 %v2203
    %v2991 = vpop.f32.mrf.mxu0
    %v2992 = vadd.f32 %v1824, %v2991
    %2993 = vmatmul.f32.gmra.mxu0 %v2206
    %v2994 = vpop.f32.mrf.mxu0
    %v2995 = vadd.f32 %v1824, %v2994
    %2996 = vmatmul.f32.gmra.mxu0 %v2209
    %v2997 = vpop.f32.mrf.mxu0
    %v2998 = vadd.f32 %v1824, %v2997
    %2999 = vmatmul.f32.gmra.mxu0 %v2212
    %v3000 = vpop.f32.mrf.mxu0
    %v3001 = vadd.f32 %v1824, %v3000
    %3002 = vmatmul.f32.gmra.mxu0 %v2215
    %v3003 = vpop.f32.mrf.mxu0
    %v3004 = vadd.f32 %v1824, %v3003
    %3005 = vmatmul.f32.gmra.mxu0 %v2218
    %v3006 = vpop.f32.mrf.mxu0
    %v3007 = vadd.f32 %v1824, %v3006
    %3008 = vmatmul.f32.gmra.mxu0 %v2221
    %v3009 = vpop.f32.mrf.mxu0
    %v3010 = vadd.f32 %v1824, %v3009
    %3011 = vmatmul.f32.gmra.mxu0 %v2224
    %v3012 = vpop.f32.mrf.mxu0
    %v3013 = vadd.f32 %v1824, %v3012
    %3014 = vmatmul.f32.gmra.mxu0 %v2227
    %v3015 = vpop.f32.mrf.mxu0
    %v3016 = vadd.f32 %v1824, %v3015
    %3017 = vmatmul.f32.gmra.mxu0 %v2230
    %v3018 = vpop.f32.mrf.mxu0
    %v3019 = vadd.f32 %v1824, %v3018
    %3020 = vmatmul.f32.gmra.mxu0 %v2233
    %v3021 = vpop.f32.mrf.mxu0
    %v3022 = vadd.f32 %v1824, %v3021
    %3023 = vmatmul.f32.gmra.mxu0 %v2236
    %v3024 = vpop.f32.mrf.mxu0
    %v3025 = vadd.f32 %v1824, %v3024
    %3026 = vmatmul.f32.gmra.mxu0 %v2239
    %v3027 = vpop.f32.mrf.mxu0
    %v3028 = vadd.f32 %v1824, %v3027
    %3029 = vmatmul.f32.gmra.mxu0 %v2242
    %v3030 = vpop.f32.mrf.mxu0
    %v3031 = vadd.f32 %v1824, %v3030
    %3032 = vmatmul.f32.gmra.mxu0 %v2245
    %v3033 = vpop.f32.mrf.mxu0
    %v3034 = vadd.f32 %v1824, %v3033
    %3035 = vmatmul.f32.gmra.mxu0 %v2248
    %v3036 = vpop.f32.mrf.mxu0
    %v3037 = vadd.f32 %v1824, %v3036
    %3038 = vmatmul.f32.gmra.mxu0 %v2251
    %v3039 = vpop.f32.mrf.mxu0
    %v3040 = vadd.f32 %v1824, %v3039
    %3041 = vmatmul.f32.gmra.mxu0 %v2254
    %v3042 = vpop.f32.mrf.mxu0
    %v3043 = vadd.f32 %v1824, %v3042
    %3044 = vmatmul.f32.gmra.mxu0 %v2257
    %v3045 = vpop.f32.mrf.mxu0
    %v3046 = vadd.f32 %v1824, %v3045
    %3047 = vmatmul.f32.gmra.mxu0 %v2260
    %v3048 = vpop.f32.mrf.mxu0
    %v3049 = vadd.f32 %v1824, %v3048
    %3050 = vmatmul.f32.gmra.mxu0 %v2263
    %v3051 = vpop.f32.mrf.mxu0
    %v3052 = vadd.f32 %v1824, %v3051
    %3053 = vmatmul.f32.gmra.mxu0 %v2266
    %v3054 = vpop.f32.mrf.mxu0
    %v3055 = vadd.f32 %v1824, %v3054
    %3056 = vmatmul.f32.gmra.mxu0 %v2269
    %v3057 = vpop.f32.mrf.mxu0
    %v3058 = vadd.f32 %v1824, %v3057
    %3059 = vmatmul.f32.gmra.mxu0 %v2272
    %v3060 = vpop.f32.mrf.mxu0
    %v3061 = vadd.f32 %v1824, %v3060
    %3062 = vmatmul.f32.gmra.mxu0 %v2275
    %v3063 = vpop.f32.mrf.mxu0
    %v3064 = vadd.f32 %v1824, %v3063
    %3065 = vmatmul.f32.gmra.mxu0 %v2278
    %v3066 = vpop.f32.mrf.mxu0
    %v3067 = vadd.f32 %v1824, %v3066
    %3068 = vmatmul.f32.gmra.mxu0 %v2281
    %v3069 = vpop.f32.mrf.mxu0
    %v3070 = vadd.f32 %v1824, %v3069
    %3071 = vmatmul.f32.gmra.mxu0 %v2284
    %v3072 = vpop.f32.mrf.mxu0
    %v3073 = vadd.f32 %v1824, %v3072
    %3074 = vmatmul.f32.gmra.mxu0 %v2287
    %v3075 = vpop.f32.mrf.mxu0
    %v3076 = vadd.f32 %v1824, %v3075
    %3077 = vmatmul.f32.gmra.mxu0 %v2290
    %v3078 = vpop.f32.mrf.mxu0
    %v3079 = vadd.f32 %v1824, %v3078
    %3080 = vmatmul.f32.gmra.mxu0 %v2293
    %v3081 = vpop.f32.mrf.mxu0
    %v3082 = vadd.f32 %v1824, %v3081
    %3083 = vmatmul.f32.gmra.mxu0 %v2296
    %v3084 = vpop.f32.mrf.mxu0
    %v3085 = vadd.f32 %v1824, %v3084
    %3086 = vmatmul.f32.gmra.mxu0 %v2299
    %v3087 = vpop.f32.mrf.mxu0
    %v3088 = vadd.f32 %v1824, %v3087
    %3089 = vmatmul.f32.gmra.mxu0 %v2302
    %v3090 = vpop.f32.mrf.mxu0
    %v3091 = vadd.f32 %v1824, %v3090
    %3092 = vmatmul.f32.gmra.mxu0 %v2305
    %v3093 = vpop.f32.mrf.mxu0
    %v3094 = vadd.f32 %v1824, %v3093
    %3095 = vmatmul.f32.gmra.mxu0 %v2308
    %v3096 = vpop.f32.mrf.mxu0
    %v3097 = vadd.f32 %v1824, %v3096
    %3098 = vmatmul.f32.gmra.mxu0 %v2311
    %v3099 = vpop.f32.mrf.mxu0
    %v3100 = vadd.f32 %v1824, %v3099
    %3101 = vmatmul.f32.gmra.mxu0 %v2314
    %v3102 = vpop.f32.mrf.mxu0
    %v3103 = vadd.f32 %v1824, %v3102
    %3104 = vmatmul.f32.gmra.mxu0 %v2317
    %v3105 = vpop.f32.mrf.mxu0
    %v3106 = vadd.f32 %v1824, %v3105
    %3107 = vmatmul.f32.gmra.mxu0 %v2320
    %v3108 = vpop.f32.mrf.mxu0
    %v3109 = vadd.f32 %v1824, %v3108
    %3110 = vmatmul.f32.gmra.mxu0 %v2323
    %v3111 = vpop.f32.mrf.mxu0
    %v3112 = vadd.f32 %v1824, %v3111
    %3113 = vmatmul.f32.gmra.mxu0 %v2326
    %v3114 = vpop.f32.mrf.mxu0
    %v3115 = vadd.f32 %v1824, %v3114
    %3116 = vmatmul.f32.gmra.mxu0 %v2329
    %v3117 = vpop.f32.mrf.mxu0
    %v3118 = vadd.f32 %v1824, %v3117
    %3119 = vmatmul.f32.gmra.mxu0 %v2332
    %v3120 = vpop.f32.mrf.mxu0
    %v3121 = vadd.f32 %v1824, %v3120
    %3122 = vmatmul.f32.gmra.mxu0 %v2335
    %v3123 = vpop.f32.mrf.mxu0
    %v3124 = vadd.f32 %v1824, %v3123
    %3125 = vmatmul.f32.gmra.mxu0 %v2338
    %v3126 = vpop.f32.mrf.mxu0
    %v3127 = vadd.f32 %v1824, %v3126
    %3128 = vmatmul.f32.gmra.mxu0 %v2341
    %v3129 = vpop.f32.mrf.mxu0
    %v3130 = vadd.f32 %v1824, %v3129
    %3131 = vmatmul.f32.gmra.mxu0 %v2344
    %v3132 = vpop.f32.mrf.mxu0
    %v3133 = vadd.f32 %v1824, %v3132
    %3134 = vmatmul.f32.gmra.mxu0 %v2347
    %v3135 = vpop.f32.mrf.mxu0
    %v3136 = vadd.f32 %v1824, %v3135
    %3137 = vmatmul.f32.gmra.mxu0 %v2350
    %v3138 = vpop.f32.mrf.mxu0
    %v3139 = vadd.f32 %v1824, %v3138
    %3140 = vmatmul.f32.gmra.mxu0 %v2353
    %v3141 = vpop.f32.mrf.mxu0
    %v3142 = vadd.f32 %v1824, %v3141
    %3143 = vmatmul.f32.gmra.mxu0 %v2356
    %v3144 = vpop.f32.mrf.mxu0
    %v3145 = vadd.f32 %v1824, %v3144
    %3146 = vmatmul.f32.gmra.mxu0 %v2359
    %v3147 = vpop.f32.mrf.mxu0
    %v3148 = vadd.f32 %v1824, %v3147
    %3149 = vmatmul.f32.gmra.mxu0 %v2362
    %v3150 = vpop.f32.mrf.mxu0
    %v3151 = vadd.f32 %v1824, %v3150
    %3152 = vmatmul.f32.gmra.mxu0 %v2365
    %v3153 = vpop.f32.mrf.mxu0
    %v3154 = vadd.f32 %v1824, %v3153
    %3155 = vmatmul.f32.gmra.mxu0 %v2368
    %v3156 = vpop.f32.mrf.mxu0
    %v3157 = vadd.f32 %v1824, %v3156
    %3158 = vmatmul.f32.gmra.mxu0 %v2371
    %v3159 = vpop.f32.mrf.mxu0
    %v3160 = vadd.f32 %v1824, %v3159
    %3161 = vmatmul.f32.gmra.mxu0 %v2374
    %v3162 = vpop.f32.mrf.mxu0
    %v3163 = vadd.f32 %v1824, %v3162
    %3164 = vmatmul.f32.gmra.mxu0 %v2377
    %v3165 = vpop.f32.mrf.mxu0
    %v3166 = vadd.f32 %v1824, %v3165
    %3167 = vmatmul.f32.gmra.mxu0 %v2380
    %v3168 = vpop.f32.mrf.mxu0
    %v3169 = vadd.f32 %v1824, %v3168
    %3170 = vmatmul.f32.gmra.mxu0 %v2383
    %v3171 = vpop.f32.mrf.mxu0
    %v3172 = vadd.f32 %v1824, %v3171
    %3173 = vmatmul.f32.gmra.mxu0 %v2386
    %v3174 = vpop.f32.mrf.mxu0
    %v3175 = vadd.f32 %v1824, %v3174
    %3176 = vmatmul.f32.gmra.mxu0 %v2389
    %v3177 = vpop.f32.mrf.mxu0
    %v3178 = vadd.f32 %v1824, %v3177
    %3179 = vmatmul.f32.gmra.mxu0 %v2392
    %v3180 = vpop.f32.mrf.mxu0
    %v3181 = vadd.f32 %v1824, %v3180
    %3182 = vmatmul.f32.gmra.mxu0 %v2395
    %v3183 = vpop.f32.mrf.mxu0
    %v3184 = vadd.f32 %v1824, %v3183
    %3185 = vmatmul.f32.gmra.mxu0 %v2398
    %v3186 = vpop.f32.mrf.mxu0
    %v3187 = vadd.f32 %v1824, %v3186
    %3188 = vmatmul.f32.gmra.mxu0 %v2401
    %v3189 = vpop.f32.mrf.mxu0
    %v3190 = vadd.f32 %v1824, %v3189
    %3191 = vmatmul.f32.gmra.mxu0 %v2404
    %v3192 = vpop.f32.mrf.mxu0
    %v3193 = vadd.f32 %v1824, %v3192
    %3194 = vmatmul.f32.gmra.mxu0 %v2407
    %v3195 = vpop.f32.mrf.mxu0
    %v3196 = vadd.f32 %v1824, %v3195
    %3197 = vmatmul.f32.gmra.mxu0 %v2410
    %v3198 = vpop.f32.mrf.mxu0
    %v3199 = vadd.f32 %v1824, %v3198
    %3200 = vmatmul.f32.gmra.mxu0 %v2413
    %v3201 = vpop.f32.mrf.mxu0
    %v3202 = vadd.f32 %v1824, %v3201
    %3203 = vmatmul.f32.gmra.mxu0 %v2416
    %v3204 = vpop.f32.mrf.mxu0
    %v3205 = vadd.f32 %v1824, %v3204
    %3206 = vmatmul.f32.gmra.mxu0 %v2419
    %v3207 = vpop.f32.mrf.mxu0
    %v3208 = vadd.f32 %v1824, %v3207
    %3209 = vmatmul.f32.gmra.mxu0 %v2422
    %v3210 = vpop.f32.mrf.mxu0
    %v3211 = vadd.f32 %v1824, %v3210
    %3212 = vmatmul.f32.gmra.mxu0 %v2425
    %v3213 = vpop.f32.mrf.mxu0
    %v3214 = vadd.f32 %v1824, %v3213
    %3215 = vmatmul.f32.gmra.mxu0 %v2428
    %v3216 = vpop.f32.mrf.mxu0
    %v3217 = vadd.f32 %v1824, %v3216
    %3218 = vmatmul.f32.gmra.mxu0 %v2431
    %v3219 = vpop.f32.mrf.mxu0
    %v3220 = vadd.f32 %v1824, %v3219
    %3221 = vmatmul.f32.gmra.mxu0 %v2434
    %v3222 = vpop.f32.mrf.mxu0
    %v3223 = vadd.f32 %v1824, %v3222
    %3224 = vmatmul.f32.gmra.mxu0 %v2437
    %v3225 = vpop.f32.mrf.mxu0
    %v3226 = vadd.f32 %v1824, %v3225
    %3227 = vmatmul.f32.gmra.mxu0 %v2440
    %v3228 = vpop.f32.mrf.mxu0
    %v3229 = vadd.f32 %v1824, %v3228
    %3230 = vmatmul.f32.gmra.mxu0 %v2443
    %v3231 = vpop.f32.mrf.mxu0
    %v3232 = vadd.f32 %v1824, %v3231
    %3233 = vmatmul.f32.gmra.mxu0 %v2446
    %v3234 = vpop.f32.mrf.mxu0
    %v3235 = vadd.f32 %v1824, %v3234
    %3236 = vmatmul.f32.gmra.mxu0 %v2449
    %v3237 = vpop.f32.mrf.mxu0
    %v3238 = vadd.f32 %v1824, %v3237
    %3239 = vmatmul.f32.gmra.mxu0 %v2452
    %v3240 = vpop.f32.mrf.mxu0
    %v3241 = vadd.f32 %v1824, %v3240
    %3242 = vmatmul.f32.gmra.mxu0 %v2455
    %v3243 = vpop.f32.mrf.mxu0
    %v3244 = vadd.f32 %v1824, %v3243
    %3245 = vmatmul.f32.gmra.mxu0 %v2458
    %v3246 = vpop.f32.mrf.mxu0
    %v3247 = vadd.f32 %v1824, %v3246
    %3248 = vmatmul.f32.gmra.mxu0 %v2461
    %v3249 = vpop.f32.mrf.mxu0
    %v3250 = vadd.f32 %v1824, %v3249
    %3251 = vmatmul.f32.gmra.mxu0 %v2464
    %v3252 = vpop.f32.mrf.mxu0
    %v3253 = vadd.f32 %v1824, %v3252
    %3254 = vmatmul.f32.gmra.mxu0 %v2467
    %v3255 = vpop.f32.mrf.mxu0
    %v3256 = vadd.f32 %v1824, %v3255
    %3257 = vmatmul.f32.gmra.mxu0 %v2470
    %v3258 = vpop.f32.mrf.mxu0
    %v3259 = vadd.f32 %v1824, %v3258
    %3260 = vmatmul.f32.gmra.mxu0 %v2473
    %v3261 = vpop.f32.mrf.mxu0
    %v3262 = vadd.f32 %v1824, %v3261
    %3263 = vmatmul.f32.gmra.mxu0 %v2476
    %v3264 = vpop.f32.mrf.mxu0
    %v3265 = vadd.f32 %v1824, %v3264
    %3266 = vmatmul.f32.gmra.mxu0 %v2479
    %v3267 = vpop.f32.mrf.mxu0
    %v3268 = vadd.f32 %v1824, %v3267
    %3269 = vmatmul.f32.gmra.mxu0 %v2482
    %v3270 = vpop.f32.mrf.mxu0
    %v3271 = vadd.f32 %v1824, %v3270
    %3272 = vmatmul.f32.gmra.mxu0 %v2485
    %v3273 = vpop.f32.mrf.mxu0
    %v3274 = vadd.f32 %v1824, %v3273
    %3275 = vmatmul.f32.gmra.mxu0 %v2488
    %v3276 = vpop.f32.mrf.mxu0
    %v3277 = vadd.f32 %v1824, %v3276
    %3278 = vmatmul.f32.gmra.mxu0 %v2491
    %v3279 = vpop.f32.mrf.mxu0
    %v3280 = vadd.f32 %v1824, %v3279
    %3281 = vmatmul.f32.gmra.mxu0 %v2494
    %v3282 = vpop.f32.mrf.mxu0
    %v3283 = vadd.f32 %v1824, %v3282
    %3284 = vmatmul.f32.gmra.mxu0 %v2497
    %v3285 = vpop.f32.mrf.mxu0
    %v3286 = vadd.f32 %v1824, %v3285
    %3287 = vmatmul.f32.gmra.mxu0 %v2500
    %v3288 = vpop.f32.mrf.mxu0
    %v3289 = vadd.f32 %v1824, %v3288
    %3290 = vmatmul.f32.gmra.mxu0 %v2503
    %v3291 = vpop.f32.mrf.mxu0
    %v3292 = vadd.f32 %v1824, %v3291
    %3293 = vmatmul.f32.gmra.mxu0 %v2506
    %v3294 = vpop.f32.mrf.mxu0
    %v3295 = vadd.f32 %v1824, %v3294
    %3296 = vmatmul.f32.gmra.mxu0 %v2509
    %v3297 = vpop.f32.mrf.mxu0
    %v3298 = vadd.f32 %v1824, %v3297
    %3299 = vmatmul.f32.gmra.mxu0 %v2512
    %v3300 = vpop.f32.mrf.mxu0
    %v3301 = vadd.f32 %v1824, %v3300
    %3302 = vmatmul.f32.gmra.mxu0 %v2515
    %v3303 = vpop.f32.mrf.mxu0
    %v3304 = vadd.f32 %v1824, %v3303
    %3305 = vmatmul.f32.gmra.mxu0 %v2518
    %v3306 = vpop.f32.mrf.mxu0
    %v3307 = vadd.f32 %v1824, %v3306
    %3308 = vmatmul.f32.gmra.mxu0 %v2521
    %v3309 = vpop.f32.mrf.mxu0
    %v3310 = vadd.f32 %v1824, %v3309
    %3311 = vmatmul.f32.gmra.mxu0 %v2524
    %v3312 = vpop.f32.mrf.mxu0
    %v3313 = vadd.f32 %v1824, %v3312
    %3314 = vmatmul.f32.gmra.mxu0 %v2527
    %v3315 = vpop.f32.mrf.mxu0
    %v3316 = vadd.f32 %v1824, %v3315
    %3317 = vmatmul.f32.gmra.mxu0 %v2530
    %v3318 = vpop.f32.mrf.mxu0
    %v3319 = vadd.f32 %v1824, %v3318
    %3320 = vmatmul.f32.gmra.mxu0 %v2533
    %v3321 = vpop.f32.mrf.mxu0
    %v3322 = vadd.f32 %v1824, %v3321
    %3323 = vmatmul.f32.gmra.mxu0 %v2536
    %v3324 = vpop.f32.mrf.mxu0
    %v3325 = vadd.f32 %v1824, %v3324
    %3326 = vmatmul.f32.gmra.mxu0 %v2539
    %v3327 = vpop.f32.mrf.mxu0
    %v3328 = vadd.f32 %v1824, %v3327
    %3329 = vmatmul.f32.gmra.mxu0 %v2542
    %v3330 = vpop.f32.mrf.mxu0
    %v3331 = vadd.f32 %v1824, %v3330
    %3332 = vmatmul.f32.gmra.mxu0 %v2545
    %v3333 = vpop.f32.mrf.mxu0
    %v3334 = vadd.f32 %v1824, %v3333
    %3335 = vmatmul.f32.gmra.mxu0 %v2548
    %v3336 = vpop.f32.mrf.mxu0
    %v3337 = vadd.f32 %v1824, %v3336
    %3338 = vmatmul.f32.gmra.mxu0 %v2551
    %v3339 = vpop.f32.mrf.mxu0
    %v3340 = vadd.f32 %v1824, %v3339
    %3341 = vmatmul.f32.gmra.mxu0 %v2554
    %v3342 = vpop.f32.mrf.mxu0
    %v3343 = vadd.f32 %v1824, %v3342
    %3344 = vmatmul.f32.gmra.mxu0 %v2557
    %v3345 = vpop.f32.mrf.mxu0
    %v3346 = vadd.f32 %v1824, %v3345
    %3347 = vmatmul.f32.gmra.mxu0 %v2560
    %v3348 = vpop.f32.mrf.mxu0
    %v3349 = vadd.f32 %v1824, %v3348
    %3350 = vmatmul.f32.gmra.mxu0 %v2563
    %v3351 = vpop.f32.mrf.mxu0
    %v3352 = vadd.f32 %v1824, %v3351
    %3353 = vmatmul.f32.gmra.mxu0 %v2566
    %v3354 = vpop.f32.mrf.mxu0
    %v3355 = vadd.f32 %v1824, %v3354
    %3356 = vmatmul.f32.gmra.mxu0 %v2569
    %v3357 = vpop.f32.mrf.mxu0
    %v3358 = vadd.f32 %v1824, %v3357
    %3359 = vmatmul.f32.gmra.mxu0 %v2572
    %v3360 = vpop.f32.mrf.mxu0
    %v3361 = vadd.f32 %v1824, %v3360
    %3362 = vmatmul.f32.gmra.mxu0 %v2575
    %v3363 = vpop.f32.mrf.mxu0
    %v3364 = vadd.f32 %v1824, %v3363
    %3365 = vmatmul.f32.gmra.mxu0 %v2578
    %v3366 = vpop.f32.mrf.mxu0
    %v3367 = vadd.f32 %v1824, %v3366
    %3368 = vmatmul.f32.gmra.mxu0 %v2581
    %v3369 = vpop.f32.mrf.mxu0
    %v3370 = vadd.f32 %v1824, %v3369
    %3371 = vmatmul.f32.gmra.mxu0 %v2584
    %v3372 = vpop.f32.mrf.mxu0
    %v3373 = vadd.f32 %v1824, %v3372
    %3374 = vmatmul.f32.gmra.mxu0 %v2587
    %v3375 = vpop.f32.mrf.mxu0
    %v3376 = vadd.f32 %v1824, %v3375
    %3377 = vmatmul.f32.gmra.mxu0 %v2590
    %v3378 = vpop.f32.mrf.mxu0
    %v3379 = vadd.f32 %v1824, %v3378
    %3380 = vmatmul.f32.gmra.mxu0 %v2593
    %v3381 = vpop.f32.mrf.mxu0
    %v3382 = vadd.f32 %v1824, %v3381
    %3383 = vdwg.mxu0
    %vm3384 = vcmask 261120
    %3385 = vst.msk [vmem:[#allocation2] sm:$0xff] %vm3384, %v2617
    %3386 = vst.msk [vmem:[#allocation2 + $0x8] sm:$0xff] %vm3384, %v2620
    %3387 = vst.msk [vmem:[#allocation2 + $0x10] sm:$0xff] %vm3384, %v2623
    %3388 = vst.msk [vmem:[#allocation2 + $0x18] sm:$0xff] %vm3384, %v2626
    %3389 = vst.msk [vmem:[#allocation2 + $0x20] sm:$0xff] %vm3384, %v2629
    %3390 = vst.msk [vmem:[#allocation2 + $0x28] sm:$0xff] %vm3384, %v2632
    %3391 = vst.msk [vmem:[#allocation2 + $0x30] sm:$0xff] %vm3384, %v2635
    %3392 = vst.msk [vmem:[#allocation2 + $0x38] sm:$0xff] %vm3384, %v2638
    %3393 = vst.msk [vmem:[#allocation2 + $0x40] sm:$0xff] %vm3384, %v2641
    %3394 = vst.msk [vmem:[#allocation2 + $0x48] sm:$0xff] %vm3384, %v2644
    %3395 = vst.msk [vmem:[#allocation2 + $0x50] sm:$0xff] %vm3384, %v2647
    %3396 = vst.msk [vmem:[#allocation2 + $0x58] sm:$0xff] %vm3384, %v2650
    %3397 = vst.msk [vmem:[#allocation2 + $0x60] sm:$0xff] %vm3384, %v2653
    %3398 = vst.msk [vmem:[#allocation2 + $0x68] sm:$0xff] %vm3384, %v2656
    %3399 = vst.msk [vmem:[#allocation2 + $0x70] sm:$0xff] %vm3384, %v2659
    %3400 = vst.msk [vmem:[#allocation2 + $0x78] sm:$0xff] %vm3384, %v2662
    %3401 = vst.msk [vmem:[#allocation2 + $0x80] sm:$0xff] %vm3384, %v2665
    %3402 = vst.msk [vmem:[#allocation2 + $0x88] sm:$0xff] %vm3384, %v2668
    %3403 = vst.msk [vmem:[#allocation2 + $0x90] sm:$0xff] %vm3384, %v2671
    %3404 = vst.msk [vmem:[#allocation2 + $0x98] sm:$0xff] %vm3384, %v2674
    %3405 = vst.msk [vmem:[#allocation2 + $0xa0] sm:$0xff] %vm3384, %v2677
    %3406 = vst.msk [vmem:[#allocation2 + $0xa8] sm:$0xff] %vm3384, %v2680
    %3407 = vst.msk [vmem:[#allocation2 + $0xb0] sm:$0xff] %vm3384, %v2683
    %3408 = vst.msk [vmem:[#allocation2 + $0xb8] sm:$0xff] %vm3384, %v2686
    %3409 = vst.msk [vmem:[#allocation2 + $0xc0] sm:$0xff] %vm3384, %v2689
    %3410 = vst.msk [vmem:[#allocation2 + $0xc8] sm:$0xff] %vm3384, %v2692
    %3411 = vst.msk [vmem:[#allocation2 + $0xd0] sm:$0xff] %vm3384, %v2695
    %3412 = vst.msk [vmem:[#allocation2 + $0xd8] sm:$0xff] %vm3384, %v2698
    %3413 = vst.msk [vmem:[#allocation2 + $0xe0] sm:$0xff] %vm3384, %v2701
    %3414 = vst.msk [vmem:[#allocation2 + $0xe8] sm:$0xff] %vm3384, %v2704
    %3415 = vst.msk [vmem:[#allocation2 + $0xf0] sm:$0xff] %vm3384, %v2707
    %3416 = vst.msk [vmem:[#allocation2 + $0xf8] sm:$0xff] %vm3384, %v2710
    %3417 = vst.msk [vmem:[#allocation2 + $0x100] sm:$0xff] %vm3384, %v2713
    %3418 = vst.msk [vmem:[#allocation2 + $0x108] sm:$0xff] %vm3384, %v2716
    %3419 = vst.msk [vmem:[#allocation2 + $0x110] sm:$0xff] %vm3384, %v2719
    %3420 = vst.msk [vmem:[#allocation2 + $0x118] sm:$0xff] %vm3384, %v2722
    %3421 = vst.msk [vmem:[#allocation2 + $0x120] sm:$0xff] %vm3384, %v2725
    %3422 = vst.msk [vmem:[#allocation2 + $0x128] sm:$0xff] %vm3384, %v2728
    %3423 = vst.msk [vmem:[#allocation2 + $0x130] sm:$0xff] %vm3384, %v2731
    %3424 = vst.msk [vmem:[#allocation2 + $0x138] sm:$0xff] %vm3384, %v2734
    %3425 = vst.msk [vmem:[#allocation2 + $0x140] sm:$0xff] %vm3384, %v2737
    %3426 = vst.msk [vmem:[#allocation2 + $0x148] sm:$0xff] %vm3384, %v2740
    %3427 = vst.msk [vmem:[#allocation2 + $0x150] sm:$0xff] %vm3384, %v2743
    %3428 = vst.msk [vmem:[#allocation2 + $0x158] sm:$0xff] %vm3384, %v2746
    %3429 = vst.msk [vmem:[#allocation2 + $0x160] sm:$0xff] %vm3384, %v2749
    %3430 = vst.msk [vmem:[#allocation2 + $0x168] sm:$0xff] %vm3384, %v2752
    %3431 = vst.msk [vmem:[#allocation2 + $0x170] sm:$0xff] %vm3384, %v2755
    %3432 = vst.msk [vmem:[#allocation2 + $0x178] sm:$0xff] %vm3384, %v2758
    %3433 = vst.msk [vmem:[#allocation2 + $0x180] sm:$0xff] %vm3384, %v2761
    %3434 = vst.msk [vmem:[#allocation2 + $0x188] sm:$0xff] %vm3384, %v2764
    %3435 = vst.msk [vmem:[#allocation2 + $0x190] sm:$0xff] %vm3384, %v2767
    %3436 = vst.msk [vmem:[#allocation2 + $0x198] sm:$0xff] %vm3384, %v2770
    %3437 = vst.msk [vmem:[#allocation2 + $0x1a0] sm:$0xff] %vm3384, %v2773
    %3438 = vst.msk [vmem:[#allocation2 + $0x1a8] sm:$0xff] %vm3384, %v2776
    %3439 = vst.msk [vmem:[#allocation2 + $0x1b0] sm:$0xff] %vm3384, %v2779
    %3440 = vst.msk [vmem:[#allocation2 + $0x1b8] sm:$0xff] %vm3384, %v2782
    %3441 = vst.msk [vmem:[#allocation2 + $0x1c0] sm:$0xff] %vm3384, %v2785
    %3442 = vst.msk [vmem:[#allocation2 + $0x1c8] sm:$0xff] %vm3384, %v2788
    %3443 = vst.msk [vmem:[#allocation2 + $0x1d0] sm:$0xff] %vm3384, %v2791
    %3444 = vst.msk [vmem:[#allocation2 + $0x1d8] sm:$0xff] %vm3384, %v2794
    %3445 = vst.msk [vmem:[#allocation2 + $0x1e0] sm:$0xff] %vm3384, %v2797
    %3446 = vst.msk [vmem:[#allocation2 + $0x1e8] sm:$0xff] %vm3384, %v2800
    %3447 = vst.msk [vmem:[#allocation2 + $0x1f0] sm:$0xff] %vm3384, %v2803
    %3448 = vst.msk [vmem:[#allocation2 + $0x1f8] sm:$0xff] %vm3384, %v2806
    %3449 = vst.msk [vmem:[#allocation2 + $0x200] sm:$0xff] %vm3384, %v2809
    %3450 = vst.msk [vmem:[#allocation2 + $0x208] sm:$0xff] %vm3384, %v2812
    %3451 = vst.msk [vmem:[#allocation2 + $0x210] sm:$0xff] %vm3384, %v2815
    %3452 = vst.msk [vmem:[#allocation2 + $0x218] sm:$0xff] %vm3384, %v2818
    %3453 = vst.msk [vmem:[#allocation2 + $0x220] sm:$0xff] %vm3384, %v2821
    %3454 = vst.msk [vmem:[#allocation2 + $0x228] sm:$0xff] %vm3384, %v2824
    %3455 = vst.msk [vmem:[#allocation2 + $0x230] sm:$0xff] %vm3384, %v2827
    %3456 = vst.msk [vmem:[#allocation2 + $0x238] sm:$0xff] %vm3384, %v2830
    %3457 = vst.msk [vmem:[#allocation2 + $0x240] sm:$0xff] %vm3384, %v2833
    %3458 = vst.msk [vmem:[#allocation2 + $0x248] sm:$0xff] %vm3384, %v2836
    %3459 = vst.msk [vmem:[#allocation2 + $0x250] sm:$0xff] %vm3384, %v2839
    %3460 = vst.msk [vmem:[#allocation2 + $0x258] sm:$0xff] %vm3384, %v2842
    %3461 = vst.msk [vmem:[#allocation2 + $0x260] sm:$0xff] %vm3384, %v2845
    %3462 = vst.msk [vmem:[#allocation2 + $0x268] sm:$0xff] %vm3384, %v2848
    %3463 = vst.msk [vmem:[#allocation2 + $0x270] sm:$0xff] %vm3384, %v2851
    %3464 = vst.msk [vmem:[#allocation2 + $0x278] sm:$0xff] %vm3384, %v2854
    %3465 = vst.msk [vmem:[#allocation2 + $0x280] sm:$0xff] %vm3384, %v2857
    %3466 = vst.msk [vmem:[#allocation2 + $0x288] sm:$0xff] %vm3384, %v2860
    %3467 = vst.msk [vmem:[#allocation2 + $0x290] sm:$0xff] %vm3384, %v2863
    %3468 = vst.msk [vmem:[#allocation2 + $0x298] sm:$0xff] %vm3384, %v2866
    %3469 = vst.msk [vmem:[#allocation2 + $0x2a0] sm:$0xff] %vm3384, %v2869
    %3470 = vst.msk [vmem:[#allocation2 + $0x2a8] sm:$0xff] %vm3384, %v2872
    %3471 = vst.msk [vmem:[#allocation2 + $0x2b0] sm:$0xff] %vm3384, %v2875
    %3472 = vst.msk [vmem:[#allocation2 + $0x2b8] sm:$0xff] %vm3384, %v2878
    %3473 = vst.msk [vmem:[#allocation2 + $0x2c0] sm:$0xff] %vm3384, %v2881
    %3474 = vst.msk [vmem:[#allocation2 + $0x2c8] sm:$0xff] %vm3384, %v2884
    %3475 = vst.msk [vmem:[#allocation2 + $0x2d0] sm:$0xff] %vm3384, %v2887
    %3476 = vst.msk [vmem:[#allocation2 + $0x2d8] sm:$0xff] %vm3384, %v2890
    %3477 = vst.msk [vmem:[#allocation2 + $0x2e0] sm:$0xff] %vm3384, %v2893
    %3478 = vst.msk [vmem:[#allocation2 + $0x2e8] sm:$0xff] %vm3384, %v2896
    %3479 = vst.msk [vmem:[#allocation2 + $0x2f0] sm:$0xff] %vm3384, %v2899
    %3480 = vst.msk [vmem:[#allocation2 + $0x2f8] sm:$0xff] %vm3384, %v2902
    %3481 = vst.msk [vmem:[#allocation2 + $0x300] sm:$0xff] %vm3384, %v2905
    %3482 = vst.msk [vmem:[#allocation2 + $0x308] sm:$0xff] %vm3384, %v2908
    %3483 = vst.msk [vmem:[#allocation2 + $0x310] sm:$0xff] %vm3384, %v2911
    %3484 = vst.msk [vmem:[#allocation2 + $0x318] sm:$0xff] %vm3384, %v2914
    %3485 = vst.msk [vmem:[#allocation2 + $0x320] sm:$0xff] %vm3384, %v2917
    %3486 = vst.msk [vmem:[#allocation2 + $0x328] sm:$0xff] %vm3384, %v2920
    %3487 = vst.msk [vmem:[#allocation2 + $0x330] sm:$0xff] %vm3384, %v2923
    %3488 = vst.msk [vmem:[#allocation2 + $0x338] sm:$0xff] %vm3384, %v2926
    %3489 = vst.msk [vmem:[#allocation2 + $0x340] sm:$0xff] %vm3384, %v2929
    %3490 = vst.msk [vmem:[#allocation2 + $0x348] sm:$0xff] %vm3384, %v2932
    %3491 = vst.msk [vmem:[#allocation2 + $0x350] sm:$0xff] %vm3384, %v2935
    %3492 = vst.msk [vmem:[#allocation2 + $0x358] sm:$0xff] %vm3384, %v2938
    %3493 = vst.msk [vmem:[#allocation2 + $0x360] sm:$0xff] %vm3384, %v2941
    %3494 = vst.msk [vmem:[#allocation2 + $0x368] sm:$0xff] %vm3384, %v2944
    %3495 = vst.msk [vmem:[#allocation2 + $0x370] sm:$0xff] %vm3384, %v2947
    %3496 = vst.msk [vmem:[#allocation2 + $0x378] sm:$0xff] %vm3384, %v2950
    %3497 = vst.msk [vmem:[#allocation2 + $0x380] sm:$0xff] %vm3384, %v2953
    %3498 = vst.msk [vmem:[#allocation2 + $0x388] sm:$0xff] %vm3384, %v2956
    %3499 = vst.msk [vmem:[#allocation2 + $0x390] sm:$0xff] %vm3384, %v2959
    %3500 = vst.msk [vmem:[#allocation2 + $0x398] sm:$0xff] %vm3384, %v2962
    %3501 = vst.msk [vmem:[#allocation2 + $0x3a0] sm:$0xff] %vm3384, %v2965
    %3502 = vst.msk [vmem:[#allocation2 + $0x3a8] sm:$0xff] %vm3384, %v2968
    %3503 = vst.msk [vmem:[#allocation2 + $0x3b0] sm:$0xff] %vm3384, %v2971
    %3504 = vst.msk [vmem:[#allocation2 + $0x3b8] sm:$0xff] %vm3384, %v2974
    %3505 = vst.msk [vmem:[#allocation2 + $0x3c0] sm:$0xff] %vm3384, %v2977
    %3506 = vst.msk [vmem:[#allocation2 + $0x3c8] sm:$0xff] %vm3384, %v2980
    %3507 = vst.msk [vmem:[#allocation2 + $0x3d0] sm:$0xff] %vm3384, %v2983
    %3508 = vst.msk [vmem:[#allocation2 + $0x3d8] sm:$0xff] %vm3384, %v2986
    %3509 = vst.msk [vmem:[#allocation2 + $0x3e0] sm:$0xff] %vm3384, %v2989
    %3510 = vst.msk [vmem:[#allocation2 + $0x3e8] sm:$0xff] %vm3384, %v2992
    %3511 = vst.msk [vmem:[#allocation2 + $0x3f0] sm:$0xff] %vm3384, %v2995
    %3512 = vst.msk [vmem:[#allocation2 + $0x3f8] sm:$0xff] %vm3384, %v2998
    %3513 = vst.msk [vmem:[#allocation2 + $0x400] sm:$0xff] %vm3384, %v3001
    %3514 = vst.msk [vmem:[#allocation2 + $0x408] sm:$0xff] %vm3384, %v3004
    %3515 = vst.msk [vmem:[#allocation2 + $0x410] sm:$0xff] %vm3384, %v3007
    %3516 = vst.msk [vmem:[#allocation2 + $0x418] sm:$0xff] %vm3384, %v3010
    %3517 = vst.msk [vmem:[#allocation2 + $0x420] sm:$0xff] %vm3384, %v3013
    %3518 = vst.msk [vmem:[#allocation2 + $0x428] sm:$0xff] %vm3384, %v3016
    %3519 = vst.msk [vmem:[#allocation2 + $0x430] sm:$0xff] %vm3384, %v3019
    %3520 = vst.msk [vmem:[#allocation2 + $0x438] sm:$0xff] %vm3384, %v3022
    %3521 = vst.msk [vmem:[#allocation2 + $0x440] sm:$0xff] %vm3384, %v3025
    %3522 = vst.msk [vmem:[#allocation2 + $0x448] sm:$0xff] %vm3384, %v3028
    %3523 = vst.msk [vmem:[#allocation2 + $0x450] sm:$0xff] %vm3384, %v3031
    %3524 = vst.msk [vmem:[#allocation2 + $0x458] sm:$0xff] %vm3384, %v3034
    %3525 = vst.msk [vmem:[#allocation2 + $0x460] sm:$0xff] %vm3384, %v3037
    %3526 = vst.msk [vmem:[#allocation2 + $0x468] sm:$0xff] %vm3384, %v3040
    %3527 = vst.msk [vmem:[#allocation2 + $0x470] sm:$0xff] %vm3384, %v3043
    %3528 = vst.msk [vmem:[#allocation2 + $0x478] sm:$0xff] %vm3384, %v3046
    %3529 = vst.msk [vmem:[#allocation2 + $0x480] sm:$0xff] %vm3384, %v3049
    %3530 = vst.msk [vmem:[#allocation2 + $0x488] sm:$0xff] %vm3384, %v3052
    %3531 = vst.msk [vmem:[#allocation2 + $0x490] sm:$0xff] %vm3384, %v3055
    %3532 = vst.msk [vmem:[#allocation2 + $0x498] sm:$0xff] %vm3384, %v3058
    %3533 = vst.msk [vmem:[#allocation2 + $0x4a0] sm:$0xff] %vm3384, %v3061
    %3534 = vst.msk [vmem:[#allocation2 + $0x4a8] sm:$0xff] %vm3384, %v3064
    %3535 = vst.msk [vmem:[#allocation2 + $0x4b0] sm:$0xff] %vm3384, %v3067
    %3536 = vst.msk [vmem:[#allocation2 + $0x4b8] sm:$0xff] %vm3384, %v3070
    %3537 = vst.msk [vmem:[#allocation2 + $0x4c0] sm:$0xff] %vm3384, %v3073
    %3538 = vst.msk [vmem:[#allocation2 + $0x4c8] sm:$0xff] %vm3384, %v3076
    %3539 = vst.msk [vmem:[#allocation2 + $0x4d0] sm:$0xff] %vm3384, %v3079
    %3540 = vst.msk [vmem:[#allocation2 + $0x4d8] sm:$0xff] %vm3384, %v3082
    %3541 = vst.msk [vmem:[#allocation2 + $0x4e0] sm:$0xff] %vm3384, %v3085
    %3542 = vst.msk [vmem:[#allocation2 + $0x4e8] sm:$0xff] %vm3384, %v3088
    %3543 = vst.msk [vmem:[#allocation2 + $0x4f0] sm:$0xff] %vm3384, %v3091
    %3544 = vst.msk [vmem:[#allocation2 + $0x4f8] sm:$0xff] %vm3384, %v3094
    %3545 = vst.msk [vmem:[#allocation2 + $0x500] sm:$0xff] %vm3384, %v3097
    %3546 = vst.msk [vmem:[#allocation2 + $0x508] sm:$0xff] %vm3384, %v3100
    %3547 = vst.msk [vmem:[#allocation2 + $0x510] sm:$0xff] %vm3384, %v3103
    %3548 = vst.msk [vmem:[#allocation2 + $0x518] sm:$0xff] %vm3384, %v3106
    %3549 = vst.msk [vmem:[#allocation2 + $0x520] sm:$0xff] %vm3384, %v3109
    %3550 = vst.msk [vmem:[#allocation2 + $0x528] sm:$0xff] %vm3384, %v3112
    %3551 = vst.msk [vmem:[#allocation2 + $0x530] sm:$0xff] %vm3384, %v3115
    %3552 = vst.msk [vmem:[#allocation2 + $0x538] sm:$0xff] %vm3384, %v3118
    %3553 = vst.msk [vmem:[#allocation2 + $0x540] sm:$0xff] %vm3384, %v3121
    %3554 = vst.msk [vmem:[#allocation2 + $0x548] sm:$0xff] %vm3384, %v3124
    %3555 = vst.msk [vmem:[#allocation2 + $0x550] sm:$0xff] %vm3384, %v3127
    %3556 = vst.msk [vmem:[#allocation2 + $0x558] sm:$0xff] %vm3384, %v3130
    %3557 = vst.msk [vmem:[#allocation2 + $0x560] sm:$0xff] %vm3384, %v3133
    %3558 = vst.msk [vmem:[#allocation2 + $0x568] sm:$0xff] %vm3384, %v3136
    %3559 = vst.msk [vmem:[#allocation2 + $0x570] sm:$0xff] %vm3384, %v3139
    %3560 = vst.msk [vmem:[#allocation2 + $0x578] sm:$0xff] %vm3384, %v3142
    %3561 = vst.msk [vmem:[#allocation2 + $0x580] sm:$0xff] %vm3384, %v3145
    %3562 = vst.msk [vmem:[#allocation2 + $0x588] sm:$0xff] %vm3384, %v3148
    %3563 = vst.msk [vmem:[#allocation2 + $0x590] sm:$0xff] %vm3384, %v3151
    %3564 = vst.msk [vmem:[#allocation2 + $0x598] sm:$0xff] %vm3384, %v3154
    %3565 = vst.msk [vmem:[#allocation2 + $0x5a0] sm:$0xff] %vm3384, %v3157
    %3566 = vst.msk [vmem:[#allocation2 + $0x5a8] sm:$0xff] %vm3384, %v3160
    %3567 = vst.msk [vmem:[#allocation2 + $0x5b0] sm:$0xff] %vm3384, %v3163
    %3568 = vst.msk [vmem:[#allocation2 + $0x5b8] sm:$0xff] %vm3384, %v3166
    %3569 = vst.msk [vmem:[#allocation2 + $0x5c0] sm:$0xff] %vm3384, %v3169
    %3570 = vst.msk [vmem:[#allocation2 + $0x5c8] sm:$0xff] %vm3384, %v3172
    %3571 = vst.msk [vmem:[#allocation2 + $0x5d0] sm:$0xff] %vm3384, %v3175
    %3572 = vst.msk [vmem:[#allocation2 + $0x5d8] sm:$0xff] %vm3384, %v3178
    %3573 = vst.msk [vmem:[#allocation2 + $0x5e0] sm:$0xff] %vm3384, %v3181
    %3574 = vst.msk [vmem:[#allocation2 + $0x5e8] sm:$0xff] %vm3384, %v3184
    %3575 = vst.msk [vmem:[#allocation2 + $0x5f0] sm:$0xff] %vm3384, %v3187
    %3576 = vst.msk [vmem:[#allocation2 + $0x5f8] sm:$0xff] %vm3384, %v3190
    %3577 = vst.msk [vmem:[#allocation2 + $0x600] sm:$0xff] %vm3384, %v3193
    %3578 = vst.msk [vmem:[#allocation2 + $0x608] sm:$0xff] %vm3384, %v3196
    %3579 = vst.msk [vmem:[#allocation2 + $0x610] sm:$0xff] %vm3384, %v3199
    %3580 = vst.msk [vmem:[#allocation2 + $0x618] sm:$0xff] %vm3384, %v3202
    %3581 = vst.msk [vmem:[#allocation2 + $0x620] sm:$0xff] %vm3384, %v3205
    %3582 = vst.msk [vmem:[#allocation2 + $0x628] sm:$0xff] %vm3384, %v3208
    %3583 = vst.msk [vmem:[#allocation2 + $0x630] sm:$0xff] %vm3384, %v3211
    %3584 = vst.msk [vmem:[#allocation2 + $0x638] sm:$0xff] %vm3384, %v3214
    %3585 = vst.msk [vmem:[#allocation2 + $0x640] sm:$0xff] %vm3384, %v3217
    %3586 = vst.msk [vmem:[#allocation2 + $0x648] sm:$0xff] %vm3384, %v3220
    %3587 = vst.msk [vmem:[#allocation2 + $0x650] sm:$0xff] %vm3384, %v3223
    %3588 = vst.msk [vmem:[#allocation2 + $0x658] sm:$0xff] %vm3384, %v3226
    %3589 = vst.msk [vmem:[#allocation2 + $0x660] sm:$0xff] %vm3384, %v3229
    %3590 = vst.msk [vmem:[#allocation2 + $0x668] sm:$0xff] %vm3384, %v3232
    %3591 = vst.msk [vmem:[#allocation2 + $0x670] sm:$0xff] %vm3384, %v3235
    %3592 = vst.msk [vmem:[#allocation2 + $0x678] sm:$0xff] %vm3384, %v3238
    %3593 = vst.msk [vmem:[#allocation2 + $0x680] sm:$0xff] %vm3384, %v3241
    %3594 = vst.msk [vmem:[#allocation2 + $0x688] sm:$0xff] %vm3384, %v3244
    %3595 = vst.msk [vmem:[#allocation2 + $0x690] sm:$0xff] %vm3384, %v3247
    %3596 = vst.msk [vmem:[#allocation2 + $0x698] sm:$0xff] %vm3384, %v3250
    %3597 = vst.msk [vmem:[#allocation2 + $0x6a0] sm:$0xff] %vm3384, %v3253
    %3598 = vst.msk [vmem:[#allocation2 + $0x6a8] sm:$0xff] %vm3384, %v3256
    %3599 = vst.msk [vmem:[#allocation2 + $0x6b0] sm:$0xff] %vm3384, %v3259
    %3600 = vst.msk [vmem:[#allocation2 + $0x6b8] sm:$0xff] %vm3384, %v3262
    %3601 = vst.msk [vmem:[#allocation2 + $0x6c0] sm:$0xff] %vm3384, %v3265
    %3602 = vst.msk [vmem:[#allocation2 + $0x6c8] sm:$0xff] %vm3384, %v3268
    %3603 = vst.msk [vmem:[#allocation2 + $0x6d0] sm:$0xff] %vm3384, %v3271
    %3604 = vst.msk [vmem:[#allocation2 + $0x6d8] sm:$0xff] %vm3384, %v3274
    %3605 = vst.msk [vmem:[#allocation2 + $0x6e0] sm:$0xff] %vm3384, %v3277
    %3606 = vst.msk [vmem:[#allocation2 + $0x6e8] sm:$0xff] %vm3384, %v3280
    %3607 = vst.msk [vmem:[#allocation2 + $0x6f0] sm:$0xff] %vm3384, %v3283
    %3608 = vst.msk [vmem:[#allocation2 + $0x6f8] sm:$0xff] %vm3384, %v3286
    %3609 = vst.msk [vmem:[#allocation2 + $0x700] sm:$0xff] %vm3384, %v3289
    %3610 = vst.msk [vmem:[#allocation2 + $0x708] sm:$0xff] %vm3384, %v3292
    %3611 = vst.msk [vmem:[#allocation2 + $0x710] sm:$0xff] %vm3384, %v3295
    %3612 = vst.msk [vmem:[#allocation2 + $0x718] sm:$0xff] %vm3384, %v3298
    %3613 = vst.msk [vmem:[#allocation2 + $0x720] sm:$0xff] %vm3384, %v3301
    %3614 = vst.msk [vmem:[#allocation2 + $0x728] sm:$0xff] %vm3384, %v3304
    %3615 = vst.msk [vmem:[#allocation2 + $0x730] sm:$0xff] %vm3384, %v3307
    %3616 = vst.msk [vmem:[#allocation2 + $0x738] sm:$0xff] %vm3384, %v3310
    %3617 = vst.msk [vmem:[#allocation2 + $0x740] sm:$0xff] %vm3384, %v3313
    %3618 = vst.msk [vmem:[#allocation2 + $0x748] sm:$0xff] %vm3384, %v3316
    %3619 = vst.msk [vmem:[#allocation2 + $0x750] sm:$0xff] %vm3384, %v3319
    %3620 = vst.msk [vmem:[#allocation2 + $0x758] sm:$0xff] %vm3384, %v3322
    %3621 = vst.msk [vmem:[#allocation2 + $0x760] sm:$0xff] %vm3384, %v3325
    %3622 = vst.msk [vmem:[#allocation2 + $0x768] sm:$0xff] %vm3384, %v3328
    %3623 = vst.msk [vmem:[#allocation2 + $0x770] sm:$0xff] %vm3384, %v3331
    %3624 = vst.msk [vmem:[#allocation2 + $0x778] sm:$0xff] %vm3384, %v3334
    %3625 = vst.msk [vmem:[#allocation2 + $0x780] sm:$0xff] %vm3384, %v3337
    %3626 = vst.msk [vmem:[#allocation2 + $0x788] sm:$0xff] %vm3384, %v3340
    %3627 = vst.msk [vmem:[#allocation2 + $0x790] sm:$0xff] %vm3384, %v3343
    %3628 = vst.msk [vmem:[#allocation2 + $0x798] sm:$0xff] %vm3384, %v3346
    %3629 = vst.msk [vmem:[#allocation2 + $0x7a0] sm:$0xff] %vm3384, %v3349
    %3630 = vst.msk [vmem:[#allocation2 + $0x7a8] sm:$0xff] %vm3384, %v3352
    %3631 = vst.msk [vmem:[#allocation2 + $0x7b0] sm:$0xff] %vm3384, %v3355
    %3632 = vst.msk [vmem:[#allocation2 + $0x7b8] sm:$0xff] %vm3384, %v3358
    %3633 = vst.msk [vmem:[#allocation2 + $0x7c0] sm:$0xff] %vm3384, %v3361
    %3634 = vst.msk [vmem:[#allocation2 + $0x7c8] sm:$0xff] %vm3384, %v3364
    %3635 = vst.msk [vmem:[#allocation2 + $0x7d0] sm:$0xff] %vm3384, %v3367
    %3636 = vst.msk [vmem:[#allocation2 + $0x7d8] sm:$0xff] %vm3384, %v3370
    %3637 = vst.msk [vmem:[#allocation2 + $0x7e0] sm:$0xff] %vm3384, %v3373
    %3638 = vst.msk [vmem:[#allocation2 + $0x7e8] sm:$0xff] %vm3384, %v3376
    %3639 = vst.msk [vmem:[#allocation2 + $0x7f0] sm:$0xff] %vm3384, %v3379
    %3640 = vst.msk [vmem:[#allocation2 + $0x7f8] sm:$0xff] %vm3384, %v3382
    %v3641 = vld [vmem:[%s2] sm:$0xff]
    %v3642 = vld [vmem:[%s2 + $0x8] sm:$0xff]
    %v3643 = vld [vmem:[%s2 + $0x10] sm:$0xff]
    %v3644 = vld [vmem:[%s2 + $0x18] sm:$0xff]
    %v3645 = vld [vmem:[#allocation2] sm:$0xff]
    %v3646 = vld [vmem:[#allocation2 + $0x8] sm:$0xff]
    %v3647 = vld [vmem:[#allocation2 + $0x10] sm:$0xff]
    %v3648 = vld [vmem:[#allocation2 + $0x18] sm:$0xff]
    %v3649 = vld [vmem:[#allocation2 + $0x20] sm:$0xff]
    %v3650 = vld [vmem:[#allocation2 + $0x28] sm:$0xff]
    %v3651 = vld [vmem:[#allocation2 + $0x30] sm:$0xff]
    %v3652 = vld [vmem:[#allocation2 + $0x38] sm:$0xff]
    %v3653 = vld [vmem:[#allocation2 + $0x40] sm:$0xff]
    %v3654 = vld [vmem:[#allocation2 + $0x48] sm:$0xff]
    %v3655 = vld [vmem:[#allocation2 + $0x50] sm:$0xff]
    %v3656 = vld [vmem:[#allocation2 + $0x58] sm:$0xff]
    %v3657 = vld [vmem:[#allocation2 + $0x60] sm:$0xff]
    %v3658 = vld [vmem:[#allocation2 + $0x68] sm:$0xff]
    %v3659 = vld [vmem:[#allocation2 + $0x70] sm:$0xff]
    %v3660 = vld [vmem:[#allocation2 + $0x78] sm:$0xff]
    %v3661 = vld [vmem:[#allocation2 + $0x80] sm:$0xff]
    %v3662 = vld [vmem:[#allocation2 + $0x88] sm:$0xff]
    %v3663 = vld [vmem:[#allocation2 + $0x90] sm:$0xff]
    %v3664 = vld [vmem:[#allocation2 + $0x98] sm:$0xff]
    %v3665 = vld [vmem:[#allocation2 + $0xa0] sm:$0xff]
    %v3666 = vld [vmem:[#allocation2 + $0xa8] sm:$0xff]
    %v3667 = vld [vmem:[#allocation2 + $0xb0] sm:$0xff]
    %v3668 = vld [vmem:[#allocation2 + $0xb8] sm:$0xff]
    %v3669 = vld [vmem:[#allocation2 + $0xc0] sm:$0xff]
    %v3670 = vld [vmem:[#allocation2 + $0xc8] sm:$0xff]
    %v3671 = vld [vmem:[#allocation2 + $0xd0] sm:$0xff]
    %v3672 = vld [vmem:[#allocation2 + $0xd8] sm:$0xff]
    %v3673 = vld [vmem:[#allocation2 + $0xe0] sm:$0xff]
    %v3674 = vld [vmem:[#allocation2 + $0xe8] sm:$0xff]
    %v3675 = vld [vmem:[#allocation2 + $0xf0] sm:$0xff]
    %v3676 = vld [vmem:[#allocation2 + $0xf8] sm:$0xff]
    %v3677 = vtanh.pop %v3645
    %v3678 = vtanh.pop %v3646
    %v3679 = vtanh.pop %v3647
    %v3680 = vtanh.pop %v3648
    %v3681 = vtanh.pop %v3649
    %v3682 = vtanh.pop %v3650
    %v3683 = vtanh.pop %v3651
    %v3684 = vtanh.pop %v3652
    %v3685 = vtanh.pop %v3653
    %v3686 = vtanh.pop %v3654
    %v3687 = vtanh.pop %v3655
    %v3688 = vtanh.pop %v3656
    %v3689 = vtanh.pop %v3657
    %v3690 = vtanh.pop %v3658
    %v3691 = vtanh.pop %v3659
    %v3692 = vtanh.pop %v3660
    %v3693 = vtanh.pop %v3661
    %v3694 = vtanh.pop %v3662
    %v3695 = vtanh.pop %v3663
    %v3696 = vtanh.pop %v3664
    %v3697 = vtanh.pop %v3665
    %v3698 = vtanh.pop %v3666
    %v3699 = vtanh.pop %v3667
    %v3700 = vtanh.pop %v3668
    %v3701 = vtanh.pop %v3669
    %v3702 = vtanh.pop %v3670
    %v3703 = vtanh.pop %v3671
    %v3704 = vtanh.pop %v3672
    %v3705 = vtanh.pop %v3673
    %v3706 = vtanh.pop %v3674
    %v3707 = vtanh.pop %v3675
    %v3708 = vtanh.pop %v3676
    %v3709 = vld [vmem:[#allocation2 + $0x100] sm:$0xff]
    %v3710 = vld [vmem:[#allocation2 + $0x108] sm:$0xff]
    %v3711 = vld [vmem:[#allocation2 + $0x110] sm:$0xff]
    %v3712 = vld [vmem:[#allocation2 + $0x118] sm:$0xff]
    %v3713 = vld [vmem:[#allocation2 + $0x120] sm:$0xff]
    %v3714 = vld [vmem:[#allocation2 + $0x128] sm:$0xff]
    %v3715 = vld [vmem:[#allocation2 + $0x130] sm:$0xff]
    %v3716 = vld [vmem:[#allocation2 + $0x138] sm:$0xff]
    %v3717 = vld [vmem:[#allocation2 + $0x140] sm:$0xff]
    %v3718 = vld [vmem:[#allocation2 + $0x148] sm:$0xff]
    %v3719 = vld [vmem:[#allocation2 + $0x150] sm:$0xff]
    %v3720 = vld [vmem:[#allocation2 + $0x158] sm:$0xff]
    %v3721 = vld [vmem:[#allocation2 + $0x160] sm:$0xff]
    %v3722 = vld [vmem:[#allocation2 + $0x168] sm:$0xff]
    %v3723 = vld [vmem:[#allocation2 + $0x170] sm:$0xff]
    %v3724 = vld [vmem:[#allocation2 + $0x178] sm:$0xff]
    %v3725 = vld [vmem:[#allocation2 + $0x180] sm:$0xff]
    %v3726 = vld [vmem:[#allocation2 + $0x188] sm:$0xff]
    %v3727 = vld [vmem:[#allocation2 + $0x190] sm:$0xff]
    %v3728 = vld [vmem:[#allocation2 + $0x198] sm:$0xff]
    %v3729 = vld [vmem:[#allocation2 + $0x1a0] sm:$0xff]
    %v3730 = vld [vmem:[#allocation2 + $0x1a8] sm:$0xff]
    %v3731 = vld [vmem:[#allocation2 + $0x1b0] sm:$0xff]
    %v3732 = vld [vmem:[#allocation2 + $0x1b8] sm:$0xff]
    %v3733 = vld [vmem:[#allocation2 + $0x1c0] sm:$0xff]
    %v3734 = vld [vmem:[#allocation2 + $0x1c8] sm:$0xff]
    %v3735 = vld [vmem:[#allocation2 + $0x1d0] sm:$0xff]
    %v3736 = vld [vmem:[#allocation2 + $0x1d8] sm:$0xff]
    %v3737 = vld [vmem:[#allocation2 + $0x1e0] sm:$0xff]
    %v3738 = vld [vmem:[#allocation2 + $0x1e8] sm:$0xff]
    %v3739 = vld [vmem:[#allocation2 + $0x1f0] sm:$0xff]
    %v3740 = vld [vmem:[#allocation2 + $0x1f8] sm:$0xff]
    %v3742 = vsel %vm3384, %v3677, 0
    %v3745 = vsel %vm3384, %v3678, 0
    %v3748 = vsel %vm3384, %v3679, 0
    %v3751 = vsel %vm3384, %v3680, 0
    %v3754 = vsel %vm3384, %v3681, 0
    %v3757 = vsel %vm3384, %v3682, 0
    %v3760 = vsel %vm3384, %v3683, 0
    %v3763 = vsel %vm3384, %v3684, 0
    %v3766 = vsel %vm3384, %v3685, 0
    %v3769 = vsel %vm3384, %v3686, 0
    %v3772 = vsel %vm3384, %v3687, 0
    %v3775 = vsel %vm3384, %v3688, 0
    %v3778 = vsel %vm3384, %v3689, 0
    %v3781 = vsel %vm3384, %v3690, 0
    %v3784 = vsel %vm3384, %v3691, 0
    %v3787 = vsel %vm3384, %v3692, 0
    %v3790 = vsel %vm3384, %v3693, 0
    %v3793 = vsel %vm3384, %v3694, 0
    %v3796 = vsel %vm3384, %v3695, 0
    %v3799 = vsel %vm3384, %v3696, 0
    %v3802 = vsel %vm3384, %v3697, 0
    %v3805 = vsel %vm3384, %v3698, 0
    %v3808 = vsel %vm3384, %v3699, 0
    %v3811 = vsel %vm3384, %v3700, 0
    %v3814 = vsel %vm3384, %v3701, 0
    %v3817 = vsel %vm3384, %v3702, 0
    %v3820 = vsel %vm3384, %v3703, 0
    %v3823 = vsel %vm3384, %v3704, 0
    %v3826 = vsel %vm3384, %v3705, 0
    %v3829 = vsel %vm3384, %v3706, 0
    %v3832 = vsel %vm3384, %v3707, 0
    %v3835 = vsel %vm3384, %v3708, 0
    %3837 = vmatpush.msra.mxu0 0.0
    %3838 = vmatpush.msra.mxu0 0.0
    %3839 = vmatpush.msra.mxu0 0.0
    %3840 = vmatpush.msra.mxu0 0.0
    %3841 = vmatpush.msra.mxu0 0.0
    %3842 = vmatpush.msra.mxu0 0.0
    %3843 = vmatpush.msra.mxu0 0.0
    %3844 = vmatpush.msra.mxu0 0.0
    %3845 = vmatpush.msra.mxu0 0.0
    %3846 = vmatpush.msra.mxu0 0.0
    %3847 = vmatpush.msra.mxu0 0.0
    %3848 = vmatpush.msra.mxu0 0.0
    %3849 = vmatpush.msra.mxu0 %v3644
    %3850 = vmatpush.msra.mxu0 %v3643
    %3851 = vmatpush.msra.mxu0 %v3642
    %3852 = vmatpush.msra.mxu0 %v3641
    %3853 = vmatmul.f32.gmra.mxu0 %v3742
    %v3854 = vpop.f32.mrf.mxu0
    %v3855 = vadd.f32 0.0, %v3854
    %3856 = vmatmul.f32.gmra.mxu0 %v3745
    %v3857 = vpop.f32.mrf.mxu0
    %v3858 = vadd.f32 0.0, %v3857
    %3859 = vmatmul.f32.gmra.mxu0 %v3748
    %v3860 = vpop.f32.mrf.mxu0
    %v3861 = vadd.f32 0.0, %v3860
    %3862 = vmatmul.f32.gmra.mxu0 %v3751
    %v3863 = vpop.f32.mrf.mxu0
    %v3864 = vadd.f32 0.0, %v3863
    %3865 = vmatmul.f32.gmra.mxu0 %v3754
    %v3866 = vpop.f32.mrf.mxu0
    %v3867 = vadd.f32 0.0, %v3866
    %3868 = vmatmul.f32.gmra.mxu0 %v3757
    %v3869 = vpop.f32.mrf.mxu0
    %v3870 = vadd.f32 0.0, %v3869
    %3871 = vmatmul.f32.gmra.mxu0 %v3760
    %v3872 = vpop.f32.mrf.mxu0
    %v3873 = vadd.f32 0.0, %v3872
    %3874 = vmatmul.f32.gmra.mxu0 %v3763
    %v3875 = vpop.f32.mrf.mxu0
    %v3876 = vadd.f32 0.0, %v3875
    %3877 = vmatmul.f32.gmra.mxu0 %v3766
    %v3878 = vpop.f32.mrf.mxu0
    %v3879 = vadd.f32 0.0, %v3878
    %3880 = vmatmul.f32.gmra.mxu0 %v3769
    %v3881 = vpop.f32.mrf.mxu0
    %v3882 = vadd.f32 0.0, %v3881
    %3883 = vmatmul.f32.gmra.mxu0 %v3772
    %v3884 = vpop.f32.mrf.mxu0
    %v3885 = vadd.f32 0.0, %v3884
    %3886 = vmatmul.f32.gmra.mxu0 %v3775
    %v3887 = vpop.f32.mrf.mxu0
    %v3888 = vadd.f32 0.0, %v3887
    %3889 = vmatmul.f32.gmra.mxu0 %v3778
    %v3890 = vpop.f32.mrf.mxu0
    %v3891 = vadd.f32 0.0, %v3890
    %3892 = vmatmul.f32.gmra.mxu0 %v3781
    %v3893 = vpop.f32.mrf.mxu0
    %v3894 = vadd.f32 0.0, %v3893
    %3895 = vmatmul.f32.gmra.mxu0 %v3784
    %v3896 = vpop.f32.mrf.mxu0
    %v3897 = vadd.f32 0.0, %v3896
    %3898 = vmatmul.f32.gmra.mxu0 %v3787
    %v3899 = vpop.f32.mrf.mxu0
    %v3900 = vadd.f32 0.0, %v3899
    %3901 = vmatmul.f32.gmra.mxu0 %v3790
    %v3902 = vpop.f32.mrf.mxu0
    %v3903 = vadd.f32 0.0, %v3902
    %3904 = vmatmul.f32.gmra.mxu0 %v3793
    %v3905 = vpop.f32.mrf.mxu0
    %v3906 = vadd.f32 0.0, %v3905
    %3907 = vmatmul.f32.gmra.mxu0 %v3796
    %v3908 = vpop.f32.mrf.mxu0
    %v3909 = vadd.f32 0.0, %v3908
    %3910 = vmatmul.f32.gmra.mxu0 %v3799
    %v3911 = vpop.f32.mrf.mxu0
    %v3912 = vadd.f32 0.0, %v3911
    %3913 = vmatmul.f32.gmra.mxu0 %v3802
    %v3914 = vpop.f32.mrf.mxu0
    %v3915 = vadd.f32 0.0, %v3914
    %3916 = vmatmul.f32.gmra.mxu0 %v3805
    %v3917 = vpop.f32.mrf.mxu0
    %v3918 = vadd.f32 0.0, %v3917
    %3919 = vmatmul.f32.gmra.mxu0 %v3808
    %v3920 = vpop.f32.mrf.mxu0
    %v3921 = vadd.f32 0.0, %v3920
    %3922 = vmatmul.f32.gmra.mxu0 %v3811
    %v3923 = vpop.f32.mrf.mxu0
    %v3924 = vadd.f32 0.0, %v3923
    %3925 = vmatmul.f32.gmra.mxu0 %v3814
    %v3926 = vpop.f32.mrf.mxu0
    %v3927 = vadd.f32 0.0, %v3926
    %3928 = vmatmul.f32.gmra.mxu0 %v3817
    %v3929 = vpop.f32.mrf.mxu0
    %v3930 = vadd.f32 0.0, %v3929
    %3931 = vmatmul.f32.gmra.mxu0 %v3820
    %v3932 = vpop.f32.mrf.mxu0
    %v3933 = vadd.f32 0.0, %v3932
    %3934 = vmatmul.f32.gmra.mxu0 %v3823
    %v3935 = vpop.f32.mrf.mxu0
    %v3936 = vadd.f32 0.0, %v3935
    %3937 = vmatmul.f32.gmra.mxu0 %v3826
    %v3938 = vpop.f32.mrf.mxu0
    %v3939 = vadd.f32 0.0, %v3938
    %3940 = vmatmul.f32.gmra.mxu0 %v3829
    %v3941 = vpop.f32.mrf.mxu0
    %v3942 = vadd.f32 0.0, %v3941
    %3943 = vmatmul.f32.gmra.mxu0 %v3832
    %v3944 = vpop.f32.mrf.mxu0
    %v3945 = vadd.f32 0.0, %v3944
    %3946 = vmatmul.f32.gmra.mxu0 %v3835
    %v3947 = vpop.f32.mrf.mxu0
    %v3948 = vadd.f32 0.0, %v3947
    %3949 = vdwg.mxu0
    %v3950 = vadd.f32 %v3709, %v3855
    %v3951 = vadd.f32 %v3710, %v3858
    %v3952 = vadd.f32 %v3711, %v3861
    %v3953 = vadd.f32 %v3712, %v3864
    %v3954 = vadd.f32 %v3713, %v3867
    %v3955 = vadd.f32 %v3714, %v3870
    %v3956 = vadd.f32 %v3715, %v3873
    %v3957 = vadd.f32 %v3716, %v3876
    %v3958 = vadd.f32 %v3717, %v3879
    %v3959 = vadd.f32 %v3718, %v3882
    %v3960 = vadd.f32 %v3719, %v3885
    %v3961 = vadd.f32 %v3720, %v3888
    %v3962 = vadd.f32 %v3721, %v3891
    %v3963 = vadd.f32 %v3722, %v3894
    %v3964 = vadd.f32 %v3723, %v3897
    %v3965 = vadd.f32 %v3724, %v3900
    %v3966 = vadd.f32 %v3725, %v3903
    %v3967 = vadd.f32 %v3726, %v3906
    %v3968 = vadd.f32 %v3727, %v3909
    %v3969 = vadd.f32 %v3728, %v3912
    %v3970 = vadd.f32 %v3729, %v3915
    %v3971 = vadd.f32 %v3730, %v3918
    %v3972 = vadd.f32 %v3731, %v3921
    %v3973 = vadd.f32 %v3732, %v3924
    %v3974 = vadd.f32 %v3733, %v3927
    %v3975 = vadd.f32 %v3734, %v3930
    %v3976 = vadd.f32 %v3735, %v3933
    %v3977 = vadd.f32 %v3736, %v3936
    %v3978 = vadd.f32 %v3737, %v3939
    %v3979 = vadd.f32 %v3738, %v3942
    %v3980 = vadd.f32 %v3739, %v3945
    %v3981 = vadd.f32 %v3740, %v3948
    %v3982 = vtanh.pop %v3950
    %v3983 = vtanh.pop %v3951
    %v3984 = vtanh.pop %v3952
    %v3985 = vtanh.pop %v3953
    %v3986 = vtanh.pop %v3954
    %v3987 = vtanh.pop %v3955
    %v3988 = vtanh.pop %v3956
    %v3989 = vtanh.pop %v3957
    %v3990 = vtanh.pop %v3958
    %v3991 = vtanh.pop %v3959
    %v3992 = vtanh.pop %v3960
    %v3993 = vtanh.pop %v3961
    %v3994 = vtanh.pop %v3962
    %v3995 = vtanh.pop %v3963
    %v3996 = vtanh.pop %v3964
    %v3997 = vtanh.pop %v3965
    %v3998 = vtanh.pop %v3966
    %v3999 = vtanh.pop %v3967
    %v4000 = vtanh.pop %v3968
    %v4001 = vtanh.pop %v3969
    %v4002 = vtanh.pop %v3970
    %v4003 = vtanh.pop %v3971
    %v4004 = vtanh.pop %v3972
    %v4005 = vtanh.pop %v3973
    %v4006 = vtanh.pop %v3974
    %v4007 = vtanh.pop %v3975
    %v4008 = vtanh.pop %v3976
    %v4009 = vtanh.pop %v3977
    %v4010 = vtanh.pop %v3978
    %v4011 = vtanh.pop %v3979
    %v4012 = vtanh.pop %v3980
    %v4013 = vtanh.pop %v3981
    %v4014 = vld [vmem:[#allocation2 + $0x200] sm:$0xff]
    %v4015 = vld [vmem:[#allocation2 + $0x208] sm:$0xff]
    %v4016 = vld [vmem:[#allocation2 + $0x210] sm:$0xff]
    %v4017 = vld [vmem:[#allocation2 + $0x218] sm:$0xff]
    %v4018 = vld [vmem:[#allocation2 + $0x220] sm:$0xff]
    %v4019 = vld [vmem:[#allocation2 + $0x228] sm:$0xff]
    %v4020 = vld [vmem:[#allocation2 + $0x230] sm:$0xff]
    %v4021 = vld [vmem:[#allocation2 + $0x238] sm:$0xff]
    %v4022 = vld [vmem:[#allocation2 + $0x240] sm:$0xff]
    %v4023 = vld [vmem:[#allocation2 + $0x248] sm:$0xff]
    %v4024 = vld [vmem:[#allocation2 + $0x250] sm:$0xff]
    %v4025 = vld [vmem:[#allocation2 + $0x258] sm:$0xff]
    %v4026 = vld [vmem:[#allocation2 + $0x260] sm:$0xff]
    %v4027 = vld [vmem:[#allocation2 + $0x268] sm:$0xff]
    %v4028 = vld [vmem:[#allocation2 + $0x270] sm:$0xff]
    %v4029 = vld [vmem:[#allocation2 + $0x278] sm:$0xff]
    %v4030 = vld [vmem:[#allocation2 + $0x280] sm:$0xff]
    %v4031 = vld [vmem:[#allocation2 + $0x288] sm:$0xff]
    %v4032 = vld [vmem:[#allocation2 + $0x290] sm:$0xff]
    %v4033 = vld [vmem:[#allocation2 + $0x298] sm:$0xff]
    %v4034 = vld [vmem:[#allocation2 + $0x2a0] sm:$0xff]
    %v4035 = vld [vmem:[#allocation2 + $0x2a8] sm:$0xff]
    %v4036 = vld [vmem:[#allocation2 + $0x2b0] sm:$0xff]
    %v4037 = vld [vmem:[#allocation2 + $0x2b8] sm:$0xff]
    %v4038 = vld [vmem:[#allocation2 + $0x2c0] sm:$0xff]
    %v4039 = vld [vmem:[#allocation2 + $0x2c8] sm:$0xff]
    %v4040 = vld [vmem:[#allocation2 + $0x2d0] sm:$0xff]
    %v4041 = vld [vmem:[#allocation2 + $0x2d8] sm:$0xff]
    %v4042 = vld [vmem:[#allocation2 + $0x2e0] sm:$0xff]
    %v4043 = vld [vmem:[#allocation2 + $0x2e8] sm:$0xff]
    %v4044 = vld [vmem:[#allocation2 + $0x2f0] sm:$0xff]
    %v4045 = vld [vmem:[#allocation2 + $0x2f8] sm:$0xff]
    %v4047 = vsel %vm3384, %v3982, 0
    %v4050 = vsel %vm3384, %v3983, 0
    %v4053 = vsel %vm3384, %v3984, 0
    %v4056 = vsel %vm3384, %v3985, 0
    %v4059 = vsel %vm3384, %v3986, 0
    %v4062 = vsel %vm3384, %v3987, 0
    %v4065 = vsel %vm3384, %v3988, 0
    %v4068 = vsel %vm3384, %v3989, 0
    %v4071 = vsel %vm3384, %v3990, 0
    %v4074 = vsel %vm3384, %v3991, 0
    %v4077 = vsel %vm3384, %v3992, 0
    %v4080 = vsel %vm3384, %v3993, 0
    %v4083 = vsel %vm3384, %v3994, 0
    %v4086 = vsel %vm3384, %v3995, 0
    %v4089 = vsel %vm3384, %v3996, 0
    %v4092 = vsel %vm3384, %v3997, 0
    %v4095 = vsel %vm3384, %v3998, 0
    %v4098 = vsel %vm3384, %v3999, 0
    %v4101 = vsel %vm3384, %v4000, 0
    %v4104 = vsel %vm3384, %v4001, 0
    %v4107 = vsel %vm3384, %v4002, 0
    %v4110 = vsel %vm3384, %v4003, 0
    %v4113 = vsel %vm3384, %v4004, 0
    %v4116 = vsel %vm3384, %v4005, 0
    %v4119 = vsel %vm3384, %v4006, 0
    %v4122 = vsel %vm3384, %v4007, 0
    %v4125 = vsel %vm3384, %v4008, 0
    %v4128 = vsel %vm3384, %v4009, 0
    %v4131 = vsel %vm3384, %v4010, 0
    %v4134 = vsel %vm3384, %v4011, 0
    %v4137 = vsel %vm3384, %v4012, 0
    %v4140 = vsel %vm3384, %v4013, 0
    %4142 = vmatpush.msra.mxu0 0.0
    %4143 = vmatpush.msra.mxu0 0.0
    %4144 = vmatpush.msra.mxu0 0.0
    %4145 = vmatpush.msra.mxu0 0.0
    %4146 = vmatpush.msra.mxu0 0.0
    %4147 = vmatpush.msra.mxu0 0.0
    %4148 = vmatpush.msra.mxu0 0.0
    %4149 = vmatpush.msra.mxu0 0.0
    %4150 = vmatpush.msra.mxu0 0.0
    %4151 = vmatpush.msra.mxu0 0.0
    %4152 = vmatpush.msra.mxu0 0.0
    %4153 = vmatpush.msra.mxu0 0.0
    %4154 = vmatpush.msra.mxu0 %v3644
    %4155 = vmatpush.msra.mxu0 %v3643
    %4156 = vmatpush.msra.mxu0 %v3642
    %4157 = vmatpush.msra.mxu0 %v3641
    %4158 = vmatmul.f32.gmra.mxu0 %v4047
    %v4159 = vpop.f32.mrf.mxu0
    %v4160 = vadd.f32 0.0, %v4159
    %4161 = vmatmul.f32.gmra.mxu0 %v4050
    %v4162 = vpop.f32.mrf.mxu0
    %v4163 = vadd.f32 0.0, %v4162
    %4164 = vmatmul.f32.gmra.mxu0 %v4053
    %v4165 = vpop.f32.mrf.mxu0
    %v4166 = vadd.f32 0.0, %v4165
    %4167 = vmatmul.f32.gmra.mxu0 %v4056
    %v4168 = vpop.f32.mrf.mxu0
    %v4169 = vadd.f32 0.0, %v4168
    %4170 = vmatmul.f32.gmra.mxu0 %v4059
    %v4171 = vpop.f32.mrf.mxu0
    %v4172 = vadd.f32 0.0, %v4171
    %4173 = vmatmul.f32.gmra.mxu0 %v4062
    %v4174 = vpop.f32.mrf.mxu0
    %v4175 = vadd.f32 0.0, %v4174
    %4176 = vmatmul.f32.gmra.mxu0 %v4065
    %v4177 = vpop.f32.mrf.mxu0
    %v4178 = vadd.f32 0.0, %v4177
    %4179 = vmatmul.f32.gmra.mxu0 %v4068
    %v4180 = vpop.f32.mrf.mxu0
    %v4181 = vadd.f32 0.0, %v4180
    %4182 = vmatmul.f32.gmra.mxu0 %v4071
    %v4183 = vpop.f32.mrf.mxu0
    %v4184 = vadd.f32 0.0, %v4183
    %4185 = vmatmul.f32.gmra.mxu0 %v4074
    %v4186 = vpop.f32.mrf.mxu0
    %v4187 = vadd.f32 0.0, %v4186
    %4188 = vmatmul.f32.gmra.mxu0 %v4077
    %v4189 = vpop.f32.mrf.mxu0
    %v4190 = vadd.f32 0.0, %v4189
    %4191 = vmatmul.f32.gmra.mxu0 %v4080
    %v4192 = vpop.f32.mrf.mxu0
    %v4193 = vadd.f32 0.0, %v4192
    %4194 = vmatmul.f32.gmra.mxu0 %v4083
    %v4195 = vpop.f32.mrf.mxu0
    %v4196 = vadd.f32 0.0, %v4195
    %4197 = vmatmul.f32.gmra.mxu0 %v4086
    %v4198 = vpop.f32.mrf.mxu0
    %v4199 = vadd.f32 0.0, %v4198
    %4200 = vmatmul.f32.gmra.mxu0 %v4089
    %v4201 = vpop.f32.mrf.mxu0
    %v4202 = vadd.f32 0.0, %v4201
    %4203 = vmatmul.f32.gmra.mxu0 %v4092
    %v4204 = vpop.f32.mrf.mxu0
    %v4205 = vadd.f32 0.0, %v4204
    %4206 = vmatmul.f32.gmra.mxu0 %v4095
    %v4207 = vpop.f32.mrf.mxu0
    %v4208 = vadd.f32 0.0, %v4207
    %4209 = vmatmul.f32.gmra.mxu0 %v4098
    %v4210 = vpop.f32.mrf.mxu0
    %v4211 = vadd.f32 0.0, %v4210
    %4212 = vmatmul.f32.gmra.mxu0 %v4101
    %v4213 = vpop.f32.mrf.mxu0
    %v4214 = vadd.f32 0.0, %v4213
    %4215 = vmatmul.f32.gmra.mxu0 %v4104
    %v4216 = vpop.f32.mrf.mxu0
    %v4217 = vadd.f32 0.0, %v4216
    %4218 = vmatmul.f32.gmra.mxu0 %v4107
    %v4219 = vpop.f32.mrf.mxu0
    %v4220 = vadd.f32 0.0, %v4219
    %4221 = vmatmul.f32.gmra.mxu0 %v4110
    %v4222 = vpop.f32.mrf.mxu0
    %v4223 = vadd.f32 0.0, %v4222
    %4224 = vmatmul.f32.gmra.mxu0 %v4113
    %v4225 = vpop.f32.mrf.mxu0
    %v4226 = vadd.f32 0.0, %v4225
    %4227 = vmatmul.f32.gmra.mxu0 %v4116
    %v4228 = vpop.f32.mrf.mxu0
    %v4229 = vadd.f32 0.0, %v4228
    %4230 = vmatmul.f32.gmra.mxu0 %v4119
    %v4231 = vpop.f32.mrf.mxu0
    %v4232 = vadd.f32 0.0, %v4231
    %4233 = vmatmul.f32.gmra.mxu0 %v4122
    %v4234 = vpop.f32.mrf.mxu0
    %v4235 = vadd.f32 0.0, %v4234
    %4236 = vmatmul.f32.gmra.mxu0 %v4125
    %v4237 = vpop.f32.mrf.mxu0
    %v4238 = vadd.f32 0.0, %v4237
    %4239 = vmatmul.f32.gmra.mxu0 %v4128
    %v4240 = vpop.f32.mrf.mxu0
    %v4241 = vadd.f32 0.0, %v4240
    %4242 = vmatmul.f32.gmra.mxu0 %v4131
    %v4243 = vpop.f32.mrf.mxu0
    %v4244 = vadd.f32 0.0, %v4243
    %4245 = vmatmul.f32.gmra.mxu0 %v4134
    %v4246 = vpop.f32.mrf.mxu0
    %v4247 = vadd.f32 0.0, %v4246
    %4248 = vmatmul.f32.gmra.mxu0 %v4137
    %v4249 = vpop.f32.mrf.mxu0
    %v4250 = vadd.f32 0.0, %v4249
    %4251 = vmatmul.f32.gmra.mxu0 %v4140
    %v4252 = vpop.f32.mrf.mxu0
    %v4253 = vadd.f32 0.0, %v4252
    %4254 = vdwg.mxu0
    %v4255 = vadd.f32 %v4014, %v4160
    %v4256 = vadd.f32 %v4015, %v4163
    %v4257 = vadd.f32 %v4016, %v4166
    %v4258 = vadd.f32 %v4017, %v4169
    %v4259 = vadd.f32 %v4018, %v4172
    %v4260 = vadd.f32 %v4019, %v4175
    %v4261 = vadd.f32 %v4020, %v4178
    %v4262 = vadd.f32 %v4021, %v4181
    %v4263 = vadd.f32 %v4022, %v4184
    %v4264 = vadd.f32 %v4023, %v4187
    %v4265 = vadd.f32 %v4024, %v4190
    %v4266 = vadd.f32 %v4025, %v4193
    %v4267 = vadd.f32 %v4026, %v4196
    %v4268 = vadd.f32 %v4027, %v4199
    %v4269 = vadd.f32 %v4028, %v4202
    %v4270 = vadd.f32 %v4029, %v4205
    %v4271 = vadd.f32 %v4030, %v4208
    %v4272 = vadd.f32 %v4031, %v4211
    %v4273 = vadd.f32 %v4032, %v4214
    %v4274 = vadd.f32 %v4033, %v4217
    %v4275 = vadd.f32 %v4034, %v4220
    %v4276 = vadd.f32 %v4035, %v4223
    %v4277 = vadd.f32 %v4036, %v4226
    %v4278 = vadd.f32 %v4037, %v4229
    %v4279 = vadd.f32 %v4038, %v4232
    %v4280 = vadd.f32 %v4039, %v4235
    %v4281 = vadd.f32 %v4040, %v4238
    %v4282 = vadd.f32 %v4041, %v4241
    %v4283 = vadd.f32 %v4042, %v4244
    %v4284 = vadd.f32 %v4043, %v4247
    %v4285 = vadd.f32 %v4044, %v4250
    %v4286 = vadd.f32 %v4045, %v4253
    %v4287 = vtanh.pop %v4255
    %v4288 = vtanh.pop %v4256
    %v4289 = vtanh.pop %v4257
    %v4290 = vtanh.pop %v4258
    %v4291 = vtanh.pop %v4259
    %v4292 = vtanh.pop %v4260
    %v4293 = vtanh.pop %v4261
    %v4294 = vtanh.pop %v4262
    %v4295 = vtanh.pop %v4263
    %v4296 = vtanh.pop %v4264
    %v4297 = vtanh.pop %v4265
    %v4298 = vtanh.pop %v4266
    %v4299 = vtanh.pop %v4267
    %v4300 = vtanh.pop %v4268
    %v4301 = vtanh.pop %v4269
    %v4302 = vtanh.pop %v4270
    %v4303 = vtanh.pop %v4271
    %v4304 = vtanh.pop %v4272
    %v4305 = vtanh.pop %v4273
    %v4306 = vtanh.pop %v4274
    %v4307 = vtanh.pop %v4275
    %v4308 = vtanh.pop %v4276
    %v4309 = vtanh.pop %v4277
    %v4310 = vtanh.pop %v4278
    %v4311 = vtanh.pop %v4279
    %v4312 = vtanh.pop %v4280
    %v4313 = vtanh.pop %v4281
    %v4314 = vtanh.pop %v4282
    %v4315 = vtanh.pop %v4283
    %v4316 = vtanh.pop %v4284
    %v4317 = vtanh.pop %v4285
    %v4318 = vtanh.pop %v4286
    %v4319 = vld [vmem:[#allocation2 + $0x300] sm:$0xff]
    %v4320 = vld [vmem:[#allocation2 + $0x308] sm:$0xff]
    %v4321 = vld [vmem:[#allocation2 + $0x310] sm:$0xff]
    %v4322 = vld [vmem:[#allocation2 + $0x318] sm:$0xff]
    %v4323 = vld [vmem:[#allocation2 + $0x320] sm:$0xff]
    %v4324 = vld [vmem:[#allocation2 + $0x328] sm:$0xff]
    %v4325 = vld [vmem:[#allocation2 + $0x330] sm:$0xff]
    %v4326 = vld [vmem:[#allocation2 + $0x338] sm:$0xff]
    %v4327 = vld [vmem:[#allocation2 + $0x340] sm:$0xff]
    %v4328 = vld [vmem:[#allocation2 + $0x348] sm:$0xff]
    %v4329 = vld [vmem:[#allocation2 + $0x350] sm:$0xff]
    %v4330 = vld [vmem:[#allocation2 + $0x358] sm:$0xff]
    %v4331 = vld [vmem:[#allocation2 + $0x360] sm:$0xff]
    %v4332 = vld [vmem:[#allocation2 + $0x368] sm:$0xff]
    %v4333 = vld [vmem:[#allocation2 + $0x370] sm:$0xff]
    %v4334 = vld [vmem:[#allocation2 + $0x378] sm:$0xff]
    %v4335 = vld [vmem:[#allocation2 + $0x380] sm:$0xff]
    %v4336 = vld [vmem:[#allocation2 + $0x388] sm:$0xff]
    %v4337 = vld [vmem:[#allocation2 + $0x390] sm:$0xff]
    %v4338 = vld [vmem:[#allocation2 + $0x398] sm:$0xff]
    %v4339 = vld [vmem:[#allocation2 + $0x3a0] sm:$0xff]
    %v4340 = vld [vmem:[#allocation2 + $0x3a8] sm:$0xff]
    %v4341 = vld [vmem:[#allocation2 + $0x3b0] sm:$0xff]
    %v4342 = vld [vmem:[#allocation2 + $0x3b8] sm:$0xff]
    %v4343 = vld [vmem:[#allocation2 + $0x3c0] sm:$0xff]
    %v4344 = vld [vmem:[#allocation2 + $0x3c8] sm:$0xff]
    %v4345 = vld [vmem:[#allocation2 + $0x3d0] sm:$0xff]
    %v4346 = vld [vmem:[#allocation2 + $0x3d8] sm:$0xff]
    %v4347 = vld [vmem:[#allocation2 + $0x3e0] sm:$0xff]
    %v4348 = vld [vmem:[#allocation2 + $0x3e8] sm:$0xff]
    %v4349 = vld [vmem:[#allocation2 + $0x3f0] sm:$0xff]
    %v4350 = vld [vmem:[#allocation2 + $0x3f8] sm:$0xff]
    %v4352 = vsel %vm3384, %v4287, 0
    %v4355 = vsel %vm3384, %v4288, 0
    %v4358 = vsel %vm3384, %v4289, 0
    %v4361 = vsel %vm3384, %v4290, 0
    %v4364 = vsel %vm3384, %v4291, 0
    %v4367 = vsel %vm3384, %v4292, 0
    %v4370 = vsel %vm3384, %v4293, 0
    %v4373 = vsel %vm3384, %v4294, 0
    %v4376 = vsel %vm3384, %v4295, 0
    %v4379 = vsel %vm3384, %v4296, 0
    %v4382 = vsel %vm3384, %v4297, 0
    %v4385 = vsel %vm3384, %v4298, 0
    %v4388 = vsel %vm3384, %v4299, 0
    %v4391 = vsel %vm3384, %v4300, 0
    %v4394 = vsel %vm3384, %v4301, 0
    %v4397 = vsel %vm3384, %v4302, 0
    %v4400 = vsel %vm3384, %v4303, 0
    %v4403 = vsel %vm3384, %v4304, 0
    %v4406 = vsel %vm3384, %v4305, 0
    %v4409 = vsel %vm3384, %v4306, 0
    %v4412 = vsel %vm3384, %v4307, 0
    %v4415 = vsel %vm3384, %v4308, 0
    %v4418 = vsel %vm3384, %v4309, 0
    %v4421 = vsel %vm3384, %v4310, 0
    %v4424 = vsel %vm3384, %v4311, 0
    %v4427 = vsel %vm3384, %v4312, 0
    %v4430 = vsel %vm3384, %v4313, 0
    %v4433 = vsel %vm3384, %v4314, 0
    %v4436 = vsel %vm3384, %v4315, 0
    %v4439 = vsel %vm3384, %v4316, 0
    %v4442 = vsel %vm3384, %v4317, 0
    %v4445 = vsel %vm3384, %v4318, 0
    %4447 = vmatpush.msra.mxu0 0.0
    %4448 = vmatpush.msra.mxu0 0.0
    %4449 = vmatpush.msra.mxu0 0.0
    %4450 = vmatpush.msra.mxu0 0.0
    %4451 = vmatpush.msra.mxu0 0.0
    %4452 = vmatpush.msra.mxu0 0.0
    %4453 = vmatpush.msra.mxu0 0.0
    %4454 = vmatpush.msra.mxu0 0.0
    %4455 = vmatpush.msra.mxu0 0.0
    %4456 = vmatpush.msra.mxu0 0.0
    %4457 = vmatpush.msra.mxu0 0.0
    %4458 = vmatpush.msra.mxu0 0.0
    %4459 = vmatpush.msra.mxu0 %v3644
    %4460 = vmatpush.msra.mxu0 %v3643
    %4461 = vmatpush.msra.mxu0 %v3642
    %4462 = vmatpush.msra.mxu0 %v3641
    %4463 = vmatmul.f32.gmra.mxu0 %v4352
    %v4464 = vpop.f32.mrf.mxu0
    %v4465 = vadd.f32 0.0, %v4464
    %4466 = vmatmul.f32.gmra.mxu0 %v4355
    %v4467 = vpop.f32.mrf.mxu0
    %v4468 = vadd.f32 0.0, %v4467
    %4469 = vmatmul.f32.gmra.mxu0 %v4358
    %v4470 = vpop.f32.mrf.mxu0
    %v4471 = vadd.f32 0.0, %v4470
    %4472 = vmatmul.f32.gmra.mxu0 %v4361
    %v4473 = vpop.f32.mrf.mxu0
    %v4474 = vadd.f32 0.0, %v4473
    %4475 = vmatmul.f32.gmra.mxu0 %v4364
    %v4476 = vpop.f32.mrf.mxu0
    %v4477 = vadd.f32 0.0, %v4476
    %4478 = vmatmul.f32.gmra.mxu0 %v4367
    %v4479 = vpop.f32.mrf.mxu0
    %v4480 = vadd.f32 0.0, %v4479
    %4481 = vmatmul.f32.gmra.mxu0 %v4370
    %v4482 = vpop.f32.mrf.mxu0
    %v4483 = vadd.f32 0.0, %v4482
    %4484 = vmatmul.f32.gmra.mxu0 %v4373
    %v4485 = vpop.f32.mrf.mxu0
    %v4486 = vadd.f32 0.0, %v4485
    %4487 = vmatmul.f32.gmra.mxu0 %v4376
    %v4488 = vpop.f32.mrf.mxu0
    %v4489 = vadd.f32 0.0, %v4488
    %4490 = vmatmul.f32.gmra.mxu0 %v4379
    %v4491 = vpop.f32.mrf.mxu0
    %v4492 = vadd.f32 0.0, %v4491
    %4493 = vmatmul.f32.gmra.mxu0 %v4382
    %v4494 = vpop.f32.mrf.mxu0
    %v4495 = vadd.f32 0.0, %v4494
    %4496 = vmatmul.f32.gmra.mxu0 %v4385
    %v4497 = vpop.f32.mrf.mxu0
    %v4498 = vadd.f32 0.0, %v4497
    %4499 = vmatmul.f32.gmra.mxu0 %v4388
    %v4500 = vpop.f32.mrf.mxu0
    %v4501 = vadd.f32 0.0, %v4500
    %4502 = vmatmul.f32.gmra.mxu0 %v4391
    %v4503 = vpop.f32.mrf.mxu0
    %v4504 = vadd.f32 0.0, %v4503
    %4505 = vmatmul.f32.gmra.mxu0 %v4394
    %v4506 = vpop.f32.mrf.mxu0
    %v4507 = vadd.f32 0.0, %v4506
    %4508 = vmatmul.f32.gmra.mxu0 %v4397
    %v4509 = vpop.f32.mrf.mxu0
    %v4510 = vadd.f32 0.0, %v4509
    %4511 = vmatmul.f32.gmra.mxu0 %v4400
    %v4512 = vpop.f32.mrf.mxu0
    %v4513 = vadd.f32 0.0, %v4512
    %4514 = vmatmul.f32.gmra.mxu0 %v4403
    %v4515 = vpop.f32.mrf.mxu0
    %v4516 = vadd.f32 0.0, %v4515
    %4517 = vmatmul.f32.gmra.mxu0 %v4406
    %v4518 = vpop.f32.mrf.mxu0
    %v4519 = vadd.f32 0.0, %v4518
    %4520 = vmatmul.f32.gmra.mxu0 %v4409
    %v4521 = vpop.f32.mrf.mxu0
    %v4522 = vadd.f32 0.0, %v4521
    %4523 = vmatmul.f32.gmra.mxu0 %v4412
    %v4524 = vpop.f32.mrf.mxu0
    %v4525 = vadd.f32 0.0, %v4524
    %4526 = vmatmul.f32.gmra.mxu0 %v4415
    %v4527 = vpop.f32.mrf.mxu0
    %v4528 = vadd.f32 0.0, %v4527
    %4529 = vmatmul.f32.gmra.mxu0 %v4418
    %v4530 = vpop.f32.mrf.mxu0
    %v4531 = vadd.f32 0.0, %v4530
    %4532 = vmatmul.f32.gmra.mxu0 %v4421
    %v4533 = vpop.f32.mrf.mxu0
    %v4534 = vadd.f32 0.0, %v4533
    %4535 = vmatmul.f32.gmra.mxu0 %v4424
    %v4536 = vpop.f32.mrf.mxu0
    %v4537 = vadd.f32 0.0, %v4536
    %4538 = vmatmul.f32.gmra.mxu0 %v4427
    %v4539 = vpop.f32.mrf.mxu0
    %v4540 = vadd.f32 0.0, %v4539
    %4541 = vmatmul.f32.gmra.mxu0 %v4430
    %v4542 = vpop.f32.mrf.mxu0
    %v4543 = vadd.f32 0.0, %v4542
    %4544 = vmatmul.f32.gmra.mxu0 %v4433
    %v4545 = vpop.f32.mrf.mxu0
    %v4546 = vadd.f32 0.0, %v4545
    %4547 = vmatmul.f32.gmra.mxu0 %v4436
    %v4548 = vpop.f32.mrf.mxu0
    %v4549 = vadd.f32 0.0, %v4548
    %4550 = vmatmul.f32.gmra.mxu0 %v4439
    %v4551 = vpop.f32.mrf.mxu0
    %v4552 = vadd.f32 0.0, %v4551
    %4553 = vmatmul.f32.gmra.mxu0 %v4442
    %v4554 = vpop.f32.mrf.mxu0
    %v4555 = vadd.f32 0.0, %v4554
    %4556 = vmatmul.f32.gmra.mxu0 %v4445
    %v4557 = vpop.f32.mrf.mxu0
    %v4558 = vadd.f32 0.0, %v4557
    %4559 = vdwg.mxu0
    %v4560 = vadd.f32 %v4319, %v4465
    %v4561 = vadd.f32 %v4320, %v4468
    %v4562 = vadd.f32 %v4321, %v4471
    %v4563 = vadd.f32 %v4322, %v4474
    %v4564 = vadd.f32 %v4323, %v4477
    %v4565 = vadd.f32 %v4324, %v4480
    %v4566 = vadd.f32 %v4325, %v4483
    %v4567 = vadd.f32 %v4326, %v4486
    %v4568 = vadd.f32 %v4327, %v4489
    %v4569 = vadd.f32 %v4328, %v4492
    %v4570 = vadd.f32 %v4329, %v4495
    %v4571 = vadd.f32 %v4330, %v4498
    %v4572 = vadd.f32 %v4331, %v4501
    %v4573 = vadd.f32 %v4332, %v4504
    %v4574 = vadd.f32 %v4333, %v4507
    %v4575 = vadd.f32 %v4334, %v4510
    %v4576 = vadd.f32 %v4335, %v4513
    %v4577 = vadd.f32 %v4336, %v4516
    %v4578 = vadd.f32 %v4337, %v4519
    %v4579 = vadd.f32 %v4338, %v4522
    %v4580 = vadd.f32 %v4339, %v4525
    %v4581 = vadd.f32 %v4340, %v4528
    %v4582 = vadd.f32 %v4341, %v4531
    %v4583 = vadd.f32 %v4342, %v4534
    %v4584 = vadd.f32 %v4343, %v4537
    %v4585 = vadd.f32 %v4344, %v4540
    %v4586 = vadd.f32 %v4345, %v4543
    %v4587 = vadd.f32 %v4346, %v4546
    %v4588 = vadd.f32 %v4347, %v4549
    %v4589 = vadd.f32 %v4348, %v4552
    %v4590 = vadd.f32 %v4349, %v4555
    %v4591 = vadd.f32 %v4350, %v4558
    %v4592 = vtanh.pop %v4560
    %v4593 = vtanh.pop %v4561
    %v4594 = vtanh.pop %v4562
    %v4595 = vtanh.pop %v4563
    %v4596 = vtanh.pop %v4564
    %v4597 = vtanh.pop %v4565
    %v4598 = vtanh.pop %v4566
    %v4599 = vtanh.pop %v4567
    %v4600 = vtanh.pop %v4568
    %v4601 = vtanh.pop %v4569
    %v4602 = vtanh.pop %v4570
    %v4603 = vtanh.pop %v4571
    %v4604 = vtanh.pop %v4572
    %v4605 = vtanh.pop %v4573
    %v4606 = vtanh.pop %v4574
    %v4607 = vtanh.pop %v4575
    %v4608 = vtanh.pop %v4576
    %v4609 = vtanh.pop %v4577
    %v4610 = vtanh.pop %v4578
    %v4611 = vtanh.pop %v4579
    %v4612 = vtanh.pop %v4580
    %v4613 = vtanh.pop %v4581
    %v4614 = vtanh.pop %v4582
    %v4615 = vtanh.pop %v4583
    %v4616 = vtanh.pop %v4584
    %v4617 = vtanh.pop %v4585
    %v4618 = vtanh.pop %v4586
    %v4619 = vtanh.pop %v4587
    %v4620 = vtanh.pop %v4588
    %v4621 = vtanh.pop %v4589
    %v4622 = vtanh.pop %v4590
    %v4623 = vtanh.pop %v4591
    %v4624 = vld [vmem:[#allocation2 + $0x400] sm:$0xff]
    %v4625 = vld [vmem:[#allocation2 + $0x408] sm:$0xff]
    %v4626 = vld [vmem:[#allocation2 + $0x410] sm:$0xff]
    %v4627 = vld [vmem:[#allocation2 + $0x418] sm:$0xff]
    %v4628 = vld [vmem:[#allocation2 + $0x420] sm:$0xff]
    %v4629 = vld [vmem:[#allocation2 + $0x428] sm:$0xff]
    %v4630 = vld [vmem:[#allocation2 + $0x430] sm:$0xff]
    %v4631 = vld [vmem:[#allocation2 + $0x438] sm:$0xff]
    %v4632 = vld [vmem:[#allocation2 + $0x440] sm:$0xff]
    %v4633 = vld [vmem:[#allocation2 + $0x448] sm:$0xff]
    %v4634 = vld [vmem:[#allocation2 + $0x450] sm:$0xff]
    %v4635 = vld [vmem:[#allocation2 + $0x458] sm:$0xff]
    %v4636 = vld [vmem:[#allocation2 + $0x460] sm:$0xff]
    %v4637 = vld [vmem:[#allocation2 + $0x468] sm:$0xff]
    %v4638 = vld [vmem:[#allocation2 + $0x470] sm:$0xff]
    %v4639 = vld [vmem:[#allocation2 + $0x478] sm:$0xff]
    %v4640 = vld [vmem:[#allocation2 + $0x480] sm:$0xff]
    %v4641 = vld [vmem:[#allocation2 + $0x488] sm:$0xff]
    %v4642 = vld [vmem:[#allocation2 + $0x490] sm:$0xff]
    %v4643 = vld [vmem:[#allocation2 + $0x498] sm:$0xff]
    %v4644 = vld [vmem:[#allocation2 + $0x4a0] sm:$0xff]
    %v4645 = vld [vmem:[#allocation2 + $0x4a8] sm:$0xff]
    %v4646 = vld [vmem:[#allocation2 + $0x4b0] sm:$0xff]
    %v4647 = vld [vmem:[#allocation2 + $0x4b8] sm:$0xff]
    %v4648 = vld [vmem:[#allocation2 + $0x4c0] sm:$0xff]
    %v4649 = vld [vmem:[#allocation2 + $0x4c8] sm:$0xff]
    %v4650 = vld [vmem:[#allocation2 + $0x4d0] sm:$0xff]
    %v4651 = vld [vmem:[#allocation2 + $0x4d8] sm:$0xff]
    %v4652 = vld [vmem:[#allocation2 + $0x4e0] sm:$0xff]
    %v4653 = vld [vmem:[#allocation2 + $0x4e8] sm:$0xff]
    %v4654 = vld [vmem:[#allocation2 + $0x4f0] sm:$0xff]
    %v4655 = vld [vmem:[#allocation2 + $0x4f8] sm:$0xff]
    %v4657 = vsel %vm3384, %v4592, 0
    %v4660 = vsel %vm3384, %v4593, 0
    %v4663 = vsel %vm3384, %v4594, 0
    %v4666 = vsel %vm3384, %v4595, 0
    %v4669 = vsel %vm3384, %v4596, 0
    %v4672 = vsel %vm3384, %v4597, 0
    %v4675 = vsel %vm3384, %v4598, 0
    %v4678 = vsel %vm3384, %v4599, 0
    %v4681 = vsel %vm3384, %v4600, 0
    %v4684 = vsel %vm3384, %v4601, 0
    %v4687 = vsel %vm3384, %v4602, 0
    %v4690 = vsel %vm3384, %v4603, 0
    %v4693 = vsel %vm3384, %v4604, 0
    %v4696 = vsel %vm3384, %v4605, 0
    %v4699 = vsel %vm3384, %v4606, 0
    %v4702 = vsel %vm3384, %v4607, 0
    %v4705 = vsel %vm3384, %v4608, 0
    %v4708 = vsel %vm3384, %v4609, 0
    %v4711 = vsel %vm3384, %v4610, 0
    %v4714 = vsel %vm3384, %v4611, 0
    %v4717 = vsel %vm3384, %v4612, 0
    %v4720 = vsel %vm3384, %v4613, 0
    %v4723 = vsel %vm3384, %v4614, 0
    %v4726 = vsel %vm3384, %v4615, 0
    %v4729 = vsel %vm3384, %v4616, 0
    %v4732 = vsel %vm3384, %v4617, 0
    %v4735 = vsel %vm3384, %v4618, 0
    %v4738 = vsel %vm3384, %v4619, 0
    %v4741 = vsel %vm3384, %v4620, 0
    %v4744 = vsel %vm3384, %v4621, 0
    %v4747 = vsel %vm3384, %v4622, 0
    %v4750 = vsel %vm3384, %v4623, 0
    %4752 = vmatpush.msra.mxu0 0.0
    %4753 = vmatpush.msra.mxu0 0.0
    %4754 = vmatpush.msra.mxu0 0.0
    %4755 = vmatpush.msra.mxu0 0.0
    %4756 = vmatpush.msra.mxu0 0.0
    %4757 = vmatpush.msra.mxu0 0.0
    %4758 = vmatpush.msra.mxu0 0.0
    %4759 = vmatpush.msra.mxu0 0.0
    %4760 = vmatpush.msra.mxu0 0.0
    %4761 = vmatpush.msra.mxu0 0.0
    %4762 = vmatpush.msra.mxu0 0.0
    %4763 = vmatpush.msra.mxu0 0.0
    %4764 = vmatpush.msra.mxu0 %v3644
    %4765 = vmatpush.msra.mxu0 %v3643
    %4766 = vmatpush.msra.mxu0 %v3642
    %4767 = vmatpush.msra.mxu0 %v3641
    %4768 = vmatmul.f32.gmra.mxu0 %v4657
    %v4769 = vpop.f32.mrf.mxu0
    %v4770 = vadd.f32 0.0, %v4769
    %4771 = vmatmul.f32.gmra.mxu0 %v4660
    %v4772 = vpop.f32.mrf.mxu0
    %v4773 = vadd.f32 0.0, %v4772
    %4774 = vmatmul.f32.gmra.mxu0 %v4663
    %v4775 = vpop.f32.mrf.mxu0
    %v4776 = vadd.f32 0.0, %v4775
    %4777 = vmatmul.f32.gmra.mxu0 %v4666
    %v4778 = vpop.f32.mrf.mxu0
    %v4779 = vadd.f32 0.0, %v4778
    %4780 = vmatmul.f32.gmra.mxu0 %v4669
    %v4781 = vpop.f32.mrf.mxu0
    %v4782 = vadd.f32 0.0, %v4781
    %4783 = vmatmul.f32.gmra.mxu0 %v4672
    %v4784 = vpop.f32.mrf.mxu0
    %v4785 = vadd.f32 0.0, %v4784
    %4786 = vmatmul.f32.gmra.mxu0 %v4675
    %v4787 = vpop.f32.mrf.mxu0
    %v4788 = vadd.f32 0.0, %v4787
    %4789 = vmatmul.f32.gmra.mxu0 %v4678
    %v4790 = vpop.f32.mrf.mxu0
    %v4791 = vadd.f32 0.0, %v4790
    %4792 = vmatmul.f32.gmra.mxu0 %v4681
    %v4793 = vpop.f32.mrf.mxu0
    %v4794 = vadd.f32 0.0, %v4793
    %4795 = vmatmul.f32.gmra.mxu0 %v4684
    %v4796 = vpop.f32.mrf.mxu0
    %v4797 = vadd.f32 0.0, %v4796
    %4798 = vmatmul.f32.gmra.mxu0 %v4687
    %v4799 = vpop.f32.mrf.mxu0
    %v4800 = vadd.f32 0.0, %v4799
    %4801 = vmatmul.f32.gmra.mxu0 %v4690
    %v4802 = vpop.f32.mrf.mxu0
    %v4803 = vadd.f32 0.0, %v4802
    %4804 = vmatmul.f32.gmra.mxu0 %v4693
    %v4805 = vpop.f32.mrf.mxu0
    %v4806 = vadd.f32 0.0, %v4805
    %4807 = vmatmul.f32.gmra.mxu0 %v4696
    %v4808 = vpop.f32.mrf.mxu0
    %v4809 = vadd.f32 0.0, %v4808
    %4810 = vmatmul.f32.gmra.mxu0 %v4699
    %v4811 = vpop.f32.mrf.mxu0
    %v4812 = vadd.f32 0.0, %v4811
    %4813 = vmatmul.f32.gmra.mxu0 %v4702
    %v4814 = vpop.f32.mrf.mxu0
    %v4815 = vadd.f32 0.0, %v4814
    %4816 = vmatmul.f32.gmra.mxu0 %v4705
    %v4817 = vpop.f32.mrf.mxu0
    %v4818 = vadd.f32 0.0, %v4817
    %4819 = vmatmul.f32.gmra.mxu0 %v4708
    %v4820 = vpop.f32.mrf.mxu0
    %v4821 = vadd.f32 0.0, %v4820
    %4822 = vmatmul.f32.gmra.mxu0 %v4711
    %v4823 = vpop.f32.mrf.mxu0
    %v4824 = vadd.f32 0.0, %v4823
    %4825 = vmatmul.f32.gmra.mxu0 %v4714
    %v4826 = vpop.f32.mrf.mxu0
    %v4827 = vadd.f32 0.0, %v4826
    %4828 = vmatmul.f32.gmra.mxu0 %v4717
    %v4829 = vpop.f32.mrf.mxu0
    %v4830 = vadd.f32 0.0, %v4829
    %4831 = vmatmul.f32.gmra.mxu0 %v4720
    %v4832 = vpop.f32.mrf.mxu0
    %v4833 = vadd.f32 0.0, %v4832
    %4834 = vmatmul.f32.gmra.mxu0 %v4723
    %v4835 = vpop.f32.mrf.mxu0
    %v4836 = vadd.f32 0.0, %v4835
    %4837 = vmatmul.f32.gmra.mxu0 %v4726
    %v4838 = vpop.f32.mrf.mxu0
    %v4839 = vadd.f32 0.0, %v4838
    %4840 = vmatmul.f32.gmra.mxu0 %v4729
    %v4841 = vpop.f32.mrf.mxu0
    %v4842 = vadd.f32 0.0, %v4841
    %4843 = vmatmul.f32.gmra.mxu0 %v4732
    %v4844 = vpop.f32.mrf.mxu0
    %v4845 = vadd.f32 0.0, %v4844
    %4846 = vmatmul.f32.gmra.mxu0 %v4735
    %v4847 = vpop.f32.mrf.mxu0
    %v4848 = vadd.f32 0.0, %v4847
    %4849 = vmatmul.f32.gmra.mxu0 %v4738
    %v4850 = vpop.f32.mrf.mxu0
    %v4851 = vadd.f32 0.0, %v4850
    %4852 = vmatmul.f32.gmra.mxu0 %v4741
    %v4853 = vpop.f32.mrf.mxu0
    %v4854 = vadd.f32 0.0, %v4853
    %4855 = vmatmul.f32.gmra.mxu0 %v4744
    %v4856 = vpop.f32.mrf.mxu0
    %v4857 = vadd.f32 0.0, %v4856
    %4858 = vmatmul.f32.gmra.mxu0 %v4747
    %v4859 = vpop.f32.mrf.mxu0
    %v4860 = vadd.f32 0.0, %v4859
    %4861 = vmatmul.f32.gmra.mxu0 %v4750
    %v4862 = vpop.f32.mrf.mxu0
    %v4863 = vadd.f32 0.0, %v4862
    %4864 = vdwg.mxu0
    %v4865 = vadd.f32 %v4624, %v4770
    %v4866 = vadd.f32 %v4625, %v4773
    %v4867 = vadd.f32 %v4626, %v4776
    %v4868 = vadd.f32 %v4627, %v4779
    %v4869 = vadd.f32 %v4628, %v4782
    %v4870 = vadd.f32 %v4629, %v4785
    %v4871 = vadd.f32 %v4630, %v4788
    %v4872 = vadd.f32 %v4631, %v4791
    %v4873 = vadd.f32 %v4632, %v4794
    %v4874 = vadd.f32 %v4633, %v4797
    %v4875 = vadd.f32 %v4634, %v4800
    %v4876 = vadd.f32 %v4635, %v4803
    %v4877 = vadd.f32 %v4636, %v4806
    %v4878 = vadd.f32 %v4637, %v4809
    %v4879 = vadd.f32 %v4638, %v4812
    %v4880 = vadd.f32 %v4639, %v4815
    %v4881 = vadd.f32 %v4640, %v4818
    %v4882 = vadd.f32 %v4641, %v4821
    %v4883 = vadd.f32 %v4642, %v4824
    %v4884 = vadd.f32 %v4643, %v4827
    %v4885 = vadd.f32 %v4644, %v4830
    %v4886 = vadd.f32 %v4645, %v4833
    %v4887 = vadd.f32 %v4646, %v4836
    %v4888 = vadd.f32 %v4647, %v4839
    %v4889 = vadd.f32 %v4648, %v4842
    %v4890 = vadd.f32 %v4649, %v4845
    %v4891 = vadd.f32 %v4650, %v4848
    %v4892 = vadd.f32 %v4651, %v4851
    %v4893 = vadd.f32 %v4652, %v4854
    %v4894 = vadd.f32 %v4653, %v4857
    %v4895 = vadd.f32 %v4654, %v4860
    %v4896 = vadd.f32 %v4655, %v4863
    %v4897 = vtanh.pop %v4865
    %v4898 = vtanh.pop %v4866
    %v4899 = vtanh.pop %v4867
    %v4900 = vtanh.pop %v4868
    %v4901 = vtanh.pop %v4869
    %v4902 = vtanh.pop %v4870
    %v4903 = vtanh.pop %v4871
    %v4904 = vtanh.pop %v4872
    %v4905 = vtanh.pop %v4873
    %v4906 = vtanh.pop %v4874
    %v4907 = vtanh.pop %v4875
    %v4908 = vtanh.pop %v4876
    %v4909 = vtanh.pop %v4877
    %v4910 = vtanh.pop %v4878
    %v4911 = vtanh.pop %v4879
    %v4912 = vtanh.pop %v4880
    %v4913 = vtanh.pop %v4881
    %v4914 = vtanh.pop %v4882
    %v4915 = vtanh.pop %v4883
    %v4916 = vtanh.pop %v4884
    %v4917 = vtanh.pop %v4885
    %v4918 = vtanh.pop %v4886
    %v4919 = vtanh.pop %v4887
    %v4920 = vtanh.pop %v4888
    %v4921 = vtanh.pop %v4889
    %v4922 = vtanh.pop %v4890
    %v4923 = vtanh.pop %v4891
    %v4924 = vtanh.pop %v4892
    %v4925 = vtanh.pop %v4893
    %v4926 = vtanh.pop %v4894
    %v4927 = vtanh.pop %v4895
    %v4928 = vtanh.pop %v4896
    %v4929 = vld [vmem:[#allocation2 + $0x500] sm:$0xff]
    %v4930 = vld [vmem:[#allocation2 + $0x508] sm:$0xff]
    %v4931 = vld [vmem:[#allocation2 + $0x510] sm:$0xff]
    %v4932 = vld [vmem:[#allocation2 + $0x518] sm:$0xff]
    %v4933 = vld [vmem:[#allocation2 + $0x520] sm:$0xff]
    %v4934 = vld [vmem:[#allocation2 + $0x528] sm:$0xff]
    %v4935 = vld [vmem:[#allocation2 + $0x530] sm:$0xff]
    %v4936 = vld [vmem:[#allocation2 + $0x538] sm:$0xff]
    %v4937 = vld [vmem:[#allocation2 + $0x540] sm:$0xff]
    %v4938 = vld [vmem:[#allocation2 + $0x548] sm:$0xff]
    %v4939 = vld [vmem:[#allocation2 + $0x550] sm:$0xff]
    %v4940 = vld [vmem:[#allocation2 + $0x558] sm:$0xff]
    %v4941 = vld [vmem:[#allocation2 + $0x560] sm:$0xff]
    %v4942 = vld [vmem:[#allocation2 + $0x568] sm:$0xff]
    %v4943 = vld [vmem:[#allocation2 + $0x570] sm:$0xff]
    %v4944 = vld [vmem:[#allocation2 + $0x578] sm:$0xff]
    %v4945 = vld [vmem:[#allocation2 + $0x580] sm:$0xff]
    %v4946 = vld [vmem:[#allocation2 + $0x588] sm:$0xff]
    %v4947 = vld [vmem:[#allocation2 + $0x590] sm:$0xff]
    %v4948 = vld [vmem:[#allocation2 + $0x598] sm:$0xff]
    %v4949 = vld [vmem:[#allocation2 + $0x5a0] sm:$0xff]
    %v4950 = vld [vmem:[#allocation2 + $0x5a8] sm:$0xff]
    %v4951 = vld [vmem:[#allocation2 + $0x5b0] sm:$0xff]
    %v4952 = vld [vmem:[#allocation2 + $0x5b8] sm:$0xff]
    %v4953 = vld [vmem:[#allocation2 + $0x5c0] sm:$0xff]
    %v4954 = vld [vmem:[#allocation2 + $0x5c8] sm:$0xff]
    %v4955 = vld [vmem:[#allocation2 + $0x5d0] sm:$0xff]
    %v4956 = vld [vmem:[#allocation2 + $0x5d8] sm:$0xff]
    %v4957 = vld [vmem:[#allocation2 + $0x5e0] sm:$0xff]
    %v4958 = vld [vmem:[#allocation2 + $0x5e8] sm:$0xff]
    %v4959 = vld [vmem:[#allocation2 + $0x5f0] sm:$0xff]
    %v4960 = vld [vmem:[#allocation2 + $0x5f8] sm:$0xff]
    %v4962 = vsel %vm3384, %v4897, 0
    %v4965 = vsel %vm3384, %v4898, 0
    %v4968 = vsel %vm3384, %v4899, 0
    %v4971 = vsel %vm3384, %v4900, 0
    %v4974 = vsel %vm3384, %v4901, 0
    %v4977 = vsel %vm3384, %v4902, 0
    %v4980 = vsel %vm3384, %v4903, 0
    %v4983 = vsel %vm3384, %v4904, 0
    %v4986 = vsel %vm3384, %v4905, 0
    %v4989 = vsel %vm3384, %v4906, 0
    %v4992 = vsel %vm3384, %v4907, 0
    %v4995 = vsel %vm3384, %v4908, 0
    %v4998 = vsel %vm3384, %v4909, 0
    %v5001 = vsel %vm3384, %v4910, 0
    %v5004 = vsel %vm3384, %v4911, 0
    %v5007 = vsel %vm3384, %v4912, 0
    %v5010 = vsel %vm3384, %v4913, 0
    %v5013 = vsel %vm3384, %v4914, 0
    %v5016 = vsel %vm3384, %v4915, 0
    %v5019 = vsel %vm3384, %v4916, 0
    %v5022 = vsel %vm3384, %v4917, 0
    %v5025 = vsel %vm3384, %v4918, 0
    %v5028 = vsel %vm3384, %v4919, 0
    %v5031 = vsel %vm3384, %v4920, 0
    %v5034 = vsel %vm3384, %v4921, 0
    %v5037 = vsel %vm3384, %v4922, 0
    %v5040 = vsel %vm3384, %v4923, 0
    %v5043 = vsel %vm3384, %v4924, 0
    %v5046 = vsel %vm3384, %v4925, 0
    %v5049 = vsel %vm3384, %v4926, 0
    %v5052 = vsel %vm3384, %v4927, 0
    %v5055 = vsel %vm3384, %v4928, 0
    %5057 = vmatpush.msra.mxu0 0.0
    %5058 = vmatpush.msra.mxu0 0.0
    %5059 = vmatpush.msra.mxu0 0.0
    %5060 = vmatpush.msra.mxu0 0.0
    %5061 = vmatpush.msra.mxu0 0.0
    %5062 = vmatpush.msra.mxu0 0.0
    %5063 = vmatpush.msra.mxu0 0.0
    %5064 = vmatpush.msra.mxu0 0.0
    %5065 = vmatpush.msra.mxu0 0.0
    %5066 = vmatpush.msra.mxu0 0.0
    %5067 = vmatpush.msra.mxu0 0.0
    %5068 = vmatpush.msra.mxu0 0.0
    %5069 = vmatpush.msra.mxu0 %v3644
    %5070 = vmatpush.msra.mxu0 %v3643
    %5071 = vmatpush.msra.mxu0 %v3642
    %5072 = vmatpush.msra.mxu0 %v3641
    %5073 = vmatmul.f32.gmra.mxu0 %v4962
    %v5074 = vpop.f32.mrf.mxu0
    %v5075 = vadd.f32 0.0, %v5074
    %5076 = vmatmul.f32.gmra.mxu0 %v4965
    %v5077 = vpop.f32.mrf.mxu0
    %v5078 = vadd.f32 0.0, %v5077
    %5079 = vmatmul.f32.gmra.mxu0 %v4968
    %v5080 = vpop.f32.mrf.mxu0
    %v5081 = vadd.f32 0.0, %v5080
    %5082 = vmatmul.f32.gmra.mxu0 %v4971
    %v5083 = vpop.f32.mrf.mxu0
    %v5084 = vadd.f32 0.0, %v5083
    %5085 = vmatmul.f32.gmra.mxu0 %v4974
    %v5086 = vpop.f32.mrf.mxu0
    %v5087 = vadd.f32 0.0, %v5086
    %5088 = vmatmul.f32.gmra.mxu0 %v4977
    %v5089 = vpop.f32.mrf.mxu0
    %v5090 = vadd.f32 0.0, %v5089
    %5091 = vmatmul.f32.gmra.mxu0 %v4980
    %v5092 = vpop.f32.mrf.mxu0
    %v5093 = vadd.f32 0.0, %v5092
    %5094 = vmatmul.f32.gmra.mxu0 %v4983
    %v5095 = vpop.f32.mrf.mxu0
    %v5096 = vadd.f32 0.0, %v5095
    %5097 = vmatmul.f32.gmra.mxu0 %v4986
    %v5098 = vpop.f32.mrf.mxu0
    %v5099 = vadd.f32 0.0, %v5098
    %5100 = vmatmul.f32.gmra.mxu0 %v4989
    %v5101 = vpop.f32.mrf.mxu0
    %v5102 = vadd.f32 0.0, %v5101
    %5103 = vmatmul.f32.gmra.mxu0 %v4992
    %v5104 = vpop.f32.mrf.mxu0
    %v5105 = vadd.f32 0.0, %v5104
    %5106 = vmatmul.f32.gmra.mxu0 %v4995
    %v5107 = vpop.f32.mrf.mxu0
    %v5108 = vadd.f32 0.0, %v5107
    %5109 = vmatmul.f32.gmra.mxu0 %v4998
    %v5110 = vpop.f32.mrf.mxu0
    %v5111 = vadd.f32 0.0, %v5110
    %5112 = vmatmul.f32.gmra.mxu0 %v5001
    %v5113 = vpop.f32.mrf.mxu0
    %v5114 = vadd.f32 0.0, %v5113
    %5115 = vmatmul.f32.gmra.mxu0 %v5004
    %v5116 = vpop.f32.mrf.mxu0
    %v5117 = vadd.f32 0.0, %v5116
    %5118 = vmatmul.f32.gmra.mxu0 %v5007
    %v5119 = vpop.f32.mrf.mxu0
    %v5120 = vadd.f32 0.0, %v5119
    %5121 = vmatmul.f32.gmra.mxu0 %v5010
    %v5122 = vpop.f32.mrf.mxu0
    %v5123 = vadd.f32 0.0, %v5122
    %5124 = vmatmul.f32.gmra.mxu0 %v5013
    %v5125 = vpop.f32.mrf.mxu0
    %v5126 = vadd.f32 0.0, %v5125
    %5127 = vmatmul.f32.gmra.mxu0 %v5016
    %v5128 = vpop.f32.mrf.mxu0
    %v5129 = vadd.f32 0.0, %v5128
    %5130 = vmatmul.f32.gmra.mxu0 %v5019
    %v5131 = vpop.f32.mrf.mxu0
    %v5132 = vadd.f32 0.0, %v5131
    %5133 = vmatmul.f32.gmra.mxu0 %v5022
    %v5134 = vpop.f32.mrf.mxu0
    %v5135 = vadd.f32 0.0, %v5134
    %5136 = vmatmul.f32.gmra.mxu0 %v5025
    %v5137 = vpop.f32.mrf.mxu0
    %v5138 = vadd.f32 0.0, %v5137
    %5139 = vmatmul.f32.gmra.mxu0 %v5028
    %v5140 = vpop.f32.mrf.mxu0
    %v5141 = vadd.f32 0.0, %v5140
    %5142 = vmatmul.f32.gmra.mxu0 %v5031
    %v5143 = vpop.f32.mrf.mxu0
    %v5144 = vadd.f32 0.0, %v5143
    %5145 = vmatmul.f32.gmra.mxu0 %v5034
    %v5146 = vpop.f32.mrf.mxu0
    %v5147 = vadd.f32 0.0, %v5146
    %5148 = vmatmul.f32.gmra.mxu0 %v5037
    %v5149 = vpop.f32.mrf.mxu0
    %v5150 = vadd.f32 0.0, %v5149
    %5151 = vmatmul.f32.gmra.mxu0 %v5040
    %v5152 = vpop.f32.mrf.mxu0
    %v5153 = vadd.f32 0.0, %v5152
    %5154 = vmatmul.f32.gmra.mxu0 %v5043
    %v5155 = vpop.f32.mrf.mxu0
    %v5156 = vadd.f32 0.0, %v5155
    %5157 = vmatmul.f32.gmra.mxu0 %v5046
    %v5158 = vpop.f32.mrf.mxu0
    %v5159 = vadd.f32 0.0, %v5158
    %5160 = vmatmul.f32.gmra.mxu0 %v5049
    %v5161 = vpop.f32.mrf.mxu0
    %v5162 = vadd.f32 0.0, %v5161
    %5163 = vmatmul.f32.gmra.mxu0 %v5052
    %v5164 = vpop.f32.mrf.mxu0
    %v5165 = vadd.f32 0.0, %v5164
    %5166 = vmatmul.f32.gmra.mxu0 %v5055
    %v5167 = vpop.f32.mrf.mxu0
    %v5168 = vadd.f32 0.0, %v5167
    %5169 = vdwg.mxu0
    %v5170 = vadd.f32 %v4929, %v5075
    %v5171 = vadd.f32 %v4930, %v5078
    %v5172 = vadd.f32 %v4931, %v5081
    %v5173 = vadd.f32 %v4932, %v5084
    %v5174 = vadd.f32 %v4933, %v5087
    %v5175 = vadd.f32 %v4934, %v5090
    %v5176 = vadd.f32 %v4935, %v5093
    %v5177 = vadd.f32 %v4936, %v5096
    %v5178 = vadd.f32 %v4937, %v5099
    %v5179 = vadd.f32 %v4938, %v5102
    %v5180 = vadd.f32 %v4939, %v5105
    %v5181 = vadd.f32 %v4940, %v5108
    %v5182 = vadd.f32 %v4941, %v5111
    %v5183 = vadd.f32 %v4942, %v5114
    %v5184 = vadd.f32 %v4943, %v5117
    %v5185 = vadd.f32 %v4944, %v5120
    %v5186 = vadd.f32 %v4945, %v5123
    %v5187 = vadd.f32 %v4946, %v5126
    %v5188 = vadd.f32 %v4947, %v5129
    %v5189 = vadd.f32 %v4948, %v5132
    %v5190 = vadd.f32 %v4949, %v5135
    %v5191 = vadd.f32 %v4950, %v5138
    %v5192 = vadd.f32 %v4951, %v5141
    %v5193 = vadd.f32 %v4952, %v5144
    %v5194 = vadd.f32 %v4953, %v5147
    %v5195 = vadd.f32 %v4954, %v5150
    %v5196 = vadd.f32 %v4955, %v5153
    %v5197 = vadd.f32 %v4956, %v5156
    %v5198 = vadd.f32 %v4957, %v5159
    %v5199 = vadd.f32 %v4958, %v5162
    %v5200 = vadd.f32 %v4959, %v5165
    %v5201 = vadd.f32 %v4960, %v5168
    %v5202 = vtanh.pop %v5170
    %v5203 = vtanh.pop %v5171
    %v5204 = vtanh.pop %v5172
    %v5205 = vtanh.pop %v5173
    %v5206 = vtanh.pop %v5174
    %v5207 = vtanh.pop %v5175
    %v5208 = vtanh.pop %v5176
    %v5209 = vtanh.pop %v5177
    %v5210 = vtanh.pop %v5178
    %v5211 = vtanh.pop %v5179
    %v5212 = vtanh.pop %v5180
    %v5213 = vtanh.pop %v5181
    %v5214 = vtanh.pop %v5182
    %v5215 = vtanh.pop %v5183
    %v5216 = vtanh.pop %v5184
    %v5217 = vtanh.pop %v5185
    %v5218 = vtanh.pop %v5186
    %v5219 = vtanh.pop %v5187
    %v5220 = vtanh.pop %v5188
    %v5221 = vtanh.pop %v5189
    %v5222 = vtanh.pop %v5190
    %v5223 = vtanh.pop %v5191
    %v5224 = vtanh.pop %v5192
    %v5225 = vtanh.pop %v5193
    %v5226 = vtanh.pop %v5194
    %v5227 = vtanh.pop %v5195
    %v5228 = vtanh.pop %v5196
    %v5229 = vtanh.pop %v5197
    %v5230 = vtanh.pop %v5198
    %v5231 = vtanh.pop %v5199
    %v5232 = vtanh.pop %v5200
    %v5233 = vtanh.pop %v5201
    %v5234 = vld [vmem:[#allocation2 + $0x600] sm:$0xff]
    %v5235 = vld [vmem:[#allocation2 + $0x608] sm:$0xff]
    %v5236 = vld [vmem:[#allocation2 + $0x610] sm:$0xff]
    %v5237 = vld [vmem:[#allocation2 + $0x618] sm:$0xff]
    %v5238 = vld [vmem:[#allocation2 + $0x620] sm:$0xff]
    %v5239 = vld [vmem:[#allocation2 + $0x628] sm:$0xff]
    %v5240 = vld [vmem:[#allocation2 + $0x630] sm:$0xff]
    %v5241 = vld [vmem:[#allocation2 + $0x638] sm:$0xff]
    %v5242 = vld [vmem:[#allocation2 + $0x640] sm:$0xff]
    %v5243 = vld [vmem:[#allocation2 + $0x648] sm:$0xff]
    %v5244 = vld [vmem:[#allocation2 + $0x650] sm:$0xff]
    %v5245 = vld [vmem:[#allocation2 + $0x658] sm:$0xff]
    %v5246 = vld [vmem:[#allocation2 + $0x660] sm:$0xff]
    %v5247 = vld [vmem:[#allocation2 + $0x668] sm:$0xff]
    %v5248 = vld [vmem:[#allocation2 + $0x670] sm:$0xff]
    %v5249 = vld [vmem:[#allocation2 + $0x678] sm:$0xff]
    %v5250 = vld [vmem:[#allocation2 + $0x680] sm:$0xff]
    %v5251 = vld [vmem:[#allocation2 + $0x688] sm:$0xff]
    %v5252 = vld [vmem:[#allocation2 + $0x690] sm:$0xff]
    %v5253 = vld [vmem:[#allocation2 + $0x698] sm:$0xff]
    %v5254 = vld [vmem:[#allocation2 + $0x6a0] sm:$0xff]
    %v5255 = vld [vmem:[#allocation2 + $0x6a8] sm:$0xff]
    %v5256 = vld [vmem:[#allocation2 + $0x6b0] sm:$0xff]
    %v5257 = vld [vmem:[#allocation2 + $0x6b8] sm:$0xff]
    %v5258 = vld [vmem:[#allocation2 + $0x6c0] sm:$0xff]
    %v5259 = vld [vmem:[#allocation2 + $0x6c8] sm:$0xff]
    %v5260 = vld [vmem:[#allocation2 + $0x6d0] sm:$0xff]
    %v5261 = vld [vmem:[#allocation2 + $0x6d8] sm:$0xff]
    %v5262 = vld [vmem:[#allocation2 + $0x6e0] sm:$0xff]
    %v5263 = vld [vmem:[#allocation2 + $0x6e8] sm:$0xff]
    %v5264 = vld [vmem:[#allocation2 + $0x6f0] sm:$0xff]
    %v5265 = vld [vmem:[#allocation2 + $0x6f8] sm:$0xff]
    %v5267 = vsel %vm3384, %v5202, 0
    %v5270 = vsel %vm3384, %v5203, 0
    %v5273 = vsel %vm3384, %v5204, 0
    %v5276 = vsel %vm3384, %v5205, 0
    %v5279 = vsel %vm3384, %v5206, 0
    %v5282 = vsel %vm3384, %v5207, 0
    %v5285 = vsel %vm3384, %v5208, 0
    %v5288 = vsel %vm3384, %v5209, 0
    %v5291 = vsel %vm3384, %v5210, 0
    %v5294 = vsel %vm3384, %v5211, 0
    %v5297 = vsel %vm3384, %v5212, 0
    %v5300 = vsel %vm3384, %v5213, 0
    %v5303 = vsel %vm3384, %v5214, 0
    %v5306 = vsel %vm3384, %v5215, 0
    %v5309 = vsel %vm3384, %v5216, 0
    %v5312 = vsel %vm3384, %v5217, 0
    %v5315 = vsel %vm3384, %v5218, 0
    %v5318 = vsel %vm3384, %v5219, 0
    %v5321 = vsel %vm3384, %v5220, 0
    %v5324 = vsel %vm3384, %v5221, 0
    %v5327 = vsel %vm3384, %v5222, 0
    %v5330 = vsel %vm3384, %v5223, 0
    %v5333 = vsel %vm3384, %v5224, 0
    %v5336 = vsel %vm3384, %v5225, 0
    %v5339 = vsel %vm3384, %v5226, 0
    %v5342 = vsel %vm3384, %v5227, 0
    %v5345 = vsel %vm3384, %v5228, 0
    %v5348 = vsel %vm3384, %v5229, 0
    %v5351 = vsel %vm3384, %v5230, 0
    %v5354 = vsel %vm3384, %v5231, 0
    %v5357 = vsel %vm3384, %v5232, 0
    %v5360 = vsel %vm3384, %v5233, 0
    %5362 = vmatpush.msra.mxu0 0.0
    %5363 = vmatpush.msra.mxu0 0.0
    %5364 = vmatpush.msra.mxu0 0.0
    %5365 = vmatpush.msra.mxu0 0.0
    %5366 = vmatpush.msra.mxu0 0.0
    %5367 = vmatpush.msra.mxu0 0.0
    %5368 = vmatpush.msra.mxu0 0.0
    %5369 = vmatpush.msra.mxu0 0.0
    %5370 = vmatpush.msra.mxu0 0.0
    %5371 = vmatpush.msra.mxu0 0.0
    %5372 = vmatpush.msra.mxu0 0.0
    %5373 = vmatpush.msra.mxu0 0.0
    %5374 = vmatpush.msra.mxu0 %v3644
    %5375 = vmatpush.msra.mxu0 %v3643
    %5376 = vmatpush.msra.mxu0 %v3642
    %5377 = vmatpush.msra.mxu0 %v3641
    %5378 = vmatmul.f32.gmra.mxu0 %v5267
    %v5379 = vpop.f32.mrf.mxu0
    %v5380 = vadd.f32 0.0, %v5379
    %5381 = vmatmul.f32.gmra.mxu0 %v5270
    %v5382 = vpop.f32.mrf.mxu0
    %v5383 = vadd.f32 0.0, %v5382
    %5384 = vmatmul.f32.gmra.mxu0 %v5273
    %v5385 = vpop.f32.mrf.mxu0
    %v5386 = vadd.f32 0.0, %v5385
    %5387 = vmatmul.f32.gmra.mxu0 %v5276
    %v5388 = vpop.f32.mrf.mxu0
    %v5389 = vadd.f32 0.0, %v5388
    %5390 = vmatmul.f32.gmra.mxu0 %v5279
    %v5391 = vpop.f32.mrf.mxu0
    %v5392 = vadd.f32 0.0, %v5391
    %5393 = vmatmul.f32.gmra.mxu0 %v5282
    %v5394 = vpop.f32.mrf.mxu0
    %v5395 = vadd.f32 0.0, %v5394
    %5396 = vmatmul.f32.gmra.mxu0 %v5285
    %v5397 = vpop.f32.mrf.mxu0
    %v5398 = vadd.f32 0.0, %v5397
    %5399 = vmatmul.f32.gmra.mxu0 %v5288
    %v5400 = vpop.f32.mrf.mxu0
    %v5401 = vadd.f32 0.0, %v5400
    %5402 = vmatmul.f32.gmra.mxu0 %v5291
    %v5403 = vpop.f32.mrf.mxu0
    %v5404 = vadd.f32 0.0, %v5403
    %5405 = vmatmul.f32.gmra.mxu0 %v5294
    %v5406 = vpop.f32.mrf.mxu0
    %v5407 = vadd.f32 0.0, %v5406
    %5408 = vmatmul.f32.gmra.mxu0 %v5297
    %v5409 = vpop.f32.mrf.mxu0
    %v5410 = vadd.f32 0.0, %v5409
    %5411 = vmatmul.f32.gmra.mxu0 %v5300
    %v5412 = vpop.f32.mrf.mxu0
    %v5413 = vadd.f32 0.0, %v5412
    %5414 = vmatmul.f32.gmra.mxu0 %v5303
    %v5415 = vpop.f32.mrf.mxu0
    %v5416 = vadd.f32 0.0, %v5415
    %5417 = vmatmul.f32.gmra.mxu0 %v5306
    %v5418 = vpop.f32.mrf.mxu0
    %v5419 = vadd.f32 0.0, %v5418
    %5420 = vmatmul.f32.gmra.mxu0 %v5309
    %v5421 = vpop.f32.mrf.mxu0
    %v5422 = vadd.f32 0.0, %v5421
    %5423 = vmatmul.f32.gmra.mxu0 %v5312
    %v5424 = vpop.f32.mrf.mxu0
    %v5425 = vadd.f32 0.0, %v5424
    %5426 = vmatmul.f32.gmra.mxu0 %v5315
    %v5427 = vpop.f32.mrf.mxu0
    %v5428 = vadd.f32 0.0, %v5427
    %5429 = vmatmul.f32.gmra.mxu0 %v5318
    %v5430 = vpop.f32.mrf.mxu0
    %v5431 = vadd.f32 0.0, %v5430
    %5432 = vmatmul.f32.gmra.mxu0 %v5321
    %v5433 = vpop.f32.mrf.mxu0
    %v5434 = vadd.f32 0.0, %v5433
    %5435 = vmatmul.f32.gmra.mxu0 %v5324
    %v5436 = vpop.f32.mrf.mxu0
    %v5437 = vadd.f32 0.0, %v5436
    %5438 = vmatmul.f32.gmra.mxu0 %v5327
    %v5439 = vpop.f32.mrf.mxu0
    %v5440 = vadd.f32 0.0, %v5439
    %5441 = vmatmul.f32.gmra.mxu0 %v5330
    %v5442 = vpop.f32.mrf.mxu0
    %v5443 = vadd.f32 0.0, %v5442
    %5444 = vmatmul.f32.gmra.mxu0 %v5333
    %v5445 = vpop.f32.mrf.mxu0
    %v5446 = vadd.f32 0.0, %v5445
    %5447 = vmatmul.f32.gmra.mxu0 %v5336
    %v5448 = vpop.f32.mrf.mxu0
    %v5449 = vadd.f32 0.0, %v5448
    %5450 = vmatmul.f32.gmra.mxu0 %v5339
    %v5451 = vpop.f32.mrf.mxu0
    %v5452 = vadd.f32 0.0, %v5451
    %5453 = vmatmul.f32.gmra.mxu0 %v5342
    %v5454 = vpop.f32.mrf.mxu0
    %v5455 = vadd.f32 0.0, %v5454
    %5456 = vmatmul.f32.gmra.mxu0 %v5345
    %v5457 = vpop.f32.mrf.mxu0
    %v5458 = vadd.f32 0.0, %v5457
    %5459 = vmatmul.f32.gmra.mxu0 %v5348
    %v5460 = vpop.f32.mrf.mxu0
    %v5461 = vadd.f32 0.0, %v5460
    %5462 = vmatmul.f32.gmra.mxu0 %v5351
    %v5463 = vpop.f32.mrf.mxu0
    %v5464 = vadd.f32 0.0, %v5463
    %5465 = vmatmul.f32.gmra.mxu0 %v5354
    %v5466 = vpop.f32.mrf.mxu0
    %v5467 = vadd.f32 0.0, %v5466
    %5468 = vmatmul.f32.gmra.mxu0 %v5357
    %v5469 = vpop.f32.mrf.mxu0
    %v5470 = vadd.f32 0.0, %v5469
    %5471 = vmatmul.f32.gmra.mxu0 %v5360
    %v5472 = vpop.f32.mrf.mxu0
    %v5473 = vadd.f32 0.0, %v5472
    %5474 = vdwg.mxu0
    %v5475 = vadd.f32 %v5234, %v5380
    %v5476 = vadd.f32 %v5235, %v5383
    %v5477 = vadd.f32 %v5236, %v5386
    %v5478 = vadd.f32 %v5237, %v5389
    %v5479 = vadd.f32 %v5238, %v5392
    %v5480 = vadd.f32 %v5239, %v5395
    %v5481 = vadd.f32 %v5240, %v5398
    %v5482 = vadd.f32 %v5241, %v5401
    %v5483 = vadd.f32 %v5242, %v5404
    %v5484 = vadd.f32 %v5243, %v5407
    %v5485 = vadd.f32 %v5244, %v5410
    %v5486 = vadd.f32 %v5245, %v5413
    %v5487 = vadd.f32 %v5246, %v5416
    %v5488 = vadd.f32 %v5247, %v5419
    %v5489 = vadd.f32 %v5248, %v5422
    %v5490 = vadd.f32 %v5249, %v5425
    %v5491 = vadd.f32 %v5250, %v5428
    %v5492 = vadd.f32 %v5251, %v5431
    %v5493 = vadd.f32 %v5252, %v5434
    %v5494 = vadd.f32 %v5253, %v5437
    %v5495 = vadd.f32 %v5254, %v5440
    %v5496 = vadd.f32 %v5255, %v5443
    %v5497 = vadd.f32 %v5256, %v5446
    %v5498 = vadd.f32 %v5257, %v5449
    %v5499 = vadd.f32 %v5258, %v5452
    %v5500 = vadd.f32 %v5259, %v5455
    %v5501 = vadd.f32 %v5260, %v5458
    %v5502 = vadd.f32 %v5261, %v5461
    %v5503 = vadd.f32 %v5262, %v5464
    %v5504 = vadd.f32 %v5263, %v5467
    %v5505 = vadd.f32 %v5264, %v5470
    %v5506 = vadd.f32 %v5265, %v5473
    %v5507 = vtanh.pop %v5475
    %v5508 = vtanh.pop %v5476
    %v5509 = vtanh.pop %v5477
    %v5510 = vtanh.pop %v5478
    %v5511 = vtanh.pop %v5479
    %v5512 = vtanh.pop %v5480
    %v5513 = vtanh.pop %v5481
    %v5514 = vtanh.pop %v5482
    %v5515 = vtanh.pop %v5483
    %v5516 = vtanh.pop %v5484
    %v5517 = vtanh.pop %v5485
    %v5518 = vtanh.pop %v5486
    %v5519 = vtanh.pop %v5487
    %v5520 = vtanh.pop %v5488
    %v5521 = vtanh.pop %v5489
    %v5522 = vtanh.pop %v5490
    %v5523 = vtanh.pop %v5491
    %v5524 = vtanh.pop %v5492
    %v5525 = vtanh.pop %v5493
    %v5526 = vtanh.pop %v5494
    %v5527 = vtanh.pop %v5495
    %v5528 = vtanh.pop %v5496
    %v5529 = vtanh.pop %v5497
    %v5530 = vtanh.pop %v5498
    %v5531 = vtanh.pop %v5499
    %v5532 = vtanh.pop %v5500
    %v5533 = vtanh.pop %v5501
    %v5534 = vtanh.pop %v5502
    %v5535 = vtanh.pop %v5503
    %v5536 = vtanh.pop %v5504
    %v5537 = vtanh.pop %v5505
    %v5538 = vtanh.pop %v5506
    %v5539 = vld [vmem:[#allocation2 + $0x700] sm:$0xff]
    %v5540 = vld [vmem:[#allocation2 + $0x708] sm:$0xff]
    %v5541 = vld [vmem:[#allocation2 + $0x710] sm:$0xff]
    %v5542 = vld [vmem:[#allocation2 + $0x718] sm:$0xff]
    %v5543 = vld [vmem:[#allocation2 + $0x720] sm:$0xff]
    %v5544 = vld [vmem:[#allocation2 + $0x728] sm:$0xff]
    %v5545 = vld [vmem:[#allocation2 + $0x730] sm:$0xff]
    %v5546 = vld [vmem:[#allocation2 + $0x738] sm:$0xff]
    %v5547 = vld [vmem:[#allocation2 + $0x740] sm:$0xff]
    %v5548 = vld [vmem:[#allocation2 + $0x748] sm:$0xff]
    %v5549 = vld [vmem:[#allocation2 + $0x750] sm:$0xff]
    %v5550 = vld [vmem:[#allocation2 + $0x758] sm:$0xff]
    %v5551 = vld [vmem:[#allocation2 + $0x760] sm:$0xff]
    %v5552 = vld [vmem:[#allocation2 + $0x768] sm:$0xff]
    %v5553 = vld [vmem:[#allocation2 + $0x770] sm:$0xff]
    %v5554 = vld [vmem:[#allocation2 + $0x778] sm:$0xff]
    %v5555 = vld [vmem:[#allocation2 + $0x780] sm:$0xff]
    %v5556 = vld [vmem:[#allocation2 + $0x788] sm:$0xff]
    %v5557 = vld [vmem:[#allocation2 + $0x790] sm:$0xff]
    %v5558 = vld [vmem:[#allocation2 + $0x798] sm:$0xff]
    %v5559 = vld [vmem:[#allocation2 + $0x7a0] sm:$0xff]
    %v5560 = vld [vmem:[#allocation2 + $0x7a8] sm:$0xff]
    %v5561 = vld [vmem:[#allocation2 + $0x7b0] sm:$0xff]
    %v5562 = vld [vmem:[#allocation2 + $0x7b8] sm:$0xff]
    %v5563 = vld [vmem:[#allocation2 + $0x7c0] sm:$0xff]
    %v5564 = vld [vmem:[#allocation2 + $0x7c8] sm:$0xff]
    %v5565 = vld [vmem:[#allocation2 + $0x7d0] sm:$0xff]
    %v5566 = vld [vmem:[#allocation2 + $0x7d8] sm:$0xff]
    %v5567 = vld [vmem:[#allocation2 + $0x7e0] sm:$0xff]
    %v5568 = vld [vmem:[#allocation2 + $0x7e8] sm:$0xff]
    %v5569 = vld [vmem:[#allocation2 + $0x7f0] sm:$0xff]
    %v5570 = vld [vmem:[#allocation2 + $0x7f8] sm:$0xff]
    %v5572 = vsel %vm3384, %v5507, 0
    %v5575 = vsel %vm3384, %v5508, 0
    %v5578 = vsel %vm3384, %v5509, 0
    %v5581 = vsel %vm3384, %v5510, 0
    %v5584 = vsel %vm3384, %v5511, 0
    %v5587 = vsel %vm3384, %v5512, 0
    %v5590 = vsel %vm3384, %v5513, 0
    %v5593 = vsel %vm3384, %v5514, 0
    %v5596 = vsel %vm3384, %v5515, 0
    %v5599 = vsel %vm3384, %v5516, 0
    %v5602 = vsel %vm3384, %v5517, 0
    %v5605 = vsel %vm3384, %v5518, 0
    %v5608 = vsel %vm3384, %v5519, 0
    %v5611 = vsel %vm3384, %v5520, 0
    %v5614 = vsel %vm3384, %v5521, 0
    %v5617 = vsel %vm3384, %v5522, 0
    %v5620 = vsel %vm3384, %v5523, 0
    %v5623 = vsel %vm3384, %v5524, 0
    %v5626 = vsel %vm3384, %v5525, 0
    %v5629 = vsel %vm3384, %v5526, 0
    %v5632 = vsel %vm3384, %v5527, 0
    %v5635 = vsel %vm3384, %v5528, 0
    %v5638 = vsel %vm3384, %v5529, 0
    %v5641 = vsel %vm3384, %v5530, 0
    %v5644 = vsel %vm3384, %v5531, 0
    %v5647 = vsel %vm3384, %v5532, 0
    %v5650 = vsel %vm3384, %v5533, 0
    %v5653 = vsel %vm3384, %v5534, 0
    %v5656 = vsel %vm3384, %v5535, 0
    %v5659 = vsel %vm3384, %v5536, 0
    %v5662 = vsel %vm3384, %v5537, 0
    %v5665 = vsel %vm3384, %v5538, 0
    %5667 = vmatpush.msra.mxu0 0.0
    %5668 = vmatpush.msra.mxu0 0.0
    %5669 = vmatpush.msra.mxu0 0.0
    %5670 = vmatpush.msra.mxu0 0.0
    %5671 = vmatpush.msra.mxu0 0.0
    %5672 = vmatpush.msra.mxu0 0.0
    %5673 = vmatpush.msra.mxu0 0.0
    %5674 = vmatpush.msra.mxu0 0.0
    %5675 = vmatpush.msra.mxu0 0.0
    %5676 = vmatpush.msra.mxu0 0.0
    %5677 = vmatpush.msra.mxu0 0.0
    %5678 = vmatpush.msra.mxu0 0.0
    %5679 = vmatpush.msra.mxu0 %v3644
    %5680 = vmatpush.msra.mxu0 %v3643
    %5681 = vmatpush.msra.mxu0 %v3642
    %5682 = vmatpush.msra.mxu0 %v3641
    %5683 = vmatmul.f32.gmra.mxu0 %v5572
    %v5684 = vpop.f32.mrf.mxu0
    %v5685 = vadd.f32 0.0, %v5684
    %5686 = vmatmul.f32.gmra.mxu0 %v5575
    %v5687 = vpop.f32.mrf.mxu0
    %v5688 = vadd.f32 0.0, %v5687
    %5689 = vmatmul.f32.gmra.mxu0 %v5578
    %v5690 = vpop.f32.mrf.mxu0
    %v5691 = vadd.f32 0.0, %v5690
    %5692 = vmatmul.f32.gmra.mxu0 %v5581
    %v5693 = vpop.f32.mrf.mxu0
    %v5694 = vadd.f32 0.0, %v5693
    %5695 = vmatmul.f32.gmra.mxu0 %v5584
    %v5696 = vpop.f32.mrf.mxu0
    %v5697 = vadd.f32 0.0, %v5696
    %5698 = vmatmul.f32.gmra.mxu0 %v5587
    %v5699 = vpop.f32.mrf.mxu0
    %v5700 = vadd.f32 0.0, %v5699
    %5701 = vmatmul.f32.gmra.mxu0 %v5590
    %v5702 = vpop.f32.mrf.mxu0
    %v5703 = vadd.f32 0.0, %v5702
    %5704 = vmatmul.f32.gmra.mxu0 %v5593
    %v5705 = vpop.f32.mrf.mxu0
    %v5706 = vadd.f32 0.0, %v5705
    %5707 = vmatmul.f32.gmra.mxu0 %v5596
    %v5708 = vpop.f32.mrf.mxu0
    %v5709 = vadd.f32 0.0, %v5708
    %5710 = vmatmul.f32.gmra.mxu0 %v5599
    %v5711 = vpop.f32.mrf.mxu0
    %v5712 = vadd.f32 0.0, %v5711
    %5713 = vmatmul.f32.gmra.mxu0 %v5602
    %v5714 = vpop.f32.mrf.mxu0
    %v5715 = vadd.f32 0.0, %v5714
    %5716 = vmatmul.f32.gmra.mxu0 %v5605
    %v5717 = vpop.f32.mrf.mxu0
    %v5718 = vadd.f32 0.0, %v5717
    %5719 = vmatmul.f32.gmra.mxu0 %v5608
    %v5720 = vpop.f32.mrf.mxu0
    %v5721 = vadd.f32 0.0, %v5720
    %5722 = vmatmul.f32.gmra.mxu0 %v5611
    %v5723 = vpop.f32.mrf.mxu0
    %v5724 = vadd.f32 0.0, %v5723
    %5725 = vmatmul.f32.gmra.mxu0 %v5614
    %v5726 = vpop.f32.mrf.mxu0
    %v5727 = vadd.f32 0.0, %v5726
    %5728 = vmatmul.f32.gmra.mxu0 %v5617
    %v5729 = vpop.f32.mrf.mxu0
    %v5730 = vadd.f32 0.0, %v5729
    %5731 = vmatmul.f32.gmra.mxu0 %v5620
    %v5732 = vpop.f32.mrf.mxu0
    %v5733 = vadd.f32 0.0, %v5732
    %5734 = vmatmul.f32.gmra.mxu0 %v5623
    %v5735 = vpop.f32.mrf.mxu0
    %v5736 = vadd.f32 0.0, %v5735
    %5737 = vmatmul.f32.gmra.mxu0 %v5626
    %v5738 = vpop.f32.mrf.mxu0
    %v5739 = vadd.f32 0.0, %v5738
    %5740 = vmatmul.f32.gmra.mxu0 %v5629
    %v5741 = vpop.f32.mrf.mxu0
    %v5742 = vadd.f32 0.0, %v5741
    %5743 = vmatmul.f32.gmra.mxu0 %v5632
    %v5744 = vpop.f32.mrf.mxu0
    %v5745 = vadd.f32 0.0, %v5744
    %5746 = vmatmul.f32.gmra.mxu0 %v5635
    %v5747 = vpop.f32.mrf.mxu0
    %v5748 = vadd.f32 0.0, %v5747
    %5749 = vmatmul.f32.gmra.mxu0 %v5638
    %v5750 = vpop.f32.mrf.mxu0
    %v5751 = vadd.f32 0.0, %v5750
    %5752 = vmatmul.f32.gmra.mxu0 %v5641
    %v5753 = vpop.f32.mrf.mxu0
    %v5754 = vadd.f32 0.0, %v5753
    %5755 = vmatmul.f32.gmra.mxu0 %v5644
    %v5756 = vpop.f32.mrf.mxu0
    %v5757 = vadd.f32 0.0, %v5756
    %5758 = vmatmul.f32.gmra.mxu0 %v5647
    %v5759 = vpop.f32.mrf.mxu0
    %v5760 = vadd.f32 0.0, %v5759
    %5761 = vmatmul.f32.gmra.mxu0 %v5650
    %v5762 = vpop.f32.mrf.mxu0
    %v5763 = vadd.f32 0.0, %v5762
    %5764 = vmatmul.f32.gmra.mxu0 %v5653
    %v5765 = vpop.f32.mrf.mxu0
    %v5766 = vadd.f32 0.0, %v5765
    %5767 = vmatmul.f32.gmra.mxu0 %v5656
    %v5768 = vpop.f32.mrf.mxu0
    %v5769 = vadd.f32 0.0, %v5768
    %5770 = vmatmul.f32.gmra.mxu0 %v5659
    %v5771 = vpop.f32.mrf.mxu0
    %v5772 = vadd.f32 0.0, %v5771
    %5773 = vmatmul.f32.gmra.mxu0 %v5662
    %v5774 = vpop.f32.mrf.mxu0
    %v5775 = vadd.f32 0.0, %v5774
    %5776 = vmatmul.f32.gmra.mxu0 %v5665
    %v5777 = vpop.f32.mrf.mxu0
    %v5778 = vadd.f32 0.0, %v5777
    %5779 = vdwg.mxu0
    %v5780 = vadd.f32 %v5539, %v5685
    %v5781 = vadd.f32 %v5540, %v5688
    %v5782 = vadd.f32 %v5541, %v5691
    %v5783 = vadd.f32 %v5542, %v5694
    %v5784 = vadd.f32 %v5543, %v5697
    %v5785 = vadd.f32 %v5544, %v5700
    %v5786 = vadd.f32 %v5545, %v5703
    %v5787 = vadd.f32 %v5546, %v5706
    %v5788 = vadd.f32 %v5547, %v5709
    %v5789 = vadd.f32 %v5548, %v5712
    %v5790 = vadd.f32 %v5549, %v5715
    %v5791 = vadd.f32 %v5550, %v5718
    %v5792 = vadd.f32 %v5551, %v5721
    %v5793 = vadd.f32 %v5552, %v5724
    %v5794 = vadd.f32 %v5553, %v5727
    %v5795 = vadd.f32 %v5554, %v5730
    %v5796 = vadd.f32 %v5555, %v5733
    %v5797 = vadd.f32 %v5556, %v5736
    %v5798 = vadd.f32 %v5557, %v5739
    %v5799 = vadd.f32 %v5558, %v5742
    %v5800 = vadd.f32 %v5559, %v5745
    %v5801 = vadd.f32 %v5560, %v5748
    %v5802 = vadd.f32 %v5561, %v5751
    %v5803 = vadd.f32 %v5562, %v5754
    %v5804 = vadd.f32 %v5563, %v5757
    %v5805 = vadd.f32 %v5564, %v5760
    %v5806 = vadd.f32 %v5565, %v5763
    %v5807 = vadd.f32 %v5566, %v5766
    %v5808 = vadd.f32 %v5567, %v5769
    %v5809 = vadd.f32 %v5568, %v5772
    %v5810 = vadd.f32 %v5569, %v5775
    %v5811 = vadd.f32 %v5570, %v5778
    %v5812 = vtanh.pop %v5780
    %v5813 = vtanh.pop %v5781
    %v5814 = vtanh.pop %v5782
    %v5815 = vtanh.pop %v5783
    %v5816 = vtanh.pop %v5784
    %v5817 = vtanh.pop %v5785
    %v5818 = vtanh.pop %v5786
    %v5819 = vtanh.pop %v5787
    %v5820 = vtanh.pop %v5788
    %v5821 = vtanh.pop %v5789
    %v5822 = vtanh.pop %v5790
    %v5823 = vtanh.pop %v5791
    %v5824 = vtanh.pop %v5792
    %v5825 = vtanh.pop %v5793
    %v5826 = vtanh.pop %v5794
    %v5827 = vtanh.pop %v5795
    %v5828 = vtanh.pop %v5796
    %v5829 = vtanh.pop %v5797
    %v5830 = vtanh.pop %v5798
    %v5831 = vtanh.pop %v5799
    %v5832 = vtanh.pop %v5800
    %v5833 = vtanh.pop %v5801
    %v5834 = vtanh.pop %v5802
    %v5835 = vtanh.pop %v5803
    %v5836 = vtanh.pop %v5804
    %v5837 = vtanh.pop %v5805
    %v5838 = vtanh.pop %v5806
    %v5839 = vtanh.pop %v5807
    %v5840 = vtanh.pop %v5808
    %v5841 = vtanh.pop %v5809
    %v5842 = vtanh.pop %v5810
    %v5843 = vtanh.pop %v5811
    %v5844 = vld [vmem:[%s4] sm:$0xff]
    %v5845 = vld [vmem:[%s4 + $0x8] sm:$0xff]
    %v5846 = vld [vmem:[%s4 + $0x10] sm:$0xff]
    %v5847 = vld [vmem:[%s4 + $0x18] sm:$0xff]
    %v5848 = vld [vmem:[%s5] sm:$0x1]
    %v5850 = vperm.slane %v5848, 0
    %v5853 = vsel %vm3384, %v5812, 0
    %v5856 = vsel %vm3384, %v5813, 0
    %v5859 = vsel %vm3384, %v5814, 0
    %v5862 = vsel %vm3384, %v5815, 0
    %v5865 = vsel %vm3384, %v5816, 0
    %v5868 = vsel %vm3384, %v5817, 0
    %v5871 = vsel %vm3384, %v5818, 0
    %v5874 = vsel %vm3384, %v5819, 0
    %v5877 = vsel %vm3384, %v5820, 0
    %v5880 = vsel %vm3384, %v5821, 0
    %v5883 = vsel %vm3384, %v5822, 0
    %v5886 = vsel %vm3384, %v5823, 0
    %v5889 = vsel %vm3384, %v5824, 0
    %v5892 = vsel %vm3384, %v5825, 0
    %v5895 = vsel %vm3384, %v5826, 0
    %v5898 = vsel %vm3384, %v5827, 0
    %v5901 = vsel %vm3384, %v5828, 0
    %v5904 = vsel %vm3384, %v5829, 0
    %v5907 = vsel %vm3384, %v5830, 0
    %v5910 = vsel %vm3384, %v5831, 0
    %v5913 = vsel %vm3384, %v5832, 0
    %v5916 = vsel %vm3384, %v5833, 0
    %v5919 = vsel %vm3384, %v5834, 0
    %v5922 = vsel %vm3384, %v5835, 0
    %v5925 = vsel %vm3384, %v5836, 0
    %v5928 = vsel %vm3384, %v5837, 0
    %v5931 = vsel %vm3384, %v5838, 0
    %v5934 = vsel %vm3384, %v5839, 0
    %v5937 = vsel %vm3384, %v5840, 0
    %v5940 = vsel %vm3384, %v5841, 0
    %v5943 = vsel %vm3384, %v5842, 0
    %v5946 = vsel %vm3384, %v5843, 0
    %5948 = vmatpush.msra.mxu0 0.0
    %5949 = vmatpush.msra.mxu0 0.0
    %5950 = vmatpush.msra.mxu0 0.0
    %5951 = vmatpush.msra.mxu0 0.0
    %5952 = vmatpush.msra.mxu0 0.0
    %5953 = vmatpush.msra.mxu0 0.0
    %5954 = vmatpush.msra.mxu0 0.0
    %5955 = vmatpush.msra.mxu0 0.0
    %5956 = vmatpush.msra.mxu0 0.0
    %5957 = vmatpush.msra.mxu0 0.0
    %5958 = vmatpush.msra.mxu0 0.0
    %5959 = vmatpush.msra.mxu0 0.0
    %5960 = vmatpush.msra.mxu0 %v5847
    %5961 = vmatpush.msra.mxu0 %v5846
    %5962 = vmatpush.msra.mxu0 %v5845
    %5963 = vmatpush.msra.mxu0 %v5844
    %5964 = vmatmul.f32.gmra.mxu0 %v5853
    %v5965 = vpop.f32.mrf.mxu0
    %v5966 = vadd.f32 %v5850, %v5965
    %5967 = vmatmul.f32.gmra.mxu0 %v5856
    %v5968 = vpop.f32.mrf.mxu0
    %v5969 = vadd.f32 %v5850, %v5968
    %5970 = vmatmul.f32.gmra.mxu0 %v5859
    %v5971 = vpop.f32.mrf.mxu0
    %v5972 = vadd.f32 %v5850, %v5971
    %5973 = vmatmul.f32.gmra.mxu0 %v5862
    %v5974 = vpop.f32.mrf.mxu0
    %v5975 = vadd.f32 %v5850, %v5974
    %5976 = vmatmul.f32.gmra.mxu0 %v5865
    %v5977 = vpop.f32.mrf.mxu0
    %v5978 = vadd.f32 %v5850, %v5977
    %5979 = vmatmul.f32.gmra.mxu0 %v5868
    %v5980 = vpop.f32.mrf.mxu0
    %v5981 = vadd.f32 %v5850, %v5980
    %5982 = vmatmul.f32.gmra.mxu0 %v5871
    %v5983 = vpop.f32.mrf.mxu0
    %v5984 = vadd.f32 %v5850, %v5983
    %5985 = vmatmul.f32.gmra.mxu0 %v5874
    %v5986 = vpop.f32.mrf.mxu0
    %v5987 = vadd.f32 %v5850, %v5986
    %5988 = vmatmul.f32.gmra.mxu0 %v5877
    %v5989 = vpop.f32.mrf.mxu0
    %v5990 = vadd.f32 %v5850, %v5989
    %5991 = vmatmul.f32.gmra.mxu0 %v5880
    %v5992 = vpop.f32.mrf.mxu0
    %v5993 = vadd.f32 %v5850, %v5992
    %5994 = vmatmul.f32.gmra.mxu0 %v5883
    %v5995 = vpop.f32.mrf.mxu0
    %v5996 = vadd.f32 %v5850, %v5995
    %5997 = vmatmul.f32.gmra.mxu0 %v5886
    %v5998 = vpop.f32.mrf.mxu0
    %v5999 = vadd.f32 %v5850, %v5998
    %6000 = vmatmul.f32.gmra.mxu0 %v5889
    %v6001 = vpop.f32.mrf.mxu0
    %v6002 = vadd.f32 %v5850, %v6001
    %6003 = vmatmul.f32.gmra.mxu0 %v5892
    %v6004 = vpop.f32.mrf.mxu0
    %v6005 = vadd.f32 %v5850, %v6004
    %6006 = vmatmul.f32.gmra.mxu0 %v5895
    %v6007 = vpop.f32.mrf.mxu0
    %v6008 = vadd.f32 %v5850, %v6007
    %6009 = vmatmul.f32.gmra.mxu0 %v5898
    %v6010 = vpop.f32.mrf.mxu0
    %v6011 = vadd.f32 %v5850, %v6010
    %6012 = vmatmul.f32.gmra.mxu0 %v5901
    %v6013 = vpop.f32.mrf.mxu0
    %v6014 = vadd.f32 %v5850, %v6013
    %6015 = vmatmul.f32.gmra.mxu0 %v5904
    %v6016 = vpop.f32.mrf.mxu0
    %v6017 = vadd.f32 %v5850, %v6016
    %6018 = vmatmul.f32.gmra.mxu0 %v5907
    %v6019 = vpop.f32.mrf.mxu0
    %v6020 = vadd.f32 %v5850, %v6019
    %6021 = vmatmul.f32.gmra.mxu0 %v5910
    %v6022 = vpop.f32.mrf.mxu0
    %v6023 = vadd.f32 %v5850, %v6022
    %6024 = vmatmul.f32.gmra.mxu0 %v5913
    %v6025 = vpop.f32.mrf.mxu0
    %v6026 = vadd.f32 %v5850, %v6025
    %6027 = vmatmul.f32.gmra.mxu0 %v5916
    %v6028 = vpop.f32.mrf.mxu0
    %v6029 = vadd.f32 %v5850, %v6028
    %6030 = vmatmul.f32.gmra.mxu0 %v5919
    %v6031 = vpop.f32.mrf.mxu0
    %v6032 = vadd.f32 %v5850, %v6031
    %6033 = vmatmul.f32.gmra.mxu0 %v5922
    %v6034 = vpop.f32.mrf.mxu0
    %v6035 = vadd.f32 %v5850, %v6034
    %6036 = vmatmul.f32.gmra.mxu0 %v5925
    %v6037 = vpop.f32.mrf.mxu0
    %v6038 = vadd.f32 %v5850, %v6037
    %6039 = vmatmul.f32.gmra.mxu0 %v5928
    %v6040 = vpop.f32.mrf.mxu0
    %v6041 = vadd.f32 %v5850, %v6040
    %6042 = vmatmul.f32.gmra.mxu0 %v5931
    %v6043 = vpop.f32.mrf.mxu0
    %v6044 = vadd.f32 %v5850, %v6043
    %6045 = vmatmul.f32.gmra.mxu0 %v5934
    %v6046 = vpop.f32.mrf.mxu0
    %v6047 = vadd.f32 %v5850, %v6046
    %6048 = vmatmul.f32.gmra.mxu0 %v5937
    %v6049 = vpop.f32.mrf.mxu0
    %v6050 = vadd.f32 %v5850, %v6049
    %6051 = vmatmul.f32.gmra.mxu0 %v5940
    %v6052 = vpop.f32.mrf.mxu0
    %v6053 = vadd.f32 %v5850, %v6052
    %6054 = vmatmul.f32.gmra.mxu0 %v5943
    %v6055 = vpop.f32.mrf.mxu0
    %v6056 = vadd.f32 %v5850, %v6055
    %6057 = vmatmul.f32.gmra.mxu0 %v5946
    %v6058 = vpop.f32.mrf.mxu0
    %v6059 = vadd.f32 %v5850, %v6058
    %6060 = vdwg.mxu0
    %6061 = vst [vmem:[#allocation3] sm:$0xff] %v5966
    %6062 = vst [vmem:[#allocation3 + $0x8] sm:$0xff] %v5969
    %6063 = vst [vmem:[#allocation3 + $0x10] sm:$0xff] %v5972
    %6064 = vst [vmem:[#allocation3 + $0x18] sm:$0xff] %v5975
    %6065 = vst [vmem:[#allocation3 + $0x20] sm:$0xff] %v5978
    %6066 = vst [vmem:[#allocation3 + $0x28] sm:$0xff] %v5981
    %6067 = vst [vmem:[#allocation3 + $0x30] sm:$0xff] %v5984
    %6068 = vst [vmem:[#allocation3 + $0x38] sm:$0xff] %v5987
    %6069 = vst [vmem:[#allocation3 + $0x40] sm:$0xff] %v5990
    %6070 = vst [vmem:[#allocation3 + $0x48] sm:$0xff] %v5993
    %6071 = vst [vmem:[#allocation3 + $0x50] sm:$0xff] %v5996
    %6072 = vst [vmem:[#allocation3 + $0x58] sm:$0xff] %v5999
    %6073 = vst [vmem:[#allocation3 + $0x60] sm:$0xff] %v6002
    %6074 = vst [vmem:[#allocation3 + $0x68] sm:$0xff] %v6005
    %6075 = vst [vmem:[#allocation3 + $0x70] sm:$0xff] %v6008
    %6076 = vst [vmem:[#allocation3 + $0x78] sm:$0xff] %v6011
    %6077 = vst [vmem:[#allocation3 + $0x80] sm:$0xff] %v6014
    %6078 = vst [vmem:[#allocation3 + $0x88] sm:$0xff] %v6017
    %6079 = vst [vmem:[#allocation3 + $0x90] sm:$0xff] %v6020
    %6080 = vst [vmem:[#allocation3 + $0x98] sm:$0xff] %v6023
    %6081 = vst [vmem:[#allocation3 + $0xa0] sm:$0xff] %v6026
    %6082 = vst [vmem:[#allocation3 + $0xa8] sm:$0xff] %v6029
    %6083 = vst [vmem:[#allocation3 + $0xb0] sm:$0xff] %v6032
    %6084 = vst [vmem:[#allocation3 + $0xb8] sm:$0xff] %v6035
    %6085 = vst [vmem:[#allocation3 + $0xc0] sm:$0xff] %v6038
    %6086 = vst [vmem:[#allocation3 + $0xc8] sm:$0xff] %v6041
    %6087 = vst [vmem:[#allocation3 + $0xd0] sm:$0xff] %v6044
    %6088 = vst [vmem:[#allocation3 + $0xd8] sm:$0xff] %v6047
    %6089 = vst [vmem:[#allocation3 + $0xe0] sm:$0xff] %v6050
    %6090 = vst [vmem:[#allocation3 + $0xe8] sm:$0xff] %v6053
    %6091 = vst [vmem:[#allocation3 + $0xf0] sm:$0xff] %v6056
    %6092 = vst [vmem:[#allocation3 + $0xf8] sm:$0xff] %v6059
    // Predicated region
    $region26: #{tpu_custom_call.1} parent=1 // pred_check
      _
    $region27: #{tpu_custom_call.1} parent=1 // pred_check_branch
      %6094 = sbr.rel (0) target = $region29
    $region28: #{tpu_custom_call.1} parent=1 // pred_region
      %6096 = vsyncadd [#allocation4], 0
      %s6097 = sshll.u32 [#allocation3], 4
      %s6098 = int_to_ptr.vmem [resolvable:$true] %s6097
      %s6099 = sshll.u32 %s6, 4
      %s6100 = int_to_ptr.hbm [resolvable:$true] %s6099
      %6105 = dma.vmem_to_hbm [thread:$0]  %s6098, 4096, %s6100, [#allocation4], 128, 128, 8
    $region29: #{tpu_custom_call.1} parent=1 // pred_fallthru
      _
    // Predicated region
    $region30: #{tpu_custom_call.1} parent=1 // pred_check
      _
    $region31: #{tpu_custom_call.1} parent=1 // pred_check_branch
      %6107 = sbr.rel (0) target = $region33
    $region32: #{tpu_custom_call.1} parent=1 // pred_region
      %6109 = dma.done [#allocation4], 4096
    $region33: #{tpu_custom_call.1} parent=1 // pred_fallthru
      _
    %6110 = vsyncpa [#allocation4], 1

</llo_original>
